<compile_context>
chip_gen: v7x
topology: tpu7x:2x2x1
jax: 0.10.0
libtpu: 0.0.40
codegen_flags: <defaults>
</compile_context>

<pallas_src>
import functools

import jax
import jax.numpy as jnp
from jax.experimental import pallas as pl
from jax.experimental.pallas import tpu as pltpu


# --------------------------------------------------------------------------
# Stage 1: batched style MLP (runs once, whole thing MXU-resident).
# --------------------------------------------------------------------------
def _style_mlp_kernel(alphas_ref, lat_ref,
                      w1, b1, w2, b2, w3, b3, w4, b4, w5, b5,
                      w6, b6,
                      style_ref):
    def prelu(h, a):
        return jnp.where(h >= 0.0, h, a * h)

    def hidden(h, w_ref, b_ref, a):
        # bf16 operands into the MXU, f32 accumulation, f32 bias + PReLU math.
        y = jnp.dot(h.astype(jnp.bfloat16), w_ref[...],
                    preferred_element_type=jnp.float32) + b_ref[...]
        return prelu(y, a)

    h = lat_ref[...]                              # (b_lat, latent_dim) f32
    h = hidden(h, w1, b1, alphas_ref[0])
    h = hidden(h, w2, b2, alphas_ref[1])
    h = hidden(h, w3, b3, alphas_ref[2])
    h = hidden(h, w4, b4, alphas_ref[3])
    h = hidden(h, w5, b5, alphas_ref[4])          # (b_lat, 512) f32

    # Final Linear on the MXU: (b_lat, 512) x (512, 32C) -> (b_lat, 32C).
    # Columns are pre-rearranged to [scale(16C) | shift(16C)] in (k*C + c) order.
    y = jnp.dot(h.astype(jnp.bfloat16), w6[...],
                preferred_element_type=jnp.float32) + b6[...]
    style_ref[...] = jax.nn.sigmoid(y)


# --------------------------------------------------------------------------
# Stage 2: lane-dense affine modulation  out = x * scale + shift.
# x is flattened to (R, H*W) with R = b_lat*16*C; scale/shift are (R, 1)
# columns that broadcast over the lane (spatial) axis.
# --------------------------------------------------------------------------
def _affine_kernel(x_ref, scale_ref, shift_ref, o_ref):
    x = x_ref[...].astype(jnp.float32)
    o_ref[...] = (x * scale_ref[...] + shift_ref[...]).astype(o_ref.dtype)


# --------------------------------------------------------------------------
# Tiling helpers.
# --------------------------------------------------------------------------
def _largest_divisor_multiple(total, unit, cap):
    """Largest divisor of `total` that is a multiple of `unit` and <= cap."""
    if total <= unit or total % unit:
        return total
    cap = max(unit, min(total, (cap // unit) * unit))
    best = unit
    for cand in range(unit, cap + 1, unit):
        if total % cand == 0:
            best = cand
    return best


def _pick_tiles(rows, hw, elem_bytes, target_bytes):
    """Pick (tile_rows, tile_lanes) jointly so a block stays near target_bytes,
    lane-dense (multiple of 128 or full hw) and a divisor of each dim."""
    if hw % 128 == 0 and hw > 2048:
        tile_lanes = _largest_divisor_multiple(hw, 128, 2048)
    else:
        # TODO(synk): very large spatial sizes that are not 128-divisible keep a
        # full-hw lane block; add masked (non-dividing) lane tiles if ever needed.
        tile_lanes = hw
    row_budget = max(8, target_bytes // (tile_lanes * elem_bytes))
    tile_rows = _largest_divisor_multiple(rows, 8, row_budget)
    return tile_rows, tile_lanes


def _vmem_budget():
    """(block target bytes, vmem_limit_bytes) tuned per chip generation:
    v7x has 64 MiB/TC VMEM -> smaller tiles & cap; v5e/v6e have 128 MiB."""
    try:
        cap = int(pltpu.get_tpu_info().vmem_capacity_bytes)
    except Exception:
        cap = 64 << 20          # be conservative (v7x-sized) if query fails
    if cap <= (64 << 20):
        return 2 << 20, 48 << 20
    return 6 << 20, 96 << 20


# --------------------------------------------------------------------------
# One-time parameter preprocessing (kernel-ready layout):
#   hidden weights -> (in, out) bf16, biases -> (1, out) f32
#   final weight   -> (512, 32C) bf16 with columns ordered
#                     [scale rows (k*C + c) | shift rows (k*C + c)],
#                     bias -> (1, 32C) f32 in the same order.
# --------------------------------------------------------------------------
def prepare_params(alphas, weights, biases, channel):
    c = channel
    p = {"alphas": jnp.asarray(alphas, jnp.float32), "w": [], "b": []}
    for i in range(5):
        p["w"].append(jnp.asarray(weights[i].T, jnp.bfloat16))            # (in, out)
        p["b"].append(jnp.asarray(biases[i], jnp.float32).reshape(1, -1))
    w6 = jnp.asarray(weights[5], jnp.float32)      # (32C, 512), row f = k*2C + s*C + c
    b6 = jnp.asarray(biases[5], jnp.float32)       # (32C,)
    w6g = w6.reshape(16, 2, c, w6.shape[1])
    b6g = b6.reshape(16, 2, c)
    w6r = jnp.concatenate([w6g[:, 0].reshape(16 * c, -1),                 # scale rows
                           w6g[:, 1].reshape(16 * c, -1)], axis=0)        # shift rows
    b6r = jnp.concatenate([b6g[:, 0].reshape(16 * c),
                           b6g[:, 1].reshape(16 * c)], axis=0)
    # TODO(synk): for very large C (>= ~256) keep this operand in HBM
    # (memory_space=pl.ANY) and DMA column blocks instead of making it resident.
    p["w6"] = jnp.asarray(w6r.T, jnp.bfloat16)     # (512, 32C)
    p["b6"] = b6r.reshape(1, -1)                   # (1, 32C) f32
    return p


# --------------------------------------------------------------------------
# Full Mapping.forward: style-MLP pallas_call + affine pallas_call.
# x (arg 0) is donated so the aliased in-place affine is truly zero-copy.
# --------------------------------------------------------------------------
@functools.partial(jax.jit, donate_argnums=(0,))
def mapping_forward(x, latent, params):
    b, c, hgt, wdt = x.shape
    b_lat = latent.shape[0]
    assert b == b_lat * 16, (
        "view(-1, 2, C, 1, 1) broadcast requires x batch == 16 * latent batch")
    hw = hgt * wdt
    half = 16 * c
    rows = b * c                      # = b_lat * 16 * c

    target_bytes, vmem_limit = _vmem_budget()
    vmem = pl.BlockSpec(memory_space=pltpu.MemorySpace.VMEM)
    smem = pl.BlockSpec(memory_space=pltpu.MemorySpace.SMEM)

    # ---- Stage 1: batched style MLP (tiny, one invocation) ------------------
    style = pl.pallas_call(
        _style_mlp_kernel,
        in_specs=[smem, vmem] + [vmem] * 12,
        out_specs=vmem,
        out_shape=jax.ShapeDtypeStruct((b_lat, 2 * half), jnp.float32),
        compiler_params=pltpu.CompilerParams(vmem_limit_bytes=vmem_limit),
    )(params["alphas"], latent,
      params["w"][0], params["b"][0], params["w"][1], params["b"][1],
      params["w"][2], params["b"][2], params["w"][3], params["b"][3],
      params["w"][4], params["b"][4], params["w6"], params["b6"])

    # Tiny rearrange: (b_lat, 32C) -> (R, 1) columns aligned with x flattened to
    # (B*C, hw); row r = n*16C + k*C + c  (negligible vs the x traffic).
    scale = style[:, :half].reshape(rows, 1)
    shift = style[:, half:].reshape(rows, 1)

    # ---- Stage 2: affine modulation over x (memory-bound, fully parallel) ---
    x2 = x.reshape(rows, hw)
    elem_bytes = max(jnp.dtype(x.dtype).itemsize, 4)
    tile_rows, tile_lanes = _pick_tiles(rows, hw, elem_bytes, target_bytes)
    grid = (rows // tile_rows, hw // tile_lanes)

    out2 = pl.pallas_call(
        _affine_kernel,
        grid=grid,
        in_specs=[pl.BlockSpec((tile_rows, tile_lanes), lambda i, l: (i, l)),
                  pl.BlockSpec((tile_rows, 1), lambda i, l: (i, 0)),
                  pl.BlockSpec((tile_rows, 1), lambda i, l: (i, 0))],
        out_specs=pl.BlockSpec((tile_rows, tile_lanes), lambda i, l: (i, l)),
        out_shape=jax.ShapeDtypeStruct((rows, hw), x.dtype),
        input_output_aliases={0: 0},      # in-place; x is donated at the jit boundary
        compiler_params=pltpu.CompilerParams(
            dimension_semantics=("parallel", "parallel"),
            vmem_limit_bytes=vmem_limit),
    )(x2, scale, shift)

    return out2.reshape(b, c, hgt, wdt)


# --------------------------------------------------------------------------
# Parameter init (kaiming_normal_ on weights, zero bias, PReLU slope 0.25),
# matching nn.Linear's (out, in) weight layout.
# --------------------------------------------------------------------------
def init_params(key, latent_dim, channel):
    dims = [(512, latent_dim), (512, 512), (512, 512), (512, 512),
            (512, 512), (channel * 32, 512)]
    weights, biases = [], []
    for fout, fin in dims:
        key, k = jax.random.split(key)
        w = jax.random.normal(k, (fout, fin), jnp.float32) * jnp.sqrt(2.0 / fin)
        weights.append(w)
        biases.append(jnp.zeros((fout,), jnp.float32))
    alphas = jnp.full((5,), 0.25, jnp.float32)
    return alphas, weights, biases


# --------------------------------------------------------------------------
# Pure-JAX references.
# --------------------------------------------------------------------------
def mapping_ref_f32(x, latent, alphas, weights, biases, channel):
    """Exact f32 module semantics (HIGHEST matmul precision)."""
    hp = jax.lax.Precision.HIGHEST
    h = latent
    for i in range(5):
        h = jnp.dot(h, weights[i].T, precision=hp) + biases[i]
        h = jnp.where(h >= 0, h, alphas[i] * h)
    h = jax.nn.sigmoid(jnp.dot(h, weights[5].T, precision=hp) + biases[5])
    style = h.reshape(-1, 2, channel, 1, 1)
    return x * style[:, 0] + style[:, 1]


def mapping_ref_bf16(x, latent, alphas, weights, biases, channel):
    """Mirrors the kernel's precision policy: bf16 weights & dot operands for
    every layer, f32 accumulation, f32 bias/PReLU/sigmoid and affine math."""
    wq = [w.astype(jnp.bfloat16) for w in weights]
    h = latent
    for i in range(5):
        h = jnp.dot(h.astype(jnp.bfloat16), wq[i].T,
                    preferred_element_type=jnp.float32) + biases[i]
        h = jnp.where(h >= 0, h, alphas[i] * h)
    h = jax.nn.sigmoid(jnp.dot(h.astype(jnp.bfloat16), wq[5].T,
                               preferred_element_type=jnp.float32) + biases[5])
    style = h.reshape(-1, 2, channel, 1, 1)
    return x.astype(jnp.float32) * style[:, 0] + style[:, 1]


if __name__ == "__main__":
    latent_dim, channel = 16, 4
    b_lat = 2
    bs = b_lat * 16            # x batch must be 16x the latent batch (view(-1,2,C,1,1))
    H = W = 16

    key = jax.random.PRNGKey(0)
    kx, kl, kp = jax.random.split(key, 3)
    x = jax.random.normal(kx, (bs, channel, H, W), jnp.float32)
    latent = jax.random.normal(kl, (b_lat, latent_dim), jnp.float32)
    alphas, weights, biases = init_params(kp, latent_dim, channel)

    kparams = prepare_params(alphas, weights, biases, channel)

    # References first (x is donated to the kernel call below).
    ref32 = mapping_ref_f32(x, latent, alphas, weights, biases, channel)
    refbf = mapping_ref_bf16(x, latent, alphas, weights, biases, channel)
    ref32, refbf = jax.block_until_ready((ref32, refbf))

    out = mapping_forward(x, latent, kparams)
    out = jax.block_until_ready(out)

    assert out.shape == (bs, channel, H, W)
    # Tight check vs a reference using the same bf16 weight quantization
    # (validates the MLP / weight rearrangement / indexing / affine logic).
    assert jnp.allclose(out, refbf, atol=2e-3, rtol=2e-3), \
        "mismatch vs bf16-consistent reference"
    # Loose check vs the full-f32 module semantics (bounds bf16 quantization error).
    assert jnp.allclose(out, ref32, atol=1e-1, rtol=1e-1), \
        "mismatch vs f32 reference"
    print("KERNEL_OK")
</pallas_src>

<mosaic_0001>
module attributes {stable_mosaic.version = 11 : i64} {
  func.func @_style_mlp_kernel(%arg0: memref<5xf32, #tpu.memory_space<smem>>, %arg1: memref<2x16xf32, #tpu.memory_space<vmem>>, %arg2: memref<16x512xbf16, #tpu.memory_space<vmem>>, %arg3: memref<1x512xf32, #tpu.memory_space<vmem>>, %arg4: memref<512x512xbf16, #tpu.memory_space<vmem>>, %arg5: memref<1x512xf32, #tpu.memory_space<vmem>>, %arg6: memref<512x512xbf16, #tpu.memory_space<vmem>>, %arg7: memref<1x512xf32, #tpu.memory_space<vmem>>, %arg8: memref<512x512xbf16, #tpu.memory_space<vmem>>, %arg9: memref<1x512xf32, #tpu.memory_space<vmem>>, %arg10: memref<512x512xbf16, #tpu.memory_space<vmem>>, %arg11: memref<1x512xf32, #tpu.memory_space<vmem>>, %arg12: memref<512x128xbf16, #tpu.memory_space<vmem>>, %arg13: memref<1x128xf32, #tpu.memory_space<vmem>>, %arg14: memref<2x128xf32, #tpu.memory_space<vmem>>) attributes {dimension_semantics = [], scalar_prefetch = 0 : i64, scratch_operands = 0 : i64, tpu.core_type = #tpu.core_type<tc>} {
    %c0 = arith.constant 0 : index
    %c0_0 = arith.constant 0 : index
    %0 = vector.load %arg1[%c0, %c0_0] : memref<2x16xf32, #tpu.memory_space<vmem>>, vector<2x16xf32>
    %c0_1 = arith.constant 0 : index
    %1 = memref.load %arg0[%c0_1] : memref<5xf32, #tpu.memory_space<smem>>
    %2 = arith.truncf %0 : vector<2x16xf32> to vector<2x16xbf16>
    %c0_2 = arith.constant 0 : index
    %c0_3 = arith.constant 0 : index
    %3 = vector.load %arg2[%c0_2, %c0_3] : memref<16x512xbf16, #tpu.memory_space<vmem>>, vector<16x512xbf16>
    %cst = arith.constant dense<0.000000e+00> : vector<2x512xf32>
    %4 = tpu.matmul %2, %3, %cst {dimension_numbers = #tpu.dot_dimension_numbers<[1], [0], [0], [1], [0, 0, 1, 1], [], []>} : vector<2x16xbf16>, vector<16x512xbf16>, vector<2x512xf32> -> vector<2x512xf32>
    %c0_4 = arith.constant 0 : index
    %c0_5 = arith.constant 0 : index
    %5 = vector.load %arg3[%c0_4, %c0_5] : memref<1x512xf32, #tpu.memory_space<vmem>>, vector<1x512xf32>
    %6 = vector.broadcast %5 : vector<1x512xf32> to vector<2x512xf32>
    %7 = arith.addf %4, %6 : vector<2x512xf32>
    %cst_6 = arith.constant 0.000000e+00 : f32
    %8 = vector.broadcast %cst_6 : f32 to vector<2x512xf32>
    %9 = arith.cmpf oge, %7, %8 : vector<2x512xf32>
    %10 = vector.broadcast %1 : f32 to vector<2x512xf32>
    %11 = arith.mulf %10, %7 : vector<2x512xf32>
    %12 = arith.select %9, %7, %11 : vector<2x512xi1>, vector<2x512xf32>
    %c1 = arith.constant 1 : index
    %13 = memref.load %arg0[%c1] : memref<5xf32, #tpu.memory_space<smem>>
    %14 = arith.truncf %12 : vector<2x512xf32> to vector<2x512xbf16>
    %c0_7 = arith.constant 0 : index
    %c0_8 = arith.constant 0 : index
    %15 = vector.load %arg4[%c0_7, %c0_8] : memref<512x512xbf16, #tpu.memory_space<vmem>>, vector<512x512xbf16>
    %cst_9 = arith.constant dense<0.000000e+00> : vector<2x512xf32>
    %16 = tpu.matmul %14, %15, %cst_9 {dimension_numbers = #tpu.dot_dimension_numbers<[1], [0], [0], [1], [0, 0, 1, 1], [], []>} : vector<2x512xbf16>, vector<512x512xbf16>, vector<2x512xf32> -> vector<2x512xf32>
    %c0_10 = arith.constant 0 : index
    %c0_11 = arith.constant 0 : index
    %17 = vector.load %arg5[%c0_10, %c0_11] : memref<1x512xf32, #tpu.memory_space<vmem>>, vector<1x512xf32>
    %18 = vector.broadcast %17 : vector<1x512xf32> to vector<2x512xf32>
    %19 = arith.addf %16, %18 : vector<2x512xf32>
    %cst_12 = arith.constant 0.000000e+00 : f32
    %20 = vector.broadcast %cst_12 : f32 to vector<2x512xf32>
    %21 = arith.cmpf oge, %19, %20 : vector<2x512xf32>
    %22 = vector.broadcast %13 : f32 to vector<2x512xf32>
    %23 = arith.mulf %22, %19 : vector<2x512xf32>
    %24 = arith.select %21, %19, %23 : vector<2x512xi1>, vector<2x512xf32>
    %c2 = arith.constant 2 : index
    %25 = memref.load %arg0[%c2] : memref<5xf32, #tpu.memory_space<smem>>
    %26 = arith.truncf %24 : vector<2x512xf32> to vector<2x512xbf16>
    %c0_13 = arith.constant 0 : index
    %c0_14 = arith.constant 0 : index
    %27 = vector.load %arg6[%c0_13, %c0_14] : memref<512x512xbf16, #tpu.memory_space<vmem>>, vector<512x512xbf16>
    %cst_15 = arith.constant dense<0.000000e+00> : vector<2x512xf32>
    %28 = tpu.matmul %26, %27, %cst_15 {dimension_numbers = #tpu.dot_dimension_numbers<[1], [0], [0], [1], [0, 0, 1, 1], [], []>} : vector<2x512xbf16>, vector<512x512xbf16>, vector<2x512xf32> -> vector<2x512xf32>
    %c0_16 = arith.constant 0 : index
    %c0_17 = arith.constant 0 : index
    %29 = vector.load %arg7[%c0_16, %c0_17] : memref<1x512xf32, #tpu.memory_space<vmem>>, vector<1x512xf32>
    %30 = vector.broadcast %29 : vector<1x512xf32> to vector<2x512xf32>
    %31 = arith.addf %28, %30 : vector<2x512xf32>
    %cst_18 = arith.constant 0.000000e+00 : f32
    %32 = vector.broadcast %cst_18 : f32 to vector<2x512xf32>
    %33 = arith.cmpf oge, %31, %32 : vector<2x512xf32>
    %34 = vector.broadcast %25 : f32 to vector<2x512xf32>
    %35 = arith.mulf %34, %31 : vector<2x512xf32>
    %36 = arith.select %33, %31, %35 : vector<2x512xi1>, vector<2x512xf32>
    %c3 = arith.constant 3 : index
    %37 = memref.load %arg0[%c3] : memref<5xf32, #tpu.memory_space<smem>>
    %38 = arith.truncf %36 : vector<2x512xf32> to vector<2x512xbf16>
    %c0_19 = arith.constant 0 : index
    %c0_20 = arith.constant 0 : index
    %39 = vector.load %arg8[%c0_19, %c0_20] : memref<512x512xbf16, #tpu.memory_space<vmem>>, vector<512x512xbf16>
    %cst_21 = arith.constant dense<0.000000e+00> : vector<2x512xf32>
    %40 = tpu.matmul %38, %39, %cst_21 {dimension_numbers = #tpu.dot_dimension_numbers<[1], [0], [0], [1], [0, 0, 1, 1], [], []>} : vector<2x512xbf16>, vector<512x512xbf16>, vector<2x512xf32> -> vector<2x512xf32>
    %c0_22 = arith.constant 0 : index
    %c0_23 = arith.constant 0 : index
    %41 = vector.load %arg9[%c0_22, %c0_23] : memref<1x512xf32, #tpu.memory_space<vmem>>, vector<1x512xf32>
    %42 = vector.broadcast %41 : vector<1x512xf32> to vector<2x512xf32>
    %43 = arith.addf %40, %42 : vector<2x512xf32>
    %cst_24 = arith.constant 0.000000e+00 : f32
    %44 = vector.broadcast %cst_24 : f32 to vector<2x512xf32>
    %45 = arith.cmpf oge, %43, %44 : vector<2x512xf32>
    %46 = vector.broadcast %37 : f32 to vector<2x512xf32>
    %47 = arith.mulf %46, %43 : vector<2x512xf32>
    %48 = arith.select %45, %43, %47 : vector<2x512xi1>, vector<2x512xf32>
    %c4 = arith.constant 4 : index
    %49 = memref.load %arg0[%c4] : memref<5xf32, #tpu.memory_space<smem>>
    %50 = arith.truncf %48 : vector<2x512xf32> to vector<2x512xbf16>
    %c0_25 = arith.constant 0 : index
    %c0_26 = arith.constant 0 : index
    %51 = vector.load %arg10[%c0_25, %c0_26] : memref<512x512xbf16, #tpu.memory_space<vmem>>, vector<512x512xbf16>
    %cst_27 = arith.constant dense<0.000000e+00> : vector<2x512xf32>
    %52 = tpu.matmul %50, %51, %cst_27 {dimension_numbers = #tpu.dot_dimension_numbers<[1], [0], [0], [1], [0, 0, 1, 1], [], []>} : vector<2x512xbf16>, vector<512x512xbf16>, vector<2x512xf32> -> vector<2x512xf32>
    %c0_28 = arith.constant 0 : index
    %c0_29 = arith.constant 0 : index
    %53 = vector.load %arg11[%c0_28, %c0_29] : memref<1x512xf32, #tpu.memory_space<vmem>>, vector<1x512xf32>
    %54 = vector.broadcast %53 : vector<1x512xf32> to vector<2x512xf32>
    %55 = arith.addf %52, %54 : vector<2x512xf32>
    %cst_30 = arith.constant 0.000000e+00 : f32
    %56 = vector.broadcast %cst_30 : f32 to vector<2x512xf32>
    %57 = arith.cmpf oge, %55, %56 : vector<2x512xf32>
    %58 = vector.broadcast %49 : f32 to vector<2x512xf32>
    %59 = arith.mulf %58, %55 : vector<2x512xf32>
    %60 = arith.select %57, %55, %59 : vector<2x512xi1>, vector<2x512xf32>
    %61 = arith.truncf %60 : vector<2x512xf32> to vector<2x512xbf16>
    %c0_31 = arith.constant 0 : index
    %c0_32 = arith.constant 0 : index
    %62 = vector.load %arg12[%c0_31, %c0_32] : memref<512x128xbf16, #tpu.memory_space<vmem>>, vector<512x128xbf16>
    %cst_33 = arith.constant dense<0.000000e+00> : vector<2x128xf32>
    %63 = tpu.matmul %61, %62, %cst_33 {dimension_numbers = #tpu.dot_dimension_numbers<[1], [0], [0], [1], [0, 0, 1, 1], [], []>} : vector<2x512xbf16>, vector<512x128xbf16>, vector<2x128xf32> -> vector<2x128xf32>
    %c0_34 = arith.constant 0 : index
    %c0_35 = arith.constant 0 : index
    %64 = vector.load %arg13[%c0_34, %c0_35] : memref<1x128xf32, #tpu.memory_space<vmem>>, vector<1x128xf32>
    %65 = vector.broadcast %64 : vector<1x128xf32> to vector<2x128xf32>
    %66 = arith.addf %63, %65 : vector<2x128xf32>
    %67 = arith.negf %66 : vector<2x128xf32>
    %68 = math.exp %67 : vector<2x128xf32>
    %cst_36 = arith.constant 1.000000e+00 : f32
    %69 = vector.broadcast %cst_36 : f32 to vector<2x128xf32>
    %70 = arith.addf %69, %68 : vector<2x128xf32>
    %71 = arith.divf %69, %70 : vector<2x128xf32>
    %c0_37 = arith.constant 0 : index
    %c0_38 = arith.constant 0 : index
    %72 = vector.load %arg14[%c0_37, %c0_38] : memref<2x128xf32, #tpu.memory_space<vmem>>, vector<2x128xf32>
    tpu.vector_store %arg14[%c0_37, %c0_38], %71 {strides = array<i32>} : memref<2x128xf32, #tpu.memory_space<vmem>>, vector<2x128xf32>,
    return
  }
}

module attributes {stable_mosaic.version = 11 : i64} {
  func.func @_affine_kernel(%arg0: i32, %arg1: i32, %arg2: memref<128x256xf32, #tpu.memory_space<vmem>>, %arg3: memref<128x1xf32, #tpu.memory_space<vmem>>, %arg4: memref<128x1xf32, #tpu.memory_space<vmem>>, %arg5: memref<128x256xf32, #tpu.memory_space<vmem>>) attributes {dimension_semantics = [#tpu.dimension_semantics<parallel>, #tpu.dimension_semantics<parallel>], iteration_bounds = array<i64: 1, 1>, scalar_prefetch = 0 : i64, scratch_operands = 0 : i64, tpu.core_type = #tpu.core_type<tc>, window_params = [{transform_indices = @transform_0, window_bounds = array<i64: 128, 256>}, {transform_indices = @transform_1, window_bounds = array<i64: 128, 1>}, {transform_indices = @transform_2, window_bounds = array<i64: 128, 1>}, {transform_indices = @transform_3, window_bounds = array<i64: 128, 256>}]} {
    %c0 = arith.constant 0 : index
    %c0_0 = arith.constant 0 : index
    %0 = vector.load %arg2[%c0, %c0_0] : memref<128x256xf32, #tpu.memory_space<vmem>>, vector<128x256xf32>
    %c0_1 = arith.constant 0 : index
    %c0_2 = arith.constant 0 : index
    %1 = vector.load %arg3[%c0_1, %c0_2] : memref<128x1xf32, #tpu.memory_space<vmem>>, vector<128x1xf32>
    %2 = vector.broadcast %1 : vector<128x1xf32> to vector<128x256xf32>
    %3 = arith.mulf %0, %2 : vector<128x256xf32>
    %c0_3 = arith.constant 0 : index
    %c0_4 = arith.constant 0 : index
    %4 = vector.load %arg4[%c0_3, %c0_4] : memref<128x1xf32, #tpu.memory_space<vmem>>, vector<128x1xf32>
    %5 = vector.broadcast %4 : vector<128x1xf32> to vector<128x256xf32>
    %6 = arith.addf %3, %5 : vector<128x256xf32>
    %c0_5 = arith.constant 0 : index
    %c0_6 = arith.constant 0 : index
    %7 = vector.load %arg5[%c0_5, %c0_6] : memref<128x256xf32, #tpu.memory_space<vmem>>, vector<128x256xf32>
    tpu.vector_store %arg5[%c0_5, %c0_6], %6 {strides = array<i32>} : memref<128x256xf32, #tpu.memory_space<vmem>>, vector<128x256xf32>,
    return
  }
  func.func @transform_0(%arg0: i32, %arg1: i32) -> (i32, i32) {
    %c0_i32 = arith.constant 0 : i32
    return %arg0, %arg1 : i32, i32
  }
  func.func @transform_1(%arg0: i32, %arg1: i32) -> (i32, i32) {
    %c0_i32 = arith.constant 0 : i32
    %c0_i32_0 = arith.constant 0 : i32
    return %arg0, %c0_i32 : i32, i32
  }
  func.func @transform_2(%arg0: i32, %arg1: i32) -> (i32, i32) {
    %c0_i32 = arith.constant 0 : i32
    %c0_i32_0 = arith.constant 0 : i32
    return %arg0, %c0_i32 : i32, i32
  }
  func.func @transform_3(%arg0: i32, %arg1: i32) -> (i32, i32) {
    %c0_i32 = arith.constant 0 : i32
    return %arg0, %arg1 : i32, i32
  }
}

</mosaic_0001>

<llo_original>
// kernel: mapping_forward.3
$region0: #{mapping_forward.3}
  #allocation0 [shape = 'u32[]', space=smem, size = 0x4, offset = 0x4, fixed_abs, tag = 'smem constant byte address 0x4 - core index']
  #allocation1 [shape = 'u32[144,128]{1,0:T(1,128)}', space=vmem, size = 0x12000, scoped, tag = 'internal scratch']
  %s0 = inlined_call_operand.vmem [shape: f32[128,256], index: 0, kind: input, shape index: {}, may-alias: {0,3}]
  %s1 = inlined_call_operand.vmem [shape: f32[128,1], index: 1, kind: input, shape index: {}]
  %s2 = inlined_call_operand.vmem [shape: f32[128,1], index: 2, kind: input, shape index: {}]
  %s3 = inlined_call_operand.vmem [shape: f32[128,256], index: 3, kind: output, shape index: {}, may-alias: {0,3}]
  %s4 = sld [smem:[#allocation0]]
  $region22: #{mapping_forward.3} parent=0
    _
  %s6 = ssub.s32 1, %s4
  %s7 = scalar_select 0, %s6, %s4
  // Predicated region
  $region2: #{mapping_forward.3} parent=0 // pred_check
    _
  $region3: #{mapping_forward.3} parent=0 // pred_check_branch
    %9 = sbr.rel (0) target = $region5
  $region4: #{mapping_forward.3} parent=0 // pred_region
    _
  $region5: #{mapping_forward.3} parent=0 // pred_fallthru
    _
  // Predicated region
  $region6: #{mapping_forward.3} parent=0 // pred_check
    _
  $region7: #{mapping_forward.3} parent=0 // pred_check_branch
    %11 = sbr.rel (0) target = $region9
  $region8: #{mapping_forward.3} parent=0 // pred_region
    _
  $region9: #{mapping_forward.3} parent=0 // pred_fallthru
    _
  // Predicated region
  $region10: #{mapping_forward.3} parent=0 // pred_check
    _
  $region11: #{mapping_forward.3} parent=0 // pred_check_branch
    %13 = sbr.rel (0) target = $region13
  $region12: #{mapping_forward.3} parent=0 // pred_region
    _
  $region13: #{mapping_forward.3} parent=0 // pred_fallthru
    _
  %v14 = vld [vmem:[%s0] sm:$0xff]
  %v15 = vld [vmem:[%s0 + $0x8] sm:$0xff]
  %v16 = vld [vmem:[%s0 + $0x10] sm:$0xff]
  %v17 = vld [vmem:[%s0 + $0x18] sm:$0xff]
  %v18 = vld [vmem:[%s0 + $0x20] sm:$0xff]
  %v19 = vld [vmem:[%s0 + $0x28] sm:$0xff]
  %v20 = vld [vmem:[%s0 + $0x30] sm:$0xff]
  %v21 = vld [vmem:[%s0 + $0x38] sm:$0xff]
  %v22 = vld [vmem:[%s0 + $0x40] sm:$0xff]
  %v23 = vld [vmem:[%s0 + $0x48] sm:$0xff]
  %v24 = vld [vmem:[%s0 + $0x50] sm:$0xff]
  %v25 = vld [vmem:[%s0 + $0x58] sm:$0xff]
  %v26 = vld [vmem:[%s0 + $0x60] sm:$0xff]
  %v27 = vld [vmem:[%s0 + $0x68] sm:$0xff]
  %v28 = vld [vmem:[%s0 + $0x70] sm:$0xff]
  %v29 = vld [vmem:[%s0 + $0x78] sm:$0xff]
  %v30 = vld [vmem:[%s0 + $0x80] sm:$0xff]
  %v31 = vld [vmem:[%s0 + $0x88] sm:$0xff]
  %v32 = vld [vmem:[%s0 + $0x90] sm:$0xff]
  %v33 = vld [vmem:[%s0 + $0x98] sm:$0xff]
  %v34 = vld [vmem:[%s0 + $0xa0] sm:$0xff]
  %v35 = vld [vmem:[%s0 + $0xa8] sm:$0xff]
  %v36 = vld [vmem:[%s0 + $0xb0] sm:$0xff]
  %v37 = vld [vmem:[%s0 + $0xb8] sm:$0xff]
  %v38 = vld [vmem:[%s0 + $0xc0] sm:$0xff]
  %v39 = vld [vmem:[%s0 + $0xc8] sm:$0xff]
  %v40 = vld [vmem:[%s0 + $0xd0] sm:$0xff]
  %v41 = vld [vmem:[%s0 + $0xd8] sm:$0xff]
  %v42 = vld [vmem:[%s0 + $0xe0] sm:$0xff]
  %v43 = vld [vmem:[%s0 + $0xe8] sm:$0xff]
  %v44 = vld [vmem:[%s0 + $0xf0] sm:$0xff]
  %v45 = vld [vmem:[%s0 + $0xf8] sm:$0xff]
  %v46 = vld [vmem:[%s1] sm:$0xff]
  %v47 = vld [vmem:[%s1 + $0x8] sm:$0xff]
  %v48 = vld [vmem:[%s1 + $0x10] sm:$0xff]
  %v49 = vld [vmem:[%s1 + $0x18] sm:$0xff]
  %v50 = vld [vmem:[%s1 + $0x20] sm:$0xff]
  %v51 = vld [vmem:[%s1 + $0x28] sm:$0xff]
  %v52 = vld [vmem:[%s1 + $0x30] sm:$0xff]
  %v53 = vld [vmem:[%s1 + $0x38] sm:$0xff]
  %v54 = vld [vmem:[%s1 + $0x40] sm:$0xff]
  %v55 = vld [vmem:[%s1 + $0x48] sm:$0xff]
  %v56 = vld [vmem:[%s1 + $0x50] sm:$0xff]
  %v57 = vld [vmem:[%s1 + $0x58] sm:$0xff]
  %v58 = vld [vmem:[%s1 + $0x60] sm:$0xff]
  %v59 = vld [vmem:[%s1 + $0x68] sm:$0xff]
  %v60 = vld [vmem:[%s1 + $0x70] sm:$0xff]
  %v61 = vld [vmem:[%s1 + $0x78] sm:$0xff]
  %63 = vset.pattern.permute.xlu0 0
  %64 = vperm.xlu0 %63, %v46
  %v65 = vpop.permute.xlu0 %64
  %68 = vset.pattern.permute.xlu0 0
  %69 = vperm.xlu0 %68, %v47
  %v70 = vpop.permute.xlu0 %69
  %73 = vset.pattern.permute.xlu0 0
  %74 = vperm.xlu0 %73, %v48
  %v75 = vpop.permute.xlu0 %74
  %78 = vset.pattern.permute.xlu0 0
  %79 = vperm.xlu0 %78, %v49
  %v80 = vpop.permute.xlu0 %79
  %83 = vset.pattern.permute.xlu0 0
  %84 = vperm.xlu0 %83, %v50
  %v85 = vpop.permute.xlu0 %84
  %88 = vset.pattern.permute.xlu0 0
  %89 = vperm.xlu0 %88, %v51
  %v90 = vpop.permute.xlu0 %89
  %93 = vset.pattern.permute.xlu0 0
  %94 = vperm.xlu0 %93, %v52
  %v95 = vpop.permute.xlu0 %94
  %98 = vset.pattern.permute.xlu0 0
  %99 = vperm.xlu0 %98, %v53
  %v100 = vpop.permute.xlu0 %99
  %103 = vset.pattern.permute.xlu0 0
  %104 = vperm.xlu0 %103, %v54
  %v105 = vpop.permute.xlu0 %104
  %108 = vset.pattern.permute.xlu0 0
  %109 = vperm.xlu0 %108, %v55
  %v110 = vpop.permute.xlu0 %109
  %113 = vset.pattern.permute.xlu0 0
  %114 = vperm.xlu0 %113, %v56
  %v115 = vpop.permute.xlu0 %114
  %118 = vset.pattern.permute.xlu0 0
  %119 = vperm.xlu0 %118, %v57
  %v120 = vpop.permute.xlu0 %119
  %123 = vset.pattern.permute.xlu0 0
  %124 = vperm.xlu0 %123, %v58
  %v125 = vpop.permute.xlu0 %124
  %128 = vset.pattern.permute.xlu0 0
  %129 = vperm.xlu0 %128, %v59
  %v130 = vpop.permute.xlu0 %129
  %133 = vset.pattern.permute.xlu0 0
  %134 = vperm.xlu0 %133, %v60
  %v135 = vpop.permute.xlu0 %134
  %138 = vset.pattern.permute.xlu0 0
  %139 = vperm.xlu0 %138, %v61
  %v140 = vpop.permute.xlu0 %139
  %v142 = vmul.f32 %v14, %v65
  %v143 = vmul.f32 %v15, %v65
  %v144 = vmul.f32 %v16, %v70
  %v145 = vmul.f32 %v17, %v70
  %v146 = vmul.f32 %v18, %v75
  %v147 = vmul.f32 %v19, %v75
  %v148 = vmul.f32 %v20, %v80
  %v149 = vmul.f32 %v21, %v80
  %v150 = vmul.f32 %v22, %v85
  %v151 = vmul.f32 %v23, %v85
  %v152 = vmul.f32 %v24, %v90
  %v153 = vmul.f32 %v25, %v90
  %v154 = vmul.f32 %v26, %v95
  %v155 = vmul.f32 %v27, %v95
  %v156 = vmul.f32 %v28, %v100
  %v157 = vmul.f32 %v29, %v100
  %v158 = vmul.f32 %v30, %v105
  %v159 = vmul.f32 %v31, %v105
  %v160 = vmul.f32 %v32, %v110
  %v161 = vmul.f32 %v33, %v110
  %v162 = vmul.f32 %v34, %v115
  %v163 = vmul.f32 %v35, %v115
  %v164 = vmul.f32 %v36, %v120
  %v165 = vmul.f32 %v37, %v120
  %v166 = vmul.f32 %v38, %v125
  %v167 = vmul.f32 %v39, %v125
  %v168 = vmul.f32 %v40, %v130
  %v169 = vmul.f32 %v41, %v130
  %v170 = vmul.f32 %v42, %v135
  %v171 = vmul.f32 %v43, %v135
  %v172 = vmul.f32 %v44, %v140
  %v173 = vmul.f32 %v45, %v140
  %v174 = vld [vmem:[%s2] sm:$0xff]
  %v175 = vld [vmem:[%s2 + $0x8] sm:$0xff]
  %v176 = vld [vmem:[%s2 + $0x10] sm:$0xff]
  %v177 = vld [vmem:[%s2 + $0x18] sm:$0xff]
  %v178 = vld [vmem:[%s2 + $0x20] sm:$0xff]
  %v179 = vld [vmem:[%s2 + $0x28] sm:$0xff]
  %v180 = vld [vmem:[%s2 + $0x30] sm:$0xff]
  %v181 = vld [vmem:[%s2 + $0x38] sm:$0xff]
  %v182 = vld [vmem:[%s2 + $0x40] sm:$0xff]
  %v183 = vld [vmem:[%s2 + $0x48] sm:$0xff]
  %v184 = vld [vmem:[%s2 + $0x50] sm:$0xff]
  %v185 = vld [vmem:[%s2 + $0x58] sm:$0xff]
  %v186 = vld [vmem:[%s2 + $0x60] sm:$0xff]
  %v187 = vld [vmem:[%s2 + $0x68] sm:$0xff]
  %v188 = vld [vmem:[%s2 + $0x70] sm:$0xff]
  %v189 = vld [vmem:[%s2 + $0x78] sm:$0xff]
  %191 = vset.pattern.permute.xlu0 0
  %192 = vperm.xlu0 %191, %v174
  %v193 = vpop.permute.xlu0 %192
  %196 = vset.pattern.permute.xlu0 0
  %197 = vperm.xlu0 %196, %v175
  %v198 = vpop.permute.xlu0 %197
  %201 = vset.pattern.permute.xlu0 0
  %202 = vperm.xlu0 %201, %v176
  %v203 = vpop.permute.xlu0 %202
  %206 = vset.pattern.permute.xlu0 0
  %207 = vperm.xlu0 %206, %v177
  %v208 = vpop.permute.xlu0 %207
  %211 = vset.pattern.permute.xlu0 0
  %212 = vperm.xlu0 %211, %v178
  %v213 = vpop.permute.xlu0 %212
  %216 = vset.pattern.permute.xlu0 0
  %217 = vperm.xlu0 %216, %v179
  %v218 = vpop.permute.xlu0 %217
  %221 = vset.pattern.permute.xlu0 0
  %222 = vperm.xlu0 %221, %v180
  %v223 = vpop.permute.xlu0 %222
  %226 = vset.pattern.permute.xlu0 0
  %227 = vperm.xlu0 %226, %v181
  %v228 = vpop.permute.xlu0 %227
  %231 = vset.pattern.permute.xlu0 0
  %232 = vperm.xlu0 %231, %v182
  %v233 = vpop.permute.xlu0 %232
  %236 = vset.pattern.permute.xlu0 0
  %237 = vperm.xlu0 %236, %v183
  %v238 = vpop.permute.xlu0 %237
  %241 = vset.pattern.permute.xlu0 0
  %242 = vperm.xlu0 %241, %v184
  %v243 = vpop.permute.xlu0 %242
  %246 = vset.pattern.permute.xlu0 0
  %247 = vperm.xlu0 %246, %v185
  %v248 = vpop.permute.xlu0 %247
  %251 = vset.pattern.permute.xlu0 0
  %252 = vperm.xlu0 %251, %v186
  %v253 = vpop.permute.xlu0 %252
  %256 = vset.pattern.permute.xlu0 0
  %257 = vperm.xlu0 %256, %v187
  %v258 = vpop.permute.xlu0 %257
  %261 = vset.pattern.permute.xlu0 0
  %262 = vperm.xlu0 %261, %v188
  %v263 = vpop.permute.xlu0 %262
  %266 = vset.pattern.permute.xlu0 0
  %267 = vperm.xlu0 %266, %v189
  %v268 = vpop.permute.xlu0 %267
  %v270 = vadd.f32 %v142, %v193
  %v271 = vadd.f32 %v143, %v193
  %v272 = vadd.f32 %v144, %v198
  %v273 = vadd.f32 %v145, %v198
  %v274 = vadd.f32 %v146, %v203
  %v275 = vadd.f32 %v147, %v203
  %v276 = vadd.f32 %v148, %v208
  %v277 = vadd.f32 %v149, %v208
  %v278 = vadd.f32 %v150, %v213
  %v279 = vadd.f32 %v151, %v213
  %v280 = vadd.f32 %v152, %v218
  %v281 = vadd.f32 %v153, %v218
  %v282 = vadd.f32 %v154, %v223
  %v283 = vadd.f32 %v155, %v223
  %v284 = vadd.f32 %v156, %v228
  %v285 = vadd.f32 %v157, %v228
  %v286 = vadd.f32 %v158, %v233
  %v287 = vadd.f32 %v159, %v233
  %v288 = vadd.f32 %v160, %v238
  %v289 = vadd.f32 %v161, %v238
  %v290 = vadd.f32 %v162, %v243
  %v291 = vadd.f32 %v163, %v243
  %v292 = vadd.f32 %v164, %v248
  %v293 = vadd.f32 %v165, %v248
  %v294 = vadd.f32 %v166, %v253
  %v295 = vadd.f32 %v167, %v253
  %v296 = vadd.f32 %v168, %v258
  %v297 = vadd.f32 %v169, %v258
  %v298 = vadd.f32 %v170, %v263
  %v299 = vadd.f32 %v171, %v263
  %v300 = vadd.f32 %v172, %v268
  %v301 = vadd.f32 %v173, %v268
  %302 = vst [vmem:[%s3] sm:$0xff] %v270
  %303 = vst [vmem:[%s3 + $0x8] sm:$0xff] %v271
  %304 = vst [vmem:[%s3 + $0x10] sm:$0xff] %v272
  %305 = vst [vmem:[%s3 + $0x18] sm:$0xff] %v273
  %306 = vst [vmem:[%s3 + $0x20] sm:$0xff] %v274
  %307 = vst [vmem:[%s3 + $0x28] sm:$0xff] %v275
  %308 = vst [vmem:[%s3 + $0x30] sm:$0xff] %v276
  %309 = vst [vmem:[%s3 + $0x38] sm:$0xff] %v277
  %310 = vst [vmem:[%s3 + $0x40] sm:$0xff] %v278
  %311 = vst [vmem:[%s3 + $0x48] sm:$0xff] %v279
  %312 = vst [vmem:[%s3 + $0x50] sm:$0xff] %v280
  %313 = vst [vmem:[%s3 + $0x58] sm:$0xff] %v281
  %314 = vst [vmem:[%s3 + $0x60] sm:$0xff] %v282
  %315 = vst [vmem:[%s3 + $0x68] sm:$0xff] %v283
  %316 = vst [vmem:[%s3 + $0x70] sm:$0xff] %v284
  %317 = vst [vmem:[%s3 + $0x78] sm:$0xff] %v285
  %318 = vst [vmem:[%s3 + $0x80] sm:$0xff] %v286
  %319 = vst [vmem:[%s3 + $0x88] sm:$0xff] %v287
  %320 = vst [vmem:[%s3 + $0x90] sm:$0xff] %v288
  %321 = vst [vmem:[%s3 + $0x98] sm:$0xff] %v289
  %322 = vst [vmem:[%s3 + $0xa0] sm:$0xff] %v290
  %323 = vst [vmem:[%s3 + $0xa8] sm:$0xff] %v291
  %324 = vst [vmem:[%s3 + $0xb0] sm:$0xff] %v292
  %325 = vst [vmem:[%s3 + $0xb8] sm:$0xff] %v293
  %326 = vst [vmem:[%s3 + $0xc0] sm:$0xff] %v294
  %327 = vst [vmem:[%s3 + $0xc8] sm:$0xff] %v295
  %328 = vst [vmem:[%s3 + $0xd0] sm:$0xff] %v296
  %329 = vst [vmem:[%s3 + $0xd8] sm:$0xff] %v297
  %330 = vst [vmem:[%s3 + $0xe0] sm:$0xff] %v298
  %331 = vst [vmem:[%s3 + $0xe8] sm:$0xff] %v299
  %332 = vst [vmem:[%s3 + $0xf0] sm:$0xff] %v300
  %333 = vst [vmem:[%s3 + $0xf8] sm:$0xff] %v301
  // Predicated region
  $region14: #{mapping_forward.3} parent=0 // pred_check
    _
  $region15: #{mapping_forward.3} parent=0 // pred_check_branch
    %335 = sbr.rel (0) target = $region17
  $region16: #{mapping_forward.3} parent=0 // pred_region
    _
  $region17: #{mapping_forward.3} parent=0 // pred_fallthru
    _
  // Predicated region
  $region18: #{mapping_forward.3} parent=0 // pred_check
    _
  $region19: #{mapping_forward.3} parent=0 // pred_check_branch
    %337 = sbr.rel (0) target = $region21
  $region20: #{mapping_forward.3} parent=0 // pred_region
    _
  $region21: #{mapping_forward.3} parent=0 // pred_fallthru
    _

// kernel: mapping_forward.2
$region0: #{mapping_forward.2}
  #allocation0 [shape = 'u32[]', space=smem, size = 0x4, offset = 0x4, fixed_abs, tag = 'smem constant byte address 0x4 - core index']
  #allocation1 [shape = 'u32[144,128]{1,0:T(1,128)}', space=vmem, size = 0x12000, scoped, tag = 'internal scratch']
  %s0 = inlined_call_operand.vmem [shape: f32[5], index: 0, kind: input, shape index: {}]
  %s1 = inlined_call_operand.vmem [shape: f32[2,16], index: 1, kind: input, shape index: {}]
  %s2 = inlined_call_operand.vmem [shape: bf16[16,512], index: 2, kind: input, shape index: {}]
  %s3 = inlined_call_operand.vmem [shape: f32[1,512], index: 3, kind: input, shape index: {}]
  %s4 = inlined_call_operand.vmem [shape: bf16[512,512], index: 4, kind: input, shape index: {}]
  %s5 = inlined_call_operand.vmem [shape: f32[1,512], index: 5, kind: input, shape index: {}]
  %s6 = inlined_call_operand.vmem [shape: bf16[512,512], index: 6, kind: input, shape index: {}]
  %s7 = inlined_call_operand.vmem [shape: f32[1,512], index: 7, kind: input, shape index: {}]
  %s8 = inlined_call_operand.vmem [shape: bf16[512,512], index: 8, kind: input, shape index: {}]
  %s9 = inlined_call_operand.vmem [shape: f32[1,512], index: 9, kind: input, shape index: {}]
  %s10 = inlined_call_operand.vmem [shape: bf16[512,512], index: 10, kind: input, shape index: {}]
  %s11 = inlined_call_operand.vmem [shape: f32[1,512], index: 11, kind: input, shape index: {}]
  %s12 = inlined_call_operand.vmem [shape: bf16[512,128], index: 12, kind: input, shape index: {}]
  %s13 = inlined_call_operand.vmem [shape: f32[1,128], index: 13, kind: input, shape index: {}]
  %s14 = inlined_call_operand.vmem [shape: f32[2,128], index: 14, kind: output, shape index: {}]
  %s15 = sld [smem:[#allocation0]]
  $region70: #{mapping_forward.2} parent=0
    _
  %s17 = ssub.s32 1, %s15
  %s18 = scalar_select 0, %s17, %s15
  $region1: #{mapping_forward.2} parent=0
    #allocation2 [shape = 'u8[512]{0}', space=smem, size = 0x200, scoped, tag = 'input window, operand 0, single buffered']
    #allocation3 [shape = 's32[1]{0}', space=sflag, size = 0x4, scoped, tag = 'scoped memory for mapping_forward.2']
    %19 = vsyncpa [#allocation3], 0
    // Predicated region
    $region2: #{mapping_forward.2} parent=1 // pred_check
      _
    $region3: #{mapping_forward.2} parent=1 // pred_check_branch
      %21 = sbr.rel (0) target = $region5
    $region4: #{mapping_forward.2} parent=1 // pred_region
      %s23 = ssub.s32 16, 16
      %24 = vsyncadd [#allocation3], %s23
      %s26 = sshll.u32 %s0, 4
      %s27 = int_to_ptr.vmem [resolvable:$true] %s26
      %29 = dma.vmem_to_smem %s27, 16, [#allocation2], [#allocation3]
    $region5: #{mapping_forward.2} parent=1 // pred_fallthru
      _
    // Predicated region
    $region6: #{mapping_forward.2} parent=1 // pred_check
      _
    $region7: #{mapping_forward.2} parent=1 // pred_check_branch
      %31 = sbr.rel (0) target = $region9
    $region8: #{mapping_forward.2} parent=1 // pred_region
      _
    $region9: #{mapping_forward.2} parent=1 // pred_fallthru
      _
    // Predicated region
    $region10: #{mapping_forward.2} parent=1 // pred_check
      _
    $region11: #{mapping_forward.2} parent=1 // pred_check_branch
      %33 = sbr.rel (0) target = $region13
    $region12: #{mapping_forward.2} parent=1 // pred_region
      _
    $region13: #{mapping_forward.2} parent=1 // pred_fallthru
      _
    // Predicated region
    $region14: #{mapping_forward.2} parent=1 // pred_check
      _
    $region15: #{mapping_forward.2} parent=1 // pred_check_branch
      %35 = sbr.rel (0) target = $region17
    $region16: #{mapping_forward.2} parent=1 // pred_region
      _
    $region17: #{mapping_forward.2} parent=1 // pred_fallthru
      _
    // Predicated region
    $region18: #{mapping_forward.2} parent=1 // pred_check
      _
    $region19: #{mapping_forward.2} parent=1 // pred_check_branch
      %37 = sbr.rel (0) target = $region21
    $region20: #{mapping_forward.2} parent=1 // pred_region
      _
    $region21: #{mapping_forward.2} parent=1 // pred_fallthru
      _
    // Predicated region
    $region22: #{mapping_forward.2} parent=1 // pred_check
      _
    $region23: #{mapping_forward.2} parent=1 // pred_check_branch
      %39 = sbr.rel (0) target = $region25
    $region24: #{mapping_forward.2} parent=1 // pred_region
      _
    $region25: #{mapping_forward.2} parent=1 // pred_fallthru
      _
    // Predicated region
    $region26: #{mapping_forward.2} parent=1 // pred_check
      _
    $region27: #{mapping_forward.2} parent=1 // pred_check_branch
      %41 = sbr.rel (0) target = $region29
    $region28: #{mapping_forward.2} parent=1 // pred_region
      _
    $region29: #{mapping_forward.2} parent=1 // pred_fallthru
      _
    // Predicated region
    $region30: #{mapping_forward.2} parent=1 // pred_check
      _
    $region31: #{mapping_forward.2} parent=1 // pred_check_branch
      %43 = sbr.rel (0) target = $region33
    $region32: #{mapping_forward.2} parent=1 // pred_region
      _
    $region33: #{mapping_forward.2} parent=1 // pred_fallthru
      _
    // Predicated region
    $region34: #{mapping_forward.2} parent=1 // pred_check
      _
    $region35: #{mapping_forward.2} parent=1 // pred_check_branch
      %45 = sbr.rel (0) target = $region37
    $region36: #{mapping_forward.2} parent=1 // pred_region
      _
    $region37: #{mapping_forward.2} parent=1 // pred_fallthru
      _
    // Predicated region
    $region38: #{mapping_forward.2} parent=1 // pred_check
      _
    $region39: #{mapping_forward.2} parent=1 // pred_check_branch
      %47 = sbr.rel (0) target = $region41
    $region40: #{mapping_forward.2} parent=1 // pred_region
      _
    $region41: #{mapping_forward.2} parent=1 // pred_fallthru
      _
    // Predicated region
    $region42: #{mapping_forward.2} parent=1 // pred_check
      _
    $region43: #{mapping_forward.2} parent=1 // pred_check_branch
      %49 = sbr.rel (0) target = $region45
    $region44: #{mapping_forward.2} parent=1 // pred_region
      _
    $region45: #{mapping_forward.2} parent=1 // pred_fallthru
      _
    // Predicated region
    $region46: #{mapping_forward.2} parent=1 // pred_check
      _
    $region47: #{mapping_forward.2} parent=1 // pred_check_branch
      %51 = sbr.rel (0) target = $region49
    $region48: #{mapping_forward.2} parent=1 // pred_region
      _
    $region49: #{mapping_forward.2} parent=1 // pred_fallthru
      _
    // Predicated region
    $region50: #{mapping_forward.2} parent=1 // pred_check
      _
    $region51: #{mapping_forward.2} parent=1 // pred_check_branch
      %53 = sbr.rel (0) target = $region53
    $region52: #{mapping_forward.2} parent=1 // pred_region
      _
    $region53: #{mapping_forward.2} parent=1 // pred_fallthru
      _
    // Predicated region
    $region54: #{mapping_forward.2} parent=1 // pred_check
      _
    $region55: #{mapping_forward.2} parent=1 // pred_check_branch
      %55 = sbr.rel (0) target = $region57
    $region56: #{mapping_forward.2} parent=1 // pred_region
      _
    $region57: #{mapping_forward.2} parent=1 // pred_fallthru
      _
    // Predicated region
    $region58: #{mapping_forward.2} parent=1 // pred_check
      _
    $region59: #{mapping_forward.2} parent=1 // pred_check_branch
      %57 = sbr.rel (0) target = $region61
    $region60: #{mapping_forward.2} parent=1 // pred_region
      %58 = dma.done [#allocation3], 16
    $region61: #{mapping_forward.2} parent=1 // pred_fallthru
      _
    %59 = sfence
    %v61 = vld [vmem:[%s1] sm:$0x3]
    %s62 = sld [smem:[#allocation2]]
    %v63 = vpack.c.bf16 %v61, %v61
    %v64 = vld [vmem:[%s2] sm:$0xff]
    %v65 = vld [vmem:[%s2 + $0x8] sm:$0xff]
    %v66 = vld [vmem:[%s2 + $0x10] sm:$0xff]
    %v67 = vld [vmem:[%s2 + $0x18] sm:$0xff]
    %v68 = vld [vmem:[%s3] sm:$0xf]
    %v70 = vlaneseq
    %v71 = vshrl.u32 %v70, 7
    %v72 = vsub.s32 0, %v71
    %v73 = vrot.slane %v68, %v72
    %v74 = vlaneseq
    %v75 = vshrl.u32 %v74, 7
    %v76 = vsub.s32 1, %v75
    %v77 = vrot.slane %v68, %v76
    %v78 = vlaneseq
    %v79 = vshrl.u32 %v78, 7
    %v80 = vsub.s32 2, %v79
    %v81 = vrot.slane %v68, %v80
    %v82 = vlaneseq
    %v83 = vshrl.u32 %v82, 7
    %v84 = vsub.s32 3, %v83
    %v85 = vrot.slane %v68, %v84
    %v94 = vunpack.c.l.b16 %v64
    %v95 = vunpack.c.h.b16 %v64
    %v96 = vunpack.c.l.b16 %v65
    %v97 = vunpack.c.h.b16 %v65
    %v98 = vunpack.c.l.b16 %v66
    %v99 = vunpack.c.h.b16 %v66
    %v100 = vunpack.c.l.b16 %v67
    %v101 = vunpack.c.h.b16 %v67
    %v102 = vpack.c.b16 %v98, %v94
    %v103 = vpack.c.b16 %v99, %v95
    %v104 = vpack.c.b16 %v100, %v96
    %v105 = vpack.c.b16 %v101, %v97
    %vm110 = vcmask 130048
    %v112 = vsel %vm110, %v63, 0
    %114 = vmatprep.subr.bf16.mxu0 %v103
    %115 = vmatpush1.bf16.msra.mxu0 %v102
    %116 = vmatprep.subr.bf16.mxu0 0
    %117 = vmatpush1.bf16.msra.mxu0 0
    %118 = vmatprep.subr.bf16.mxu0 0
    %119 = vmatpush1.bf16.msra.mxu0 0
    %120 = vmatprep.subr.bf16.mxu0 0
    %121 = vmatpush1.bf16.msra.mxu0 0
    %122 = vmatprep.subr.bf16.mxu0 0
    %123 = vmatpush1.bf16.msra.mxu0 0
    %124 = vmatprep.subr.bf16.mxu0 0
    %125 = vmatpush1.bf16.msra.mxu0 0
    %126 = vmatprep.subr.bf16.mxu0 0
    %127 = vmatpush1.bf16.msra.mxu0 0
    %128 = vmatprep.subr.bf16.mxu0 0
    %129 = vmatpush1.bf16.msra.mxu0 0
    %130 = vmatprep.subr.bf16.mxu0 0
    %131 = vmatpush1.bf16.msra.mxu0 0
    %132 = vmatprep.subr.bf16.mxu0 0
    %133 = vmatpush1.bf16.msra.mxu0 0
    %134 = vmatprep.subr.bf16.mxu0 0
    %135 = vmatpush1.bf16.msra.mxu0 0
    %136 = vmatprep.subr.bf16.mxu0 0
    %137 = vmatpush1.bf16.msra.mxu0 0
    %138 = vmatprep.subr.bf16.mxu0 0
    %139 = vmatpush1.bf16.msra.mxu0 0
    %140 = vmatprep.subr.bf16.mxu0 0
    %141 = vmatpush1.bf16.msra.mxu0 0
    %142 = vmatprep.subr.bf16.mxu0 0
    %143 = vmatpush1.bf16.msra.mxu0 0
    %144 = vmatprep.subr.bf16.mxu0 0
    %145 = vmatpush1.bf16.msra.mxu0 0
    %146 = vmatprep.mubr.bf16.mxu0 0
    %147 = vmatmul.mubr.bf16.gmra.mrb[0].mxu0 %v112
    %v148 = vpop.f32.mrb[0].mxu0
    %v149 = vadd.f32 %v73, %v148
    %v150 = vpop.f32.mrb[0].mxu0
    %v151 = vadd.f32 %v77, %v150
    %v152 = vpop.f32.mrb[0].mxu0
    %v153 = vpop.f32.mrb[0].mxu0
    %154 = vdwg.mxu0
    %155 = vmatprep.subr.bf16.mxu0 %v105
    %156 = vmatpush1.bf16.msra.mxu0 %v104
    %157 = vmatprep.subr.bf16.mxu0 0
    %158 = vmatpush1.bf16.msra.mxu0 0
    %159 = vmatprep.subr.bf16.mxu0 0
    %160 = vmatpush1.bf16.msra.mxu0 0
    %161 = vmatprep.subr.bf16.mxu0 0
    %162 = vmatpush1.bf16.msra.mxu0 0
    %163 = vmatprep.subr.bf16.mxu0 0
    %164 = vmatpush1.bf16.msra.mxu0 0
    %165 = vmatprep.subr.bf16.mxu0 0
    %166 = vmatpush1.bf16.msra.mxu0 0
    %167 = vmatprep.subr.bf16.mxu0 0
    %168 = vmatpush1.bf16.msra.mxu0 0
    %169 = vmatprep.subr.bf16.mxu0 0
    %170 = vmatpush1.bf16.msra.mxu0 0
    %171 = vmatprep.subr.bf16.mxu0 0
    %172 = vmatpush1.bf16.msra.mxu0 0
    %173 = vmatprep.subr.bf16.mxu0 0
    %174 = vmatpush1.bf16.msra.mxu0 0
    %175 = vmatprep.subr.bf16.mxu0 0
    %176 = vmatpush1.bf16.msra.mxu0 0
    %177 = vmatprep.subr.bf16.mxu0 0
    %178 = vmatpush1.bf16.msra.mxu0 0
    %179 = vmatprep.subr.bf16.mxu0 0
    %180 = vmatpush1.bf16.msra.mxu0 0
    %181 = vmatprep.subr.bf16.mxu0 0
    %182 = vmatpush1.bf16.msra.mxu0 0
    %183 = vmatprep.subr.bf16.mxu0 0
    %184 = vmatpush1.bf16.msra.mxu0 0
    %185 = vmatprep.subr.bf16.mxu0 0
    %186 = vmatpush1.bf16.msra.mxu0 0
    %187 = vmatprep.mubr.bf16.mxu0 0
    %188 = vmatmul.mubr.bf16.gmra.mrb[0].mxu0 %v112
    %v189 = vpop.f32.mrb[0].mxu0
    %v190 = vadd.f32 %v81, %v189
    %v191 = vpop.f32.mrb[0].mxu0
    %v192 = vadd.f32 %v85, %v191
    %v193 = vpop.f32.mrb[0].mxu0
    %v194 = vpop.f32.mrb[0].mxu0
    %195 = vdwg.mxu0
    %vm196 = vcmp.ge.f32.partialorder %v149, 0.0
    %vm197 = vcmp.ge.f32.partialorder %v151, 0.0
    %vm198 = vcmp.ge.f32.partialorder %v190, 0.0
    %vm199 = vcmp.ge.f32.partialorder %v192, 0.0
    %v200 = vstv %s62
    %v201 = vmul.f32 %v200, %v149
    %v202 = vmul.f32 %v200, %v151
    %v203 = vmul.f32 %v200, %v190
    %v204 = vmul.f32 %v200, %v192
    %v205 = vsel %vm196, %v149, %v201
    %v206 = vsel %vm197, %v151, %v202
    %v207 = vsel %vm198, %v190, %v203
    %v208 = vsel %vm199, %v192, %v204
    %s209 = sld [smem:[#allocation2 + $0x1]]
    %v210 = vpack.c.bf16 %v205, %v205
    %v211 = vpack.c.bf16 %v206, %v206
    %v212 = vpack.c.bf16 %v207, %v207
    %v213 = vpack.c.bf16 %v208, %v208
    %v214 = vld [vmem:[%s4] sm:$0xff]
    %v215 = vld [vmem:[%s4 + $0x8] sm:$0xff]
    %v216 = vld [vmem:[%s4 + $0x10] sm:$0xff]
    %v217 = vld [vmem:[%s4 + $0x18] sm:$0xff]
    %v218 = vld [vmem:[%s4 + $0x20] sm:$0xff]
    %v219 = vld [vmem:[%s4 + $0x28] sm:$0xff]
    %v220 = vld [vmem:[%s4 + $0x30] sm:$0xff]
    %v221 = vld [vmem:[%s4 + $0x38] sm:$0xff]
    %v222 = vld [vmem:[%s4 + $0x40] sm:$0xff]
    %v223 = vld [vmem:[%s4 + $0x48] sm:$0xff]
    %v224 = vld [vmem:[%s4 + $0x50] sm:$0xff]
    %v225 = vld [vmem:[%s4 + $0x58] sm:$0xff]
    %v226 = vld [vmem:[%s4 + $0x60] sm:$0xff]
    %v227 = vld [vmem:[%s4 + $0x68] sm:$0xff]
    %v228 = vld [vmem:[%s4 + $0x70] sm:$0xff]
    %v229 = vld [vmem:[%s4 + $0x78] sm:$0xff]
    %v230 = vld [vmem:[%s4 + $0x80] sm:$0xff]
    %v231 = vld [vmem:[%s4 + $0x88] sm:$0xff]
    %v232 = vld [vmem:[%s4 + $0x90] sm:$0xff]
    %v233 = vld [vmem:[%s4 + $0x98] sm:$0xff]
    %v234 = vld [vmem:[%s4 + $0xa0] sm:$0xff]
    %v235 = vld [vmem:[%s4 + $0xa8] sm:$0xff]
    %v236 = vld [vmem:[%s4 + $0xb0] sm:$0xff]
    %v237 = vld [vmem:[%s4 + $0xb8] sm:$0xff]
    %v238 = vld [vmem:[%s4 + $0xc0] sm:$0xff]
    %v239 = vld [vmem:[%s4 + $0xc8] sm:$0xff]
    %v240 = vld [vmem:[%s4 + $0xd0] sm:$0xff]
    %v241 = vld [vmem:[%s4 + $0xd8] sm:$0xff]
    %v242 = vld [vmem:[%s4 + $0xe0] sm:$0xff]
    %v243 = vld [vmem:[%s4 + $0xe8] sm:$0xff]
    %v244 = vld [vmem:[%s4 + $0xf0] sm:$0xff]
    %v245 = vld [vmem:[%s4 + $0xf8] sm:$0xff]
    %v246 = vld [vmem:[%s4 + $0x100] sm:$0xff]
    %v247 = vld [vmem:[%s4 + $0x108] sm:$0xff]
    %v248 = vld [vmem:[%s4 + $0x110] sm:$0xff]
    %v249 = vld [vmem:[%s4 + $0x118] sm:$0xff]
    %v250 = vld [vmem:[%s4 + $0x120] sm:$0xff]
    %v251 = vld [vmem:[%s4 + $0x128] sm:$0xff]
    %v252 = vld [vmem:[%s4 + $0x130] sm:$0xff]
    %v253 = vld [vmem:[%s4 + $0x138] sm:$0xff]
    %v254 = vld [vmem:[%s4 + $0x140] sm:$0xff]
    %v255 = vld [vmem:[%s4 + $0x148] sm:$0xff]
    %v256 = vld [vmem:[%s4 + $0x150] sm:$0xff]
    %v257 = vld [vmem:[%s4 + $0x158] sm:$0xff]
    %v258 = vld [vmem:[%s4 + $0x160] sm:$0xff]
    %v259 = vld [vmem:[%s4 + $0x168] sm:$0xff]
    %v260 = vld [vmem:[%s4 + $0x170] sm:$0xff]
    %v261 = vld [vmem:[%s4 + $0x178] sm:$0xff]
    %v262 = vld [vmem:[%s4 + $0x180] sm:$0xff]
    %v263 = vld [vmem:[%s4 + $0x188] sm:$0xff]
    %v264 = vld [vmem:[%s4 + $0x190] sm:$0xff]
    %v265 = vld [vmem:[%s4 + $0x198] sm:$0xff]
    %v266 = vld [vmem:[%s4 + $0x1a0] sm:$0xff]
    %v267 = vld [vmem:[%s4 + $0x1a8] sm:$0xff]
    %v268 = vld [vmem:[%s4 + $0x1b0] sm:$0xff]
    %v269 = vld [vmem:[%s4 + $0x1b8] sm:$0xff]
    %v270 = vld [vmem:[%s4 + $0x1c0] sm:$0xff]
    %v271 = vld [vmem:[%s4 + $0x1c8] sm:$0xff]
    %v272 = vld [vmem:[%s4 + $0x1d0] sm:$0xff]
    %v273 = vld [vmem:[%s4 + $0x1d8] sm:$0xff]
    %v274 = vld [vmem:[%s4 + $0x1e0] sm:$0xff]
    %v275 = vld [vmem:[%s4 + $0x1e8] sm:$0xff]
    %v276 = vld [vmem:[%s4 + $0x1f0] sm:$0xff]
    %v277 = vld [vmem:[%s4 + $0x1f8] sm:$0xff]
    %v278 = vld [vmem:[%s4 + $0x200] sm:$0xff]
    %v279 = vld [vmem:[%s4 + $0x208] sm:$0xff]
    %v280 = vld [vmem:[%s4 + $0x210] sm:$0xff]
    %v281 = vld [vmem:[%s4 + $0x218] sm:$0xff]
    %v282 = vld [vmem:[%s4 + $0x220] sm:$0xff]
    %v283 = vld [vmem:[%s4 + $0x228] sm:$0xff]
    %v284 = vld [vmem:[%s4 + $0x230] sm:$0xff]
    %v285 = vld [vmem:[%s4 + $0x238] sm:$0xff]
    %v286 = vld [vmem:[%s4 + $0x240] sm:$0xff]
    %v287 = vld [vmem:[%s4 + $0x248] sm:$0xff]
    %v288 = vld [vmem:[%s4 + $0x250] sm:$0xff]
    %v289 = vld [vmem:[%s4 + $0x258] sm:$0xff]
    %v290 = vld [vmem:[%s4 + $0x260] sm:$0xff]
    %v291 = vld [vmem:[%s4 + $0x268] sm:$0xff]
    %v292 = vld [vmem:[%s4 + $0x270] sm:$0xff]
    %v293 = vld [vmem:[%s4 + $0x278] sm:$0xff]
    %v294 = vld [vmem:[%s4 + $0x280] sm:$0xff]
    %v295 = vld [vmem:[%s4 + $0x288] sm:$0xff]
    %v296 = vld [vmem:[%s4 + $0x290] sm:$0xff]
    %v297 = vld [vmem:[%s4 + $0x298] sm:$0xff]
    %v298 = vld [vmem:[%s4 + $0x2a0] sm:$0xff]
    %v299 = vld [vmem:[%s4 + $0x2a8] sm:$0xff]
    %v300 = vld [vmem:[%s4 + $0x2b0] sm:$0xff]
    %v301 = vld [vmem:[%s4 + $0x2b8] sm:$0xff]
    %v302 = vld [vmem:[%s4 + $0x2c0] sm:$0xff]
    %v303 = vld [vmem:[%s4 + $0x2c8] sm:$0xff]
    %v304 = vld [vmem:[%s4 + $0x2d0] sm:$0xff]
    %v305 = vld [vmem:[%s4 + $0x2d8] sm:$0xff]
    %v306 = vld [vmem:[%s4 + $0x2e0] sm:$0xff]
    %v307 = vld [vmem:[%s4 + $0x2e8] sm:$0xff]
    %v308 = vld [vmem:[%s4 + $0x2f0] sm:$0xff]
    %v309 = vld [vmem:[%s4 + $0x2f8] sm:$0xff]
    %v310 = vld [vmem:[%s4 + $0x300] sm:$0xff]
    %v311 = vld [vmem:[%s4 + $0x308] sm:$0xff]
    %v312 = vld [vmem:[%s4 + $0x310] sm:$0xff]
    %v313 = vld [vmem:[%s4 + $0x318] sm:$0xff]
    %v314 = vld [vmem:[%s4 + $0x320] sm:$0xff]
    %v315 = vld [vmem:[%s4 + $0x328] sm:$0xff]
    %v316 = vld [vmem:[%s4 + $0x330] sm:$0xff]
    %v317 = vld [vmem:[%s4 + $0x338] sm:$0xff]
    %v318 = vld [vmem:[%s4 + $0x340] sm:$0xff]
    %v319 = vld [vmem:[%s4 + $0x348] sm:$0xff]
    %v320 = vld [vmem:[%s4 + $0x350] sm:$0xff]
    %v321 = vld [vmem:[%s4 + $0x358] sm:$0xff]
    %v322 = vld [vmem:[%s4 + $0x360] sm:$0xff]
    %v323 = vld [vmem:[%s4 + $0x368] sm:$0xff]
    %v324 = vld [vmem:[%s4 + $0x370] sm:$0xff]
    %v325 = vld [vmem:[%s4 + $0x378] sm:$0xff]
    %v326 = vld [vmem:[%s4 + $0x380] sm:$0xff]
    %v327 = vld [vmem:[%s4 + $0x388] sm:$0xff]
    %v328 = vld [vmem:[%s4 + $0x390] sm:$0xff]
    %v329 = vld [vmem:[%s4 + $0x398] sm:$0xff]
    %v330 = vld [vmem:[%s4 + $0x3a0] sm:$0xff]
    %v331 = vld [vmem:[%s4 + $0x3a8] sm:$0xff]
    %v332 = vld [vmem:[%s4 + $0x3b0] sm:$0xff]
    %v333 = vld [vmem:[%s4 + $0x3b8] sm:$0xff]
    %v334 = vld [vmem:[%s4 + $0x3c0] sm:$0xff]
    %v335 = vld [vmem:[%s4 + $0x3c8] sm:$0xff]
    %v336 = vld [vmem:[%s4 + $0x3d0] sm:$0xff]
    %v337 = vld [vmem:[%s4 + $0x3d8] sm:$0xff]
    %v338 = vld [vmem:[%s4 + $0x3e0] sm:$0xff]
    %v339 = vld [vmem:[%s4 + $0x3e8] sm:$0xff]
    %v340 = vld [vmem:[%s4 + $0x3f0] sm:$0xff]
    %v341 = vld [vmem:[%s4 + $0x3f8] sm:$0xff]
    %v342 = vld [vmem:[%s5] sm:$0xf]
    %v344 = vlaneseq
    %v345 = vshrl.u32 %v344, 7
    %v346 = vsub.s32 0, %v345
    %v347 = vrot.slane %v342, %v346
    %v348 = vlaneseq
    %v349 = vshrl.u32 %v348, 7
    %v350 = vsub.s32 1, %v349
    %v351 = vrot.slane %v342, %v350
    %v352 = vlaneseq
    %v353 = vshrl.u32 %v352, 7
    %v354 = vsub.s32 2, %v353
    %v355 = vrot.slane %v342, %v354
    %v356 = vlaneseq
    %v357 = vshrl.u32 %v356, 7
    %v358 = vsub.s32 3, %v357
    %v359 = vrot.slane %v342, %v358
    %v492 = vunpack.c.l.b16 %v214
    %v493 = vunpack.c.h.b16 %v214
    %v494 = vunpack.c.l.b16 %v215
    %v495 = vunpack.c.h.b16 %v215
    %v496 = vunpack.c.l.b16 %v216
    %v497 = vunpack.c.h.b16 %v216
    %v498 = vunpack.c.l.b16 %v217
    %v499 = vunpack.c.h.b16 %v217
    %v500 = vunpack.c.l.b16 %v218
    %v501 = vunpack.c.h.b16 %v218
    %v502 = vunpack.c.l.b16 %v219
    %v503 = vunpack.c.h.b16 %v219
    %v504 = vunpack.c.l.b16 %v220
    %v505 = vunpack.c.h.b16 %v220
    %v506 = vunpack.c.l.b16 %v221
    %v507 = vunpack.c.h.b16 %v221
    %v508 = vunpack.c.l.b16 %v222
    %v509 = vunpack.c.h.b16 %v222
    %v510 = vunpack.c.l.b16 %v223
    %v511 = vunpack.c.h.b16 %v223
    %v512 = vunpack.c.l.b16 %v224
    %v513 = vunpack.c.h.b16 %v224
    %v514 = vunpack.c.l.b16 %v225
    %v515 = vunpack.c.h.b16 %v225
    %v516 = vunpack.c.l.b16 %v226
    %v517 = vunpack.c.h.b16 %v226
    %v518 = vunpack.c.l.b16 %v227
    %v519 = vunpack.c.h.b16 %v227
    %v520 = vunpack.c.l.b16 %v228
    %v521 = vunpack.c.h.b16 %v228
    %v522 = vunpack.c.l.b16 %v229
    %v523 = vunpack.c.h.b16 %v229
    %v524 = vunpack.c.l.b16 %v230
    %v525 = vunpack.c.h.b16 %v230
    %v526 = vunpack.c.l.b16 %v231
    %v527 = vunpack.c.h.b16 %v231
    %v528 = vunpack.c.l.b16 %v232
    %v529 = vunpack.c.h.b16 %v232
    %v530 = vunpack.c.l.b16 %v233
    %v531 = vunpack.c.h.b16 %v233
    %v532 = vunpack.c.l.b16 %v234
    %v533 = vunpack.c.h.b16 %v234
    %v534 = vunpack.c.l.b16 %v235
    %v535 = vunpack.c.h.b16 %v235
    %v536 = vunpack.c.l.b16 %v236
    %v537 = vunpack.c.h.b16 %v236
    %v538 = vunpack.c.l.b16 %v237
    %v539 = vunpack.c.h.b16 %v237
    %v540 = vunpack.c.l.b16 %v238
    %v541 = vunpack.c.h.b16 %v238
    %v542 = vunpack.c.l.b16 %v239
    %v543 = vunpack.c.h.b16 %v239
    %v544 = vunpack.c.l.b16 %v240
    %v545 = vunpack.c.h.b16 %v240
    %v546 = vunpack.c.l.b16 %v241
    %v547 = vunpack.c.h.b16 %v241
    %v548 = vunpack.c.l.b16 %v242
    %v549 = vunpack.c.h.b16 %v242
    %v550 = vunpack.c.l.b16 %v243
    %v551 = vunpack.c.h.b16 %v243
    %v552 = vunpack.c.l.b16 %v244
    %v553 = vunpack.c.h.b16 %v244
    %v554 = vunpack.c.l.b16 %v245
    %v555 = vunpack.c.h.b16 %v245
    %v556 = vunpack.c.l.b16 %v246
    %v557 = vunpack.c.h.b16 %v246
    %v558 = vunpack.c.l.b16 %v247
    %v559 = vunpack.c.h.b16 %v247
    %v560 = vunpack.c.l.b16 %v248
    %v561 = vunpack.c.h.b16 %v248
    %v562 = vunpack.c.l.b16 %v249
    %v563 = vunpack.c.h.b16 %v249
    %v564 = vunpack.c.l.b16 %v250
    %v565 = vunpack.c.h.b16 %v250
    %v566 = vunpack.c.l.b16 %v251
    %v567 = vunpack.c.h.b16 %v251
    %v568 = vunpack.c.l.b16 %v252
    %v569 = vunpack.c.h.b16 %v252
    %v570 = vunpack.c.l.b16 %v253
    %v571 = vunpack.c.h.b16 %v253
    %v572 = vunpack.c.l.b16 %v254
    %v573 = vunpack.c.h.b16 %v254
    %v574 = vunpack.c.l.b16 %v255
    %v575 = vunpack.c.h.b16 %v255
    %v576 = vunpack.c.l.b16 %v256
    %v577 = vunpack.c.h.b16 %v256
    %v578 = vunpack.c.l.b16 %v257
    %v579 = vunpack.c.h.b16 %v257
    %v580 = vunpack.c.l.b16 %v258
    %v581 = vunpack.c.h.b16 %v258
    %v582 = vunpack.c.l.b16 %v259
    %v583 = vunpack.c.h.b16 %v259
    %v584 = vunpack.c.l.b16 %v260
    %v585 = vunpack.c.h.b16 %v260
    %v586 = vunpack.c.l.b16 %v261
    %v587 = vunpack.c.h.b16 %v261
    %v588 = vunpack.c.l.b16 %v262
    %v589 = vunpack.c.h.b16 %v262
    %v590 = vunpack.c.l.b16 %v263
    %v591 = vunpack.c.h.b16 %v263
    %v592 = vunpack.c.l.b16 %v264
    %v593 = vunpack.c.h.b16 %v264
    %v594 = vunpack.c.l.b16 %v265
    %v595 = vunpack.c.h.b16 %v265
    %v596 = vunpack.c.l.b16 %v266
    %v597 = vunpack.c.h.b16 %v266
    %v598 = vunpack.c.l.b16 %v267
    %v599 = vunpack.c.h.b16 %v267
    %v600 = vunpack.c.l.b16 %v268
    %v601 = vunpack.c.h.b16 %v268
    %v602 = vunpack.c.l.b16 %v269
    %v603 = vunpack.c.h.b16 %v269
    %v604 = vunpack.c.l.b16 %v270
    %v605 = vunpack.c.h.b16 %v270
    %v606 = vunpack.c.l.b16 %v271
    %v607 = vunpack.c.h.b16 %v271
    %v608 = vunpack.c.l.b16 %v272
    %v609 = vunpack.c.h.b16 %v272
    %v610 = vunpack.c.l.b16 %v273
    %v611 = vunpack.c.h.b16 %v273
    %v612 = vunpack.c.l.b16 %v274
    %v613 = vunpack.c.h.b16 %v274
    %v614 = vunpack.c.l.b16 %v275
    %v615 = vunpack.c.h.b16 %v275
    %v616 = vunpack.c.l.b16 %v276
    %v617 = vunpack.c.h.b16 %v276
    %v618 = vunpack.c.l.b16 %v277
    %v619 = vunpack.c.h.b16 %v277
    %v620 = vunpack.c.l.b16 %v278
    %v621 = vunpack.c.h.b16 %v278
    %v622 = vunpack.c.l.b16 %v279
    %v623 = vunpack.c.h.b16 %v279
    %v624 = vunpack.c.l.b16 %v280
    %v625 = vunpack.c.h.b16 %v280
    %v626 = vunpack.c.l.b16 %v281
    %v627 = vunpack.c.h.b16 %v281
    %v628 = vunpack.c.l.b16 %v282
    %v629 = vunpack.c.h.b16 %v282
    %v630 = vunpack.c.l.b16 %v283
    %v631 = vunpack.c.h.b16 %v283
    %v632 = vunpack.c.l.b16 %v284
    %v633 = vunpack.c.h.b16 %v284
    %v634 = vunpack.c.l.b16 %v285
    %v635 = vunpack.c.h.b16 %v285
    %v636 = vunpack.c.l.b16 %v286
    %v637 = vunpack.c.h.b16 %v286
    %v638 = vunpack.c.l.b16 %v287
    %v639 = vunpack.c.h.b16 %v287
    %v640 = vunpack.c.l.b16 %v288
    %v641 = vunpack.c.h.b16 %v288
    %v642 = vunpack.c.l.b16 %v289
    %v643 = vunpack.c.h.b16 %v289
    %v644 = vunpack.c.l.b16 %v290
    %v645 = vunpack.c.h.b16 %v290
    %v646 = vunpack.c.l.b16 %v291
    %v647 = vunpack.c.h.b16 %v291
    %v648 = vunpack.c.l.b16 %v292
    %v649 = vunpack.c.h.b16 %v292
    %v650 = vunpack.c.l.b16 %v293
    %v651 = vunpack.c.h.b16 %v293
    %v652 = vunpack.c.l.b16 %v294
    %v653 = vunpack.c.h.b16 %v294
    %v654 = vunpack.c.l.b16 %v295
    %v655 = vunpack.c.h.b16 %v295
    %v656 = vunpack.c.l.b16 %v296
    %v657 = vunpack.c.h.b16 %v296
    %v658 = vunpack.c.l.b16 %v297
    %v659 = vunpack.c.h.b16 %v297
    %v660 = vunpack.c.l.b16 %v298
    %v661 = vunpack.c.h.b16 %v298
    %v662 = vunpack.c.l.b16 %v299
    %v663 = vunpack.c.h.b16 %v299
    %v664 = vunpack.c.l.b16 %v300
    %v665 = vunpack.c.h.b16 %v300
    %v666 = vunpack.c.l.b16 %v301
    %v667 = vunpack.c.h.b16 %v301
    %v668 = vunpack.c.l.b16 %v302
    %v669 = vunpack.c.h.b16 %v302
    %v670 = vunpack.c.l.b16 %v303
    %v671 = vunpack.c.h.b16 %v303
    %v672 = vunpack.c.l.b16 %v304
    %v673 = vunpack.c.h.b16 %v304
    %v674 = vunpack.c.l.b16 %v305
    %v675 = vunpack.c.h.b16 %v305
    %v676 = vunpack.c.l.b16 %v306
    %v677 = vunpack.c.h.b16 %v306
    %v678 = vunpack.c.l.b16 %v307
    %v679 = vunpack.c.h.b16 %v307
    %v680 = vunpack.c.l.b16 %v308
    %v681 = vunpack.c.h.b16 %v308
    %v682 = vunpack.c.l.b16 %v309
    %v683 = vunpack.c.h.b16 %v309
    %v684 = vunpack.c.l.b16 %v310
    %v685 = vunpack.c.h.b16 %v310
    %v686 = vunpack.c.l.b16 %v311
    %v687 = vunpack.c.h.b16 %v311
    %v688 = vunpack.c.l.b16 %v312
    %v689 = vunpack.c.h.b16 %v312
    %v690 = vunpack.c.l.b16 %v313
    %v691 = vunpack.c.h.b16 %v313
    %v692 = vunpack.c.l.b16 %v314
    %v693 = vunpack.c.h.b16 %v314
    %v694 = vunpack.c.l.b16 %v315
    %v695 = vunpack.c.h.b16 %v315
    %v696 = vunpack.c.l.b16 %v316
    %v697 = vunpack.c.h.b16 %v316
    %v698 = vunpack.c.l.b16 %v317
    %v699 = vunpack.c.h.b16 %v317
    %v700 = vunpack.c.l.b16 %v318
    %v701 = vunpack.c.h.b16 %v318
    %v702 = vunpack.c.l.b16 %v319
    %v703 = vunpack.c.h.b16 %v319
    %v704 = vunpack.c.l.b16 %v320
    %v705 = vunpack.c.h.b16 %v320
    %v706 = vunpack.c.l.b16 %v321
    %v707 = vunpack.c.h.b16 %v321
    %v708 = vunpack.c.l.b16 %v322
    %v709 = vunpack.c.h.b16 %v322
    %v710 = vunpack.c.l.b16 %v323
    %v711 = vunpack.c.h.b16 %v323
    %v712 = vunpack.c.l.b16 %v324
    %v713 = vunpack.c.h.b16 %v324
    %v714 = vunpack.c.l.b16 %v325
    %v715 = vunpack.c.h.b16 %v325
    %v716 = vunpack.c.l.b16 %v326
    %v717 = vunpack.c.h.b16 %v326
    %v718 = vunpack.c.l.b16 %v327
    %v719 = vunpack.c.h.b16 %v327
    %v720 = vunpack.c.l.b16 %v328
    %v721 = vunpack.c.h.b16 %v328
    %v722 = vunpack.c.l.b16 %v329
    %v723 = vunpack.c.h.b16 %v329
    %v724 = vunpack.c.l.b16 %v330
    %v725 = vunpack.c.h.b16 %v330
    %v726 = vunpack.c.l.b16 %v331
    %v727 = vunpack.c.h.b16 %v331
    %v728 = vunpack.c.l.b16 %v332
    %v729 = vunpack.c.h.b16 %v332
    %v730 = vunpack.c.l.b16 %v333
    %v731 = vunpack.c.h.b16 %v333
    %v732 = vunpack.c.l.b16 %v334
    %v733 = vunpack.c.h.b16 %v334
    %v734 = vunpack.c.l.b16 %v335
    %v735 = vunpack.c.h.b16 %v335
    %v736 = vunpack.c.l.b16 %v336
    %v737 = vunpack.c.h.b16 %v336
    %v738 = vunpack.c.l.b16 %v337
    %v739 = vunpack.c.h.b16 %v337
    %v740 = vunpack.c.l.b16 %v338
    %v741 = vunpack.c.h.b16 %v338
    %v742 = vunpack.c.l.b16 %v339
    %v743 = vunpack.c.h.b16 %v339
    %v744 = vunpack.c.l.b16 %v340
    %v745 = vunpack.c.h.b16 %v340
    %v746 = vunpack.c.l.b16 %v341
    %v747 = vunpack.c.h.b16 %v341
    %v748 = vpack.c.b16 %v496, %v492
    %v749 = vpack.c.b16 %v497, %v493
    %v750 = vpack.c.b16 %v498, %v494
    %v751 = vpack.c.b16 %v499, %v495
    %v752 = vpack.c.b16 %v504, %v500
    %v753 = vpack.c.b16 %v505, %v501
    %v754 = vpack.c.b16 %v506, %v502
    %v755 = vpack.c.b16 %v507, %v503
    %v756 = vpack.c.b16 %v512, %v508
    %v757 = vpack.c.b16 %v513, %v509
    %v758 = vpack.c.b16 %v514, %v510
    %v759 = vpack.c.b16 %v515, %v511
    %v760 = vpack.c.b16 %v520, %v516
    %v761 = vpack.c.b16 %v521, %v517
    %v762 = vpack.c.b16 %v522, %v518
    %v763 = vpack.c.b16 %v523, %v519
    %v764 = vpack.c.b16 %v528, %v524
    %v765 = vpack.c.b16 %v529, %v525
    %v766 = vpack.c.b16 %v530, %v526
    %v767 = vpack.c.b16 %v531, %v527
    %v768 = vpack.c.b16 %v536, %v532
    %v769 = vpack.c.b16 %v537, %v533
    %v770 = vpack.c.b16 %v538, %v534
    %v771 = vpack.c.b16 %v539, %v535
    %v772 = vpack.c.b16 %v544, %v540
    %v773 = vpack.c.b16 %v545, %v541
    %v774 = vpack.c.b16 %v546, %v542
    %v775 = vpack.c.b16 %v547, %v543
    %v776 = vpack.c.b16 %v552, %v548
    %v777 = vpack.c.b16 %v553, %v549
    %v778 = vpack.c.b16 %v554, %v550
    %v779 = vpack.c.b16 %v555, %v551
    %v780 = vpack.c.b16 %v560, %v556
    %v781 = vpack.c.b16 %v561, %v557
    %v782 = vpack.c.b16 %v562, %v558
    %v783 = vpack.c.b16 %v563, %v559
    %v784 = vpack.c.b16 %v568, %v564
    %v785 = vpack.c.b16 %v569, %v565
    %v786 = vpack.c.b16 %v570, %v566
    %v787 = vpack.c.b16 %v571, %v567
    %v788 = vpack.c.b16 %v576, %v572
    %v789 = vpack.c.b16 %v577, %v573
    %v790 = vpack.c.b16 %v578, %v574
    %v791 = vpack.c.b16 %v579, %v575
    %v792 = vpack.c.b16 %v584, %v580
    %v793 = vpack.c.b16 %v585, %v581
    %v794 = vpack.c.b16 %v586, %v582
    %v795 = vpack.c.b16 %v587, %v583
    %v796 = vpack.c.b16 %v592, %v588
    %v797 = vpack.c.b16 %v593, %v589
    %v798 = vpack.c.b16 %v594, %v590
    %v799 = vpack.c.b16 %v595, %v591
    %v800 = vpack.c.b16 %v600, %v596
    %v801 = vpack.c.b16 %v601, %v597
    %v802 = vpack.c.b16 %v602, %v598
    %v803 = vpack.c.b16 %v603, %v599
    %v804 = vpack.c.b16 %v608, %v604
    %v805 = vpack.c.b16 %v609, %v605
    %v806 = vpack.c.b16 %v610, %v606
    %v807 = vpack.c.b16 %v611, %v607
    %v808 = vpack.c.b16 %v616, %v612
    %v809 = vpack.c.b16 %v617, %v613
    %v810 = vpack.c.b16 %v618, %v614
    %v811 = vpack.c.b16 %v619, %v615
    %v812 = vpack.c.b16 %v624, %v620
    %v813 = vpack.c.b16 %v625, %v621
    %v814 = vpack.c.b16 %v626, %v622
    %v815 = vpack.c.b16 %v627, %v623
    %v816 = vpack.c.b16 %v632, %v628
    %v817 = vpack.c.b16 %v633, %v629
    %v818 = vpack.c.b16 %v634, %v630
    %v819 = vpack.c.b16 %v635, %v631
    %v820 = vpack.c.b16 %v640, %v636
    %v821 = vpack.c.b16 %v641, %v637
    %v822 = vpack.c.b16 %v642, %v638
    %v823 = vpack.c.b16 %v643, %v639
    %v824 = vpack.c.b16 %v648, %v644
    %v825 = vpack.c.b16 %v649, %v645
    %v826 = vpack.c.b16 %v650, %v646
    %v827 = vpack.c.b16 %v651, %v647
    %v828 = vpack.c.b16 %v656, %v652
    %v829 = vpack.c.b16 %v657, %v653
    %v830 = vpack.c.b16 %v658, %v654
    %v831 = vpack.c.b16 %v659, %v655
    %v832 = vpack.c.b16 %v664, %v660
    %v833 = vpack.c.b16 %v665, %v661
    %v834 = vpack.c.b16 %v666, %v662
    %v835 = vpack.c.b16 %v667, %v663
    %v836 = vpack.c.b16 %v672, %v668
    %v837 = vpack.c.b16 %v673, %v669
    %v838 = vpack.c.b16 %v674, %v670
    %v839 = vpack.c.b16 %v675, %v671
    %v840 = vpack.c.b16 %v680, %v676
    %v841 = vpack.c.b16 %v681, %v677
    %v842 = vpack.c.b16 %v682, %v678
    %v843 = vpack.c.b16 %v683, %v679
    %v844 = vpack.c.b16 %v688, %v684
    %v845 = vpack.c.b16 %v689, %v685
    %v846 = vpack.c.b16 %v690, %v686
    %v847 = vpack.c.b16 %v691, %v687
    %v848 = vpack.c.b16 %v696, %v692
    %v849 = vpack.c.b16 %v697, %v693
    %v850 = vpack.c.b16 %v698, %v694
    %v851 = vpack.c.b16 %v699, %v695
    %v852 = vpack.c.b16 %v704, %v700
    %v853 = vpack.c.b16 %v705, %v701
    %v854 = vpack.c.b16 %v706, %v702
    %v855 = vpack.c.b16 %v707, %v703
    %v856 = vpack.c.b16 %v712, %v708
    %v857 = vpack.c.b16 %v713, %v709
    %v858 = vpack.c.b16 %v714, %v710
    %v859 = vpack.c.b16 %v715, %v711
    %v860 = vpack.c.b16 %v720, %v716
    %v861 = vpack.c.b16 %v721, %v717
    %v862 = vpack.c.b16 %v722, %v718
    %v863 = vpack.c.b16 %v723, %v719
    %v864 = vpack.c.b16 %v728, %v724
    %v865 = vpack.c.b16 %v729, %v725
    %v866 = vpack.c.b16 %v730, %v726
    %v867 = vpack.c.b16 %v731, %v727
    %v868 = vpack.c.b16 %v736, %v732
    %v869 = vpack.c.b16 %v737, %v733
    %v870 = vpack.c.b16 %v738, %v734
    %v871 = vpack.c.b16 %v739, %v735
    %v872 = vpack.c.b16 %v744, %v740
    %v873 = vpack.c.b16 %v745, %v741
    %v874 = vpack.c.b16 %v746, %v742
    %v875 = vpack.c.b16 %v747, %v743
    %1004 = vmatprep.subr.bf16.mxu0 %v749
    %1005 = vmatpush1.bf16.msra.mxu0 %v748
    %1006 = vmatprep.subr.bf16.mxu0 %v753
    %1007 = vmatpush1.bf16.msra.mxu0 %v752
    %1008 = vmatprep.subr.bf16.mxu0 %v757
    %1009 = vmatpush1.bf16.msra.mxu0 %v756
    %1010 = vmatprep.subr.bf16.mxu0 %v761
    %1011 = vmatpush1.bf16.msra.mxu0 %v760
    %1012 = vmatprep.subr.bf16.mxu0 %v765
    %1013 = vmatpush1.bf16.msra.mxu0 %v764
    %1014 = vmatprep.subr.bf16.mxu0 %v769
    %1015 = vmatpush1.bf16.msra.mxu0 %v768
    %1016 = vmatprep.subr.bf16.mxu0 %v773
    %1017 = vmatpush1.bf16.msra.mxu0 %v772
    %1018 = vmatprep.subr.bf16.mxu0 %v777
    %1019 = vmatpush1.bf16.msra.mxu0 %v776
    %1020 = vmatprep.subr.bf16.mxu0 %v781
    %1021 = vmatpush1.bf16.msra.mxu0 %v780
    %1022 = vmatprep.subr.bf16.mxu0 %v785
    %1023 = vmatpush1.bf16.msra.mxu0 %v784
    %1024 = vmatprep.subr.bf16.mxu0 %v789
    %1025 = vmatpush1.bf16.msra.mxu0 %v788
    %1026 = vmatprep.subr.bf16.mxu0 %v793
    %1027 = vmatpush1.bf16.msra.mxu0 %v792
    %1028 = vmatprep.subr.bf16.mxu0 %v797
    %1029 = vmatpush1.bf16.msra.mxu0 %v796
    %1030 = vmatprep.subr.bf16.mxu0 %v801
    %1031 = vmatpush1.bf16.msra.mxu0 %v800
    %1032 = vmatprep.subr.bf16.mxu0 %v805
    %1033 = vmatpush1.bf16.msra.mxu0 %v804
    %1034 = vmatprep.subr.bf16.mxu0 %v809
    %1035 = vmatpush1.bf16.msra.mxu0 %v808
    %1036 = vmatprep.mubr.bf16.mxu0 %v211
    %1037 = vmatmul.mubr.bf16.gmra.mrb[0].mxu0 %v210
    %v1038 = vpop.f32.mrb[0].mxu0
    %v1039 = vadd.f32 %v347, %v1038
    %v1040 = vpop.f32.mrb[0].mxu0
    %v1041 = vadd.f32 %v351, %v1040
    %v1042 = vpop.f32.mrb[0].mxu0
    %v1043 = vpop.f32.mrb[0].mxu0
    %1044 = vdwg.mxu0
    %1045 = vmatprep.subr.bf16.mxu0 %v813
    %1046 = vmatpush1.bf16.msra.mxu0 %v812
    %1047 = vmatprep.subr.bf16.mxu0 %v817
    %1048 = vmatpush1.bf16.msra.mxu0 %v816
    %1049 = vmatprep.subr.bf16.mxu0 %v821
    %1050 = vmatpush1.bf16.msra.mxu0 %v820
    %1051 = vmatprep.subr.bf16.mxu0 %v825
    %1052 = vmatpush1.bf16.msra.mxu0 %v824
    %1053 = vmatprep.subr.bf16.mxu0 %v829
    %1054 = vmatpush1.bf16.msra.mxu0 %v828
    %1055 = vmatprep.subr.bf16.mxu0 %v833
    %1056 = vmatpush1.bf16.msra.mxu0 %v832
    %1057 = vmatprep.subr.bf16.mxu0 %v837
    %1058 = vmatpush1.bf16.msra.mxu0 %v836
    %1059 = vmatprep.subr.bf16.mxu0 %v841
    %1060 = vmatpush1.bf16.msra.mxu0 %v840
    %1061 = vmatprep.subr.bf16.mxu0 %v845
    %1062 = vmatpush1.bf16.msra.mxu0 %v844
    %1063 = vmatprep.subr.bf16.mxu0 %v849
    %1064 = vmatpush1.bf16.msra.mxu0 %v848
    %1065 = vmatprep.subr.bf16.mxu0 %v853
    %1066 = vmatpush1.bf16.msra.mxu0 %v852
    %1067 = vmatprep.subr.bf16.mxu0 %v857
    %1068 = vmatpush1.bf16.msra.mxu0 %v856
    %1069 = vmatprep.subr.bf16.mxu0 %v861
    %1070 = vmatpush1.bf16.msra.mxu0 %v860
    %1071 = vmatprep.subr.bf16.mxu0 %v865
    %1072 = vmatpush1.bf16.msra.mxu0 %v864
    %1073 = vmatprep.subr.bf16.mxu0 %v869
    %1074 = vmatpush1.bf16.msra.mxu0 %v868
    %1075 = vmatprep.subr.bf16.mxu0 %v873
    %1076 = vmatpush1.bf16.msra.mxu0 %v872
    %1077 = vmatprep.mubr.bf16.mxu0 %v213
    %1078 = vmatmul.mubr.bf16.gmra.mrb[0].mxu0 %v212
    %v1079 = vpop.f32.mrb[0].mxu0
    %v1080 = vadd.f32 %v1039, %v1079
    %v1081 = vpop.f32.mrb[0].mxu0
    %v1082 = vadd.f32 %v1041, %v1081
    %v1083 = vpop.f32.mrb[0].mxu0
    %v1084 = vpop.f32.mrb[0].mxu0
    %1085 = vdwg.mxu0
    %1086 = vmatprep.subr.bf16.mxu0 %v751
    %1087 = vmatpush1.bf16.msra.mxu0 %v750
    %1088 = vmatprep.subr.bf16.mxu0 %v755
    %1089 = vmatpush1.bf16.msra.mxu0 %v754
    %1090 = vmatprep.subr.bf16.mxu0 %v759
    %1091 = vmatpush1.bf16.msra.mxu0 %v758
    %1092 = vmatprep.subr.bf16.mxu0 %v763
    %1093 = vmatpush1.bf16.msra.mxu0 %v762
    %1094 = vmatprep.subr.bf16.mxu0 %v767
    %1095 = vmatpush1.bf16.msra.mxu0 %v766
    %1096 = vmatprep.subr.bf16.mxu0 %v771
    %1097 = vmatpush1.bf16.msra.mxu0 %v770
    %1098 = vmatprep.subr.bf16.mxu0 %v775
    %1099 = vmatpush1.bf16.msra.mxu0 %v774
    %1100 = vmatprep.subr.bf16.mxu0 %v779
    %1101 = vmatpush1.bf16.msra.mxu0 %v778
    %1102 = vmatprep.subr.bf16.mxu0 %v783
    %1103 = vmatpush1.bf16.msra.mxu0 %v782
    %1104 = vmatprep.subr.bf16.mxu0 %v787
    %1105 = vmatpush1.bf16.msra.mxu0 %v786
    %1106 = vmatprep.subr.bf16.mxu0 %v791
    %1107 = vmatpush1.bf16.msra.mxu0 %v790
    %1108 = vmatprep.subr.bf16.mxu0 %v795
    %1109 = vmatpush1.bf16.msra.mxu0 %v794
    %1110 = vmatprep.subr.bf16.mxu0 %v799
    %1111 = vmatpush1.bf16.msra.mxu0 %v798
    %1112 = vmatprep.subr.bf16.mxu0 %v803
    %1113 = vmatpush1.bf16.msra.mxu0 %v802
    %1114 = vmatprep.subr.bf16.mxu0 %v807
    %1115 = vmatpush1.bf16.msra.mxu0 %v806
    %1116 = vmatprep.subr.bf16.mxu0 %v811
    %1117 = vmatpush1.bf16.msra.mxu0 %v810
    %1118 = vmatprep.mubr.bf16.mxu0 %v211
    %1119 = vmatmul.mubr.bf16.gmra.mrb[0].mxu0 %v210
    %v1120 = vpop.f32.mrb[0].mxu0
    %v1121 = vadd.f32 %v355, %v1120
    %v1122 = vpop.f32.mrb[0].mxu0
    %v1123 = vadd.f32 %v359, %v1122
    %v1124 = vpop.f32.mrb[0].mxu0
    %v1125 = vpop.f32.mrb[0].mxu0
    %1126 = vdwg.mxu0
    %1127 = vmatprep.subr.bf16.mxu0 %v815
    %1128 = vmatpush1.bf16.msra.mxu0 %v814
    %1129 = vmatprep.subr.bf16.mxu0 %v819
    %1130 = vmatpush1.bf16.msra.mxu0 %v818
    %1131 = vmatprep.subr.bf16.mxu0 %v823
    %1132 = vmatpush1.bf16.msra.mxu0 %v822
    %1133 = vmatprep.subr.bf16.mxu0 %v827
    %1134 = vmatpush1.bf16.msra.mxu0 %v826
    %1135 = vmatprep.subr.bf16.mxu0 %v831
    %1136 = vmatpush1.bf16.msra.mxu0 %v830
    %1137 = vmatprep.subr.bf16.mxu0 %v835
    %1138 = vmatpush1.bf16.msra.mxu0 %v834
    %1139 = vmatprep.subr.bf16.mxu0 %v839
    %1140 = vmatpush1.bf16.msra.mxu0 %v838
    %1141 = vmatprep.subr.bf16.mxu0 %v843
    %1142 = vmatpush1.bf16.msra.mxu0 %v842
    %1143 = vmatprep.subr.bf16.mxu0 %v847
    %1144 = vmatpush1.bf16.msra.mxu0 %v846
    %1145 = vmatprep.subr.bf16.mxu0 %v851
    %1146 = vmatpush1.bf16.msra.mxu0 %v850
    %1147 = vmatprep.subr.bf16.mxu0 %v855
    %1148 = vmatpush1.bf16.msra.mxu0 %v854
    %1149 = vmatprep.subr.bf16.mxu0 %v859
    %1150 = vmatpush1.bf16.msra.mxu0 %v858
    %1151 = vmatprep.subr.bf16.mxu0 %v863
    %1152 = vmatpush1.bf16.msra.mxu0 %v862
    %1153 = vmatprep.subr.bf16.mxu0 %v867
    %1154 = vmatpush1.bf16.msra.mxu0 %v866
    %1155 = vmatprep.subr.bf16.mxu0 %v871
    %1156 = vmatpush1.bf16.msra.mxu0 %v870
    %1157 = vmatprep.subr.bf16.mxu0 %v875
    %1158 = vmatpush1.bf16.msra.mxu0 %v874
    %1159 = vmatprep.mubr.bf16.mxu0 %v213
    %1160 = vmatmul.mubr.bf16.gmra.mrb[0].mxu0 %v212
    %v1161 = vpop.f32.mrb[0].mxu0
    %v1162 = vadd.f32 %v1121, %v1161
    %v1163 = vpop.f32.mrb[0].mxu0
    %v1164 = vadd.f32 %v1123, %v1163
    %v1165 = vpop.f32.mrb[0].mxu0
    %v1166 = vpop.f32.mrb[0].mxu0
    %1167 = vdwg.mxu0
    %vm1168 = vcmp.ge.f32.partialorder %v1080, 0.0
    %vm1169 = vcmp.ge.f32.partialorder %v1082, 0.0
    %vm1170 = vcmp.ge.f32.partialorder %v1162, 0.0
    %vm1171 = vcmp.ge.f32.partialorder %v1164, 0.0
    %v1172 = vstv %s209
    %v1173 = vmul.f32 %v1172, %v1080
    %v1174 = vmul.f32 %v1172, %v1082
    %v1175 = vmul.f32 %v1172, %v1162
    %v1176 = vmul.f32 %v1172, %v1164
    %v1177 = vsel %vm1168, %v1080, %v1173
    %v1178 = vsel %vm1169, %v1082, %v1174
    %v1179 = vsel %vm1170, %v1162, %v1175
    %v1180 = vsel %vm1171, %v1164, %v1176
    %s1181 = sld [smem:[#allocation2 + $0x2]]
    %v1182 = vpack.c.bf16 %v1177, %v1177
    %v1183 = vpack.c.bf16 %v1178, %v1178
    %v1184 = vpack.c.bf16 %v1179, %v1179
    %v1185 = vpack.c.bf16 %v1180, %v1180
    %v1186 = vld [vmem:[%s6] sm:$0xff]
    %v1187 = vld [vmem:[%s6 + $0x8] sm:$0xff]
    %v1188 = vld [vmem:[%s6 + $0x10] sm:$0xff]
    %v1189 = vld [vmem:[%s6 + $0x18] sm:$0xff]
    %v1190 = vld [vmem:[%s6 + $0x20] sm:$0xff]
    %v1191 = vld [vmem:[%s6 + $0x28] sm:$0xff]
    %v1192 = vld [vmem:[%s6 + $0x30] sm:$0xff]
    %v1193 = vld [vmem:[%s6 + $0x38] sm:$0xff]
    %v1194 = vld [vmem:[%s6 + $0x40] sm:$0xff]
    %v1195 = vld [vmem:[%s6 + $0x48] sm:$0xff]
    %v1196 = vld [vmem:[%s6 + $0x50] sm:$0xff]
    %v1197 = vld [vmem:[%s6 + $0x58] sm:$0xff]
    %v1198 = vld [vmem:[%s6 + $0x60] sm:$0xff]
    %v1199 = vld [vmem:[%s6 + $0x68] sm:$0xff]
    %v1200 = vld [vmem:[%s6 + $0x70] sm:$0xff]
    %v1201 = vld [vmem:[%s6 + $0x78] sm:$0xff]
    %v1202 = vld [vmem:[%s6 + $0x80] sm:$0xff]
    %v1203 = vld [vmem:[%s6 + $0x88] sm:$0xff]
    %v1204 = vld [vmem:[%s6 + $0x90] sm:$0xff]
    %v1205 = vld [vmem:[%s6 + $0x98] sm:$0xff]
    %v1206 = vld [vmem:[%s6 + $0xa0] sm:$0xff]
    %v1207 = vld [vmem:[%s6 + $0xa8] sm:$0xff]
    %v1208 = vld [vmem:[%s6 + $0xb0] sm:$0xff]
    %v1209 = vld [vmem:[%s6 + $0xb8] sm:$0xff]
    %v1210 = vld [vmem:[%s6 + $0xc0] sm:$0xff]
    %v1211 = vld [vmem:[%s6 + $0xc8] sm:$0xff]
    %v1212 = vld [vmem:[%s6 + $0xd0] sm:$0xff]
    %v1213 = vld [vmem:[%s6 + $0xd8] sm:$0xff]
    %v1214 = vld [vmem:[%s6 + $0xe0] sm:$0xff]
    %v1215 = vld [vmem:[%s6 + $0xe8] sm:$0xff]
    %v1216 = vld [vmem:[%s6 + $0xf0] sm:$0xff]
    %v1217 = vld [vmem:[%s6 + $0xf8] sm:$0xff]
    %v1218 = vld [vmem:[%s6 + $0x100] sm:$0xff]
    %v1219 = vld [vmem:[%s6 + $0x108] sm:$0xff]
    %v1220 = vld [vmem:[%s6 + $0x110] sm:$0xff]
    %v1221 = vld [vmem:[%s6 + $0x118] sm:$0xff]
    %v1222 = vld [vmem:[%s6 + $0x120] sm:$0xff]
    %v1223 = vld [vmem:[%s6 + $0x128] sm:$0xff]
    %v1224 = vld [vmem:[%s6 + $0x130] sm:$0xff]
    %v1225 = vld [vmem:[%s6 + $0x138] sm:$0xff]
    %v1226 = vld [vmem:[%s6 + $0x140] sm:$0xff]
    %v1227 = vld [vmem:[%s6 + $0x148] sm:$0xff]
    %v1228 = vld [vmem:[%s6 + $0x150] sm:$0xff]
    %v1229 = vld [vmem:[%s6 + $0x158] sm:$0xff]
    %v1230 = vld [vmem:[%s6 + $0x160] sm:$0xff]
    %v1231 = vld [vmem:[%s6 + $0x168] sm:$0xff]
    %v1232 = vld [vmem:[%s6 + $0x170] sm:$0xff]
    %v1233 = vld [vmem:[%s6 + $0x178] sm:$0xff]
    %v1234 = vld [vmem:[%s6 + $0x180] sm:$0xff]
    %v1235 = vld [vmem:[%s6 + $0x188] sm:$0xff]
    %v1236 = vld [vmem:[%s6 + $0x190] sm:$0xff]
    %v1237 = vld [vmem:[%s6 + $0x198] sm:$0xff]
    %v1238 = vld [vmem:[%s6 + $0x1a0] sm:$0xff]
    %v1239 = vld [vmem:[%s6 + $0x1a8] sm:$0xff]
    %v1240 = vld [vmem:[%s6 + $0x1b0] sm:$0xff]
    %v1241 = vld [vmem:[%s6 + $0x1b8] sm:$0xff]
    %v1242 = vld [vmem:[%s6 + $0x1c0] sm:$0xff]
    %v1243 = vld [vmem:[%s6 + $0x1c8] sm:$0xff]
    %v1244 = vld [vmem:[%s6 + $0x1d0] sm:$0xff]
    %v1245 = vld [vmem:[%s6 + $0x1d8] sm:$0xff]
    %v1246 = vld [vmem:[%s6 + $0x1e0] sm:$0xff]
    %v1247 = vld [vmem:[%s6 + $0x1e8] sm:$0xff]
    %v1248 = vld [vmem:[%s6 + $0x1f0] sm:$0xff]
    %v1249 = vld [vmem:[%s6 + $0x1f8] sm:$0xff]
    %v1250 = vld [vmem:[%s6 + $0x200] sm:$0xff]
    %v1251 = vld [vmem:[%s6 + $0x208] sm:$0xff]
    %v1252 = vld [vmem:[%s6 + $0x210] sm:$0xff]
    %v1253 = vld [vmem:[%s6 + $0x218] sm:$0xff]
    %v1254 = vld [vmem:[%s6 + $0x220] sm:$0xff]
    %v1255 = vld [vmem:[%s6 + $0x228] sm:$0xff]
    %v1256 = vld [vmem:[%s6 + $0x230] sm:$0xff]
    %v1257 = vld [vmem:[%s6 + $0x238] sm:$0xff]
    %v1258 = vld [vmem:[%s6 + $0x240] sm:$0xff]
    %v1259 = vld [vmem:[%s6 + $0x248] sm:$0xff]
    %v1260 = vld [vmem:[%s6 + $0x250] sm:$0xff]
    %v1261 = vld [vmem:[%s6 + $0x258] sm:$0xff]
    %v1262 = vld [vmem:[%s6 + $0x260] sm:$0xff]
    %v1263 = vld [vmem:[%s6 + $0x268] sm:$0xff]
    %v1264 = vld [vmem:[%s6 + $0x270] sm:$0xff]
    %v1265 = vld [vmem:[%s6 + $0x278] sm:$0xff]
    %v1266 = vld [vmem:[%s6 + $0x280] sm:$0xff]
    %v1267 = vld [vmem:[%s6 + $0x288] sm:$0xff]
    %v1268 = vld [vmem:[%s6 + $0x290] sm:$0xff]
    %v1269 = vld [vmem:[%s6 + $0x298] sm:$0xff]
    %v1270 = vld [vmem:[%s6 + $0x2a0] sm:$0xff]
    %v1271 = vld [vmem:[%s6 + $0x2a8] sm:$0xff]
    %v1272 = vld [vmem:[%s6 + $0x2b0] sm:$0xff]
    %v1273 = vld [vmem:[%s6 + $0x2b8] sm:$0xff]
    %v1274 = vld [vmem:[%s6 + $0x2c0] sm:$0xff]
    %v1275 = vld [vmem:[%s6 + $0x2c8] sm:$0xff]
    %v1276 = vld [vmem:[%s6 + $0x2d0] sm:$0xff]
    %v1277 = vld [vmem:[%s6 + $0x2d8] sm:$0xff]
    %v1278 = vld [vmem:[%s6 + $0x2e0] sm:$0xff]
    %v1279 = vld [vmem:[%s6 + $0x2e8] sm:$0xff]
    %v1280 = vld [vmem:[%s6 + $0x2f0] sm:$0xff]
    %v1281 = vld [vmem:[%s6 + $0x2f8] sm:$0xff]
    %v1282 = vld [vmem:[%s6 + $0x300] sm:$0xff]
    %v1283 = vld [vmem:[%s6 + $0x308] sm:$0xff]
    %v1284 = vld [vmem:[%s6 + $0x310] sm:$0xff]
    %v1285 = vld [vmem:[%s6 + $0x318] sm:$0xff]
    %v1286 = vld [vmem:[%s6 + $0x320] sm:$0xff]
    %v1287 = vld [vmem:[%s6 + $0x328] sm:$0xff]
    %v1288 = vld [vmem:[%s6 + $0x330] sm:$0xff]
    %v1289 = vld [vmem:[%s6 + $0x338] sm:$0xff]
    %v1290 = vld [vmem:[%s6 + $0x340] sm:$0xff]
    %v1291 = vld [vmem:[%s6 + $0x348] sm:$0xff]
    %v1292 = vld [vmem:[%s6 + $0x350] sm:$0xff]
    %v1293 = vld [vmem:[%s6 + $0x358] sm:$0xff]
    %v1294 = vld [vmem:[%s6 + $0x360] sm:$0xff]
    %v1295 = vld [vmem:[%s6 + $0x368] sm:$0xff]
    %v1296 = vld [vmem:[%s6 + $0x370] sm:$0xff]
    %v1297 = vld [vmem:[%s6 + $0x378] sm:$0xff]
    %v1298 = vld [vmem:[%s6 + $0x380] sm:$0xff]
    %v1299 = vld [vmem:[%s6 + $0x388] sm:$0xff]
    %v1300 = vld [vmem:[%s6 + $0x390] sm:$0xff]
    %v1301 = vld [vmem:[%s6 + $0x398] sm:$0xff]
    %v1302 = vld [vmem:[%s6 + $0x3a0] sm:$0xff]
    %v1303 = vld [vmem:[%s6 + $0x3a8] sm:$0xff]
    %v1304 = vld [vmem:[%s6 + $0x3b0] sm:$0xff]
    %v1305 = vld [vmem:[%s6 + $0x3b8] sm:$0xff]
    %v1306 = vld [vmem:[%s6 + $0x3c0] sm:$0xff]
    %v1307 = vld [vmem:[%s6 + $0x3c8] sm:$0xff]
    %v1308 = vld [vmem:[%s6 + $0x3d0] sm:$0xff]
    %v1309 = vld [vmem:[%s6 + $0x3d8] sm:$0xff]
    %v1310 = vld [vmem:[%s6 + $0x3e0] sm:$0xff]
    %v1311 = vld [vmem:[%s6 + $0x3e8] sm:$0xff]
    %v1312 = vld [vmem:[%s6 + $0x3f0] sm:$0xff]
    %v1313 = vld [vmem:[%s6 + $0x3f8] sm:$0xff]
    %v1314 = vld [vmem:[%s7] sm:$0xf]
    %v1316 = vlaneseq
    %v1317 = vshrl.u32 %v1316, 7
    %v1318 = vsub.s32 0, %v1317
    %v1319 = vrot.slane %v1314, %v1318
    %v1320 = vlaneseq
    %v1321 = vshrl.u32 %v1320, 7
    %v1322 = vsub.s32 1, %v1321
    %v1323 = vrot.slane %v1314, %v1322
    %v1324 = vlaneseq
    %v1325 = vshrl.u32 %v1324, 7
    %v1326 = vsub.s32 2, %v1325
    %v1327 = vrot.slane %v1314, %v1326
    %v1328 = vlaneseq
    %v1329 = vshrl.u32 %v1328, 7
    %v1330 = vsub.s32 3, %v1329
    %v1331 = vrot.slane %v1314, %v1330
    %v1464 = vunpack.c.l.b16 %v1186
    %v1465 = vunpack.c.h.b16 %v1186
    %v1466 = vunpack.c.l.b16 %v1187
    %v1467 = vunpack.c.h.b16 %v1187
    %v1468 = vunpack.c.l.b16 %v1188
    %v1469 = vunpack.c.h.b16 %v1188
    %v1470 = vunpack.c.l.b16 %v1189
    %v1471 = vunpack.c.h.b16 %v1189
    %v1472 = vunpack.c.l.b16 %v1190
    %v1473 = vunpack.c.h.b16 %v1190
    %v1474 = vunpack.c.l.b16 %v1191
    %v1475 = vunpack.c.h.b16 %v1191
    %v1476 = vunpack.c.l.b16 %v1192
    %v1477 = vunpack.c.h.b16 %v1192
    %v1478 = vunpack.c.l.b16 %v1193
    %v1479 = vunpack.c.h.b16 %v1193
    %v1480 = vunpack.c.l.b16 %v1194
    %v1481 = vunpack.c.h.b16 %v1194
    %v1482 = vunpack.c.l.b16 %v1195
    %v1483 = vunpack.c.h.b16 %v1195
    %v1484 = vunpack.c.l.b16 %v1196
    %v1485 = vunpack.c.h.b16 %v1196
    %v1486 = vunpack.c.l.b16 %v1197
    %v1487 = vunpack.c.h.b16 %v1197
    %v1488 = vunpack.c.l.b16 %v1198
    %v1489 = vunpack.c.h.b16 %v1198
    %v1490 = vunpack.c.l.b16 %v1199
    %v1491 = vunpack.c.h.b16 %v1199
    %v1492 = vunpack.c.l.b16 %v1200
    %v1493 = vunpack.c.h.b16 %v1200
    %v1494 = vunpack.c.l.b16 %v1201
    %v1495 = vunpack.c.h.b16 %v1201
    %v1496 = vunpack.c.l.b16 %v1202
    %v1497 = vunpack.c.h.b16 %v1202
    %v1498 = vunpack.c.l.b16 %v1203
    %v1499 = vunpack.c.h.b16 %v1203
    %v1500 = vunpack.c.l.b16 %v1204
    %v1501 = vunpack.c.h.b16 %v1204
    %v1502 = vunpack.c.l.b16 %v1205
    %v1503 = vunpack.c.h.b16 %v1205
    %v1504 = vunpack.c.l.b16 %v1206
    %v1505 = vunpack.c.h.b16 %v1206
    %v1506 = vunpack.c.l.b16 %v1207
    %v1507 = vunpack.c.h.b16 %v1207
    %v1508 = vunpack.c.l.b16 %v1208
    %v1509 = vunpack.c.h.b16 %v1208
    %v1510 = vunpack.c.l.b16 %v1209
    %v1511 = vunpack.c.h.b16 %v1209
    %v1512 = vunpack.c.l.b16 %v1210
    %v1513 = vunpack.c.h.b16 %v1210
    %v1514 = vunpack.c.l.b16 %v1211
    %v1515 = vunpack.c.h.b16 %v1211
    %v1516 = vunpack.c.l.b16 %v1212
    %v1517 = vunpack.c.h.b16 %v1212
    %v1518 = vunpack.c.l.b16 %v1213
    %v1519 = vunpack.c.h.b16 %v1213
    %v1520 = vunpack.c.l.b16 %v1214
    %v1521 = vunpack.c.h.b16 %v1214
    %v1522 = vunpack.c.l.b16 %v1215
    %v1523 = vunpack.c.h.b16 %v1215
    %v1524 = vunpack.c.l.b16 %v1216
    %v1525 = vunpack.c.h.b16 %v1216
    %v1526 = vunpack.c.l.b16 %v1217
    %v1527 = vunpack.c.h.b16 %v1217
    %v1528 = vunpack.c.l.b16 %v1218
    %v1529 = vunpack.c.h.b16 %v1218
    %v1530 = vunpack.c.l.b16 %v1219
    %v1531 = vunpack.c.h.b16 %v1219
    %v1532 = vunpack.c.l.b16 %v1220
    %v1533 = vunpack.c.h.b16 %v1220
    %v1534 = vunpack.c.l.b16 %v1221
    %v1535 = vunpack.c.h.b16 %v1221
    %v1536 = vunpack.c.l.b16 %v1222
    %v1537 = vunpack.c.h.b16 %v1222
    %v1538 = vunpack.c.l.b16 %v1223
    %v1539 = vunpack.c.h.b16 %v1223
    %v1540 = vunpack.c.l.b16 %v1224
    %v1541 = vunpack.c.h.b16 %v1224
    %v1542 = vunpack.c.l.b16 %v1225
    %v1543 = vunpack.c.h.b16 %v1225
    %v1544 = vunpack.c.l.b16 %v1226
    %v1545 = vunpack.c.h.b16 %v1226
    %v1546 = vunpack.c.l.b16 %v1227
    %v1547 = vunpack.c.h.b16 %v1227
    %v1548 = vunpack.c.l.b16 %v1228
    %v1549 = vunpack.c.h.b16 %v1228
    %v1550 = vunpack.c.l.b16 %v1229
    %v1551 = vunpack.c.h.b16 %v1229
    %v1552 = vunpack.c.l.b16 %v1230
    %v1553 = vunpack.c.h.b16 %v1230
    %v1554 = vunpack.c.l.b16 %v1231
    %v1555 = vunpack.c.h.b16 %v1231
    %v1556 = vunpack.c.l.b16 %v1232
    %v1557 = vunpack.c.h.b16 %v1232
    %v1558 = vunpack.c.l.b16 %v1233
    %v1559 = vunpack.c.h.b16 %v1233
    %v1560 = vunpack.c.l.b16 %v1234
    %v1561 = vunpack.c.h.b16 %v1234
    %v1562 = vunpack.c.l.b16 %v1235
    %v1563 = vunpack.c.h.b16 %v1235
    %v1564 = vunpack.c.l.b16 %v1236
    %v1565 = vunpack.c.h.b16 %v1236
    %v1566 = vunpack.c.l.b16 %v1237
    %v1567 = vunpack.c.h.b16 %v1237
    %v1568 = vunpack.c.l.b16 %v1238
    %v1569 = vunpack.c.h.b16 %v1238
    %v1570 = vunpack.c.l.b16 %v1239
    %v1571 = vunpack.c.h.b16 %v1239
    %v1572 = vunpack.c.l.b16 %v1240
    %v1573 = vunpack.c.h.b16 %v1240
    %v1574 = vunpack.c.l.b16 %v1241
    %v1575 = vunpack.c.h.b16 %v1241
    %v1576 = vunpack.c.l.b16 %v1242
    %v1577 = vunpack.c.h.b16 %v1242
    %v1578 = vunpack.c.l.b16 %v1243
    %v1579 = vunpack.c.h.b16 %v1243
    %v1580 = vunpack.c.l.b16 %v1244
    %v1581 = vunpack.c.h.b16 %v1244
    %v1582 = vunpack.c.l.b16 %v1245
    %v1583 = vunpack.c.h.b16 %v1245
    %v1584 = vunpack.c.l.b16 %v1246
    %v1585 = vunpack.c.h.b16 %v1246
    %v1586 = vunpack.c.l.b16 %v1247
    %v1587 = vunpack.c.h.b16 %v1247
    %v1588 = vunpack.c.l.b16 %v1248
    %v1589 = vunpack.c.h.b16 %v1248
    %v1590 = vunpack.c.l.b16 %v1249
    %v1591 = vunpack.c.h.b16 %v1249
    %v1592 = vunpack.c.l.b16 %v1250
    %v1593 = vunpack.c.h.b16 %v1250
    %v1594 = vunpack.c.l.b16 %v1251
    %v1595 = vunpack.c.h.b16 %v1251
    %v1596 = vunpack.c.l.b16 %v1252
    %v1597 = vunpack.c.h.b16 %v1252
    %v1598 = vunpack.c.l.b16 %v1253
    %v1599 = vunpack.c.h.b16 %v1253
    %v1600 = vunpack.c.l.b16 %v1254
    %v1601 = vunpack.c.h.b16 %v1254
    %v1602 = vunpack.c.l.b16 %v1255
    %v1603 = vunpack.c.h.b16 %v1255
    %v1604 = vunpack.c.l.b16 %v1256
    %v1605 = vunpack.c.h.b16 %v1256
    %v1606 = vunpack.c.l.b16 %v1257
    %v1607 = vunpack.c.h.b16 %v1257
    %v1608 = vunpack.c.l.b16 %v1258
    %v1609 = vunpack.c.h.b16 %v1258
    %v1610 = vunpack.c.l.b16 %v1259
    %v1611 = vunpack.c.h.b16 %v1259
    %v1612 = vunpack.c.l.b16 %v1260
    %v1613 = vunpack.c.h.b16 %v1260
    %v1614 = vunpack.c.l.b16 %v1261
    %v1615 = vunpack.c.h.b16 %v1261
    %v1616 = vunpack.c.l.b16 %v1262
    %v1617 = vunpack.c.h.b16 %v1262
    %v1618 = vunpack.c.l.b16 %v1263
    %v1619 = vunpack.c.h.b16 %v1263
    %v1620 = vunpack.c.l.b16 %v1264
    %v1621 = vunpack.c.h.b16 %v1264
    %v1622 = vunpack.c.l.b16 %v1265
    %v1623 = vunpack.c.h.b16 %v1265
    %v1624 = vunpack.c.l.b16 %v1266
    %v1625 = vunpack.c.h.b16 %v1266
    %v1626 = vunpack.c.l.b16 %v1267
    %v1627 = vunpack.c.h.b16 %v1267
    %v1628 = vunpack.c.l.b16 %v1268
    %v1629 = vunpack.c.h.b16 %v1268
    %v1630 = vunpack.c.l.b16 %v1269
    %v1631 = vunpack.c.h.b16 %v1269
    %v1632 = vunpack.c.l.b16 %v1270
    %v1633 = vunpack.c.h.b16 %v1270
    %v1634 = vunpack.c.l.b16 %v1271
    %v1635 = vunpack.c.h.b16 %v1271
    %v1636 = vunpack.c.l.b16 %v1272
    %v1637 = vunpack.c.h.b16 %v1272
    %v1638 = vunpack.c.l.b16 %v1273
    %v1639 = vunpack.c.h.b16 %v1273
    %v1640 = vunpack.c.l.b16 %v1274
    %v1641 = vunpack.c.h.b16 %v1274
    %v1642 = vunpack.c.l.b16 %v1275
    %v1643 = vunpack.c.h.b16 %v1275
    %v1644 = vunpack.c.l.b16 %v1276
    %v1645 = vunpack.c.h.b16 %v1276
    %v1646 = vunpack.c.l.b16 %v1277
    %v1647 = vunpack.c.h.b16 %v1277
    %v1648 = vunpack.c.l.b16 %v1278
    %v1649 = vunpack.c.h.b16 %v1278
    %v1650 = vunpack.c.l.b16 %v1279
    %v1651 = vunpack.c.h.b16 %v1279
    %v1652 = vunpack.c.l.b16 %v1280
    %v1653 = vunpack.c.h.b16 %v1280
    %v1654 = vunpack.c.l.b16 %v1281
    %v1655 = vunpack.c.h.b16 %v1281
    %v1656 = vunpack.c.l.b16 %v1282
    %v1657 = vunpack.c.h.b16 %v1282
    %v1658 = vunpack.c.l.b16 %v1283
    %v1659 = vunpack.c.h.b16 %v1283
    %v1660 = vunpack.c.l.b16 %v1284
    %v1661 = vunpack.c.h.b16 %v1284
    %v1662 = vunpack.c.l.b16 %v1285
    %v1663 = vunpack.c.h.b16 %v1285
    %v1664 = vunpack.c.l.b16 %v1286
    %v1665 = vunpack.c.h.b16 %v1286
    %v1666 = vunpack.c.l.b16 %v1287
    %v1667 = vunpack.c.h.b16 %v1287
    %v1668 = vunpack.c.l.b16 %v1288
    %v1669 = vunpack.c.h.b16 %v1288
    %v1670 = vunpack.c.l.b16 %v1289
    %v1671 = vunpack.c.h.b16 %v1289
    %v1672 = vunpack.c.l.b16 %v1290
    %v1673 = vunpack.c.h.b16 %v1290
    %v1674 = vunpack.c.l.b16 %v1291
    %v1675 = vunpack.c.h.b16 %v1291
    %v1676 = vunpack.c.l.b16 %v1292
    %v1677 = vunpack.c.h.b16 %v1292
    %v1678 = vunpack.c.l.b16 %v1293
    %v1679 = vunpack.c.h.b16 %v1293
    %v1680 = vunpack.c.l.b16 %v1294
    %v1681 = vunpack.c.h.b16 %v1294
    %v1682 = vunpack.c.l.b16 %v1295
    %v1683 = vunpack.c.h.b16 %v1295
    %v1684 = vunpack.c.l.b16 %v1296
    %v1685 = vunpack.c.h.b16 %v1296
    %v1686 = vunpack.c.l.b16 %v1297
    %v1687 = vunpack.c.h.b16 %v1297
    %v1688 = vunpack.c.l.b16 %v1298
    %v1689 = vunpack.c.h.b16 %v1298
    %v1690 = vunpack.c.l.b16 %v1299
    %v1691 = vunpack.c.h.b16 %v1299
    %v1692 = vunpack.c.l.b16 %v1300
    %v1693 = vunpack.c.h.b16 %v1300
    %v1694 = vunpack.c.l.b16 %v1301
    %v1695 = vunpack.c.h.b16 %v1301
    %v1696 = vunpack.c.l.b16 %v1302
    %v1697 = vunpack.c.h.b16 %v1302
    %v1698 = vunpack.c.l.b16 %v1303
    %v1699 = vunpack.c.h.b16 %v1303
    %v1700 = vunpack.c.l.b16 %v1304
    %v1701 = vunpack.c.h.b16 %v1304
    %v1702 = vunpack.c.l.b16 %v1305
    %v1703 = vunpack.c.h.b16 %v1305
    %v1704 = vunpack.c.l.b16 %v1306
    %v1705 = vunpack.c.h.b16 %v1306
    %v1706 = vunpack.c.l.b16 %v1307
    %v1707 = vunpack.c.h.b16 %v1307
    %v1708 = vunpack.c.l.b16 %v1308
    %v1709 = vunpack.c.h.b16 %v1308
    %v1710 = vunpack.c.l.b16 %v1309
    %v1711 = vunpack.c.h.b16 %v1309
    %v1712 = vunpack.c.l.b16 %v1310
    %v1713 = vunpack.c.h.b16 %v1310
    %v1714 = vunpack.c.l.b16 %v1311
    %v1715 = vunpack.c.h.b16 %v1311
    %v1716 = vunpack.c.l.b16 %v1312
    %v1717 = vunpack.c.h.b16 %v1312
    %v1718 = vunpack.c.l.b16 %v1313
    %v1719 = vunpack.c.h.b16 %v1313
    %v1720 = vpack.c.b16 %v1468, %v1464
    %v1721 = vpack.c.b16 %v1469, %v1465
    %v1722 = vpack.c.b16 %v1470, %v1466
    %v1723 = vpack.c.b16 %v1471, %v1467
    %v1724 = vpack.c.b16 %v1476, %v1472
    %v1725 = vpack.c.b16 %v1477, %v1473
    %v1726 = vpack.c.b16 %v1478, %v1474
    %v1727 = vpack.c.b16 %v1479, %v1475
    %v1728 = vpack.c.b16 %v1484, %v1480
    %v1729 = vpack.c.b16 %v1485, %v1481
    %v1730 = vpack.c.b16 %v1486, %v1482
    %v1731 = vpack.c.b16 %v1487, %v1483
    %v1732 = vpack.c.b16 %v1492, %v1488
    %v1733 = vpack.c.b16 %v1493, %v1489
    %v1734 = vpack.c.b16 %v1494, %v1490
    %v1735 = vpack.c.b16 %v1495, %v1491
    %v1736 = vpack.c.b16 %v1500, %v1496
    %v1737 = vpack.c.b16 %v1501, %v1497
    %v1738 = vpack.c.b16 %v1502, %v1498
    %v1739 = vpack.c.b16 %v1503, %v1499
    %v1740 = vpack.c.b16 %v1508, %v1504
    %v1741 = vpack.c.b16 %v1509, %v1505
    %v1742 = vpack.c.b16 %v1510, %v1506
    %v1743 = vpack.c.b16 %v1511, %v1507
    %v1744 = vpack.c.b16 %v1516, %v1512
    %v1745 = vpack.c.b16 %v1517, %v1513
    %v1746 = vpack.c.b16 %v1518, %v1514
    %v1747 = vpack.c.b16 %v1519, %v1515
    %v1748 = vpack.c.b16 %v1524, %v1520
    %v1749 = vpack.c.b16 %v1525, %v1521
    %v1750 = vpack.c.b16 %v1526, %v1522
    %v1751 = vpack.c.b16 %v1527, %v1523
    %v1752 = vpack.c.b16 %v1532, %v1528
    %v1753 = vpack.c.b16 %v1533, %v1529
    %v1754 = vpack.c.b16 %v1534, %v1530
    %v1755 = vpack.c.b16 %v1535, %v1531
    %v1756 = vpack.c.b16 %v1540, %v1536
    %v1757 = vpack.c.b16 %v1541, %v1537
    %v1758 = vpack.c.b16 %v1542, %v1538
    %v1759 = vpack.c.b16 %v1543, %v1539
    %v1760 = vpack.c.b16 %v1548, %v1544
    %v1761 = vpack.c.b16 %v1549, %v1545
    %v1762 = vpack.c.b16 %v1550, %v1546
    %v1763 = vpack.c.b16 %v1551, %v1547
    %v1764 = vpack.c.b16 %v1556, %v1552
    %v1765 = vpack.c.b16 %v1557, %v1553
    %v1766 = vpack.c.b16 %v1558, %v1554
    %v1767 = vpack.c.b16 %v1559, %v1555
    %v1768 = vpack.c.b16 %v1564, %v1560
    %v1769 = vpack.c.b16 %v1565, %v1561
    %v1770 = vpack.c.b16 %v1566, %v1562
    %v1771 = vpack.c.b16 %v1567, %v1563
    %v1772 = vpack.c.b16 %v1572, %v1568
    %v1773 = vpack.c.b16 %v1573, %v1569
    %v1774 = vpack.c.b16 %v1574, %v1570
    %v1775 = vpack.c.b16 %v1575, %v1571
    %v1776 = vpack.c.b16 %v1580, %v1576
    %v1777 = vpack.c.b16 %v1581, %v1577
    %v1778 = vpack.c.b16 %v1582, %v1578
    %v1779 = vpack.c.b16 %v1583, %v1579
    %v1780 = vpack.c.b16 %v1588, %v1584
    %v1781 = vpack.c.b16 %v1589, %v1585
    %v1782 = vpack.c.b16 %v1590, %v1586
    %v1783 = vpack.c.b16 %v1591, %v1587
    %v1784 = vpack.c.b16 %v1596, %v1592
    %v1785 = vpack.c.b16 %v1597, %v1593
    %v1786 = vpack.c.b16 %v1598, %v1594
    %v1787 = vpack.c.b16 %v1599, %v1595
    %v1788 = vpack.c.b16 %v1604, %v1600
    %v1789 = vpack.c.b16 %v1605, %v1601
    %v1790 = vpack.c.b16 %v1606, %v1602
    %v1791 = vpack.c.b16 %v1607, %v1603
    %v1792 = vpack.c.b16 %v1612, %v1608
    %v1793 = vpack.c.b16 %v1613, %v1609
    %v1794 = vpack.c.b16 %v1614, %v1610
    %v1795 = vpack.c.b16 %v1615, %v1611
    %v1796 = vpack.c.b16 %v1620, %v1616
    %v1797 = vpack.c.b16 %v1621, %v1617
    %v1798 = vpack.c.b16 %v1622, %v1618
    %v1799 = vpack.c.b16 %v1623, %v1619
    %v1800 = vpack.c.b16 %v1628, %v1624
    %v1801 = vpack.c.b16 %v1629, %v1625
    %v1802 = vpack.c.b16 %v1630, %v1626
    %v1803 = vpack.c.b16 %v1631, %v1627
    %v1804 = vpack.c.b16 %v1636, %v1632
    %v1805 = vpack.c.b16 %v1637, %v1633
    %v1806 = vpack.c.b16 %v1638, %v1634
    %v1807 = vpack.c.b16 %v1639, %v1635
    %v1808 = vpack.c.b16 %v1644, %v1640
    %v1809 = vpack.c.b16 %v1645, %v1641
    %v1810 = vpack.c.b16 %v1646, %v1642
    %v1811 = vpack.c.b16 %v1647, %v1643
    %v1812 = vpack.c.b16 %v1652, %v1648
    %v1813 = vpack.c.b16 %v1653, %v1649
    %v1814 = vpack.c.b16 %v1654, %v1650
    %v1815 = vpack.c.b16 %v1655, %v1651
    %v1816 = vpack.c.b16 %v1660, %v1656
    %v1817 = vpack.c.b16 %v1661, %v1657
    %v1818 = vpack.c.b16 %v1662, %v1658
    %v1819 = vpack.c.b16 %v1663, %v1659
    %v1820 = vpack.c.b16 %v1668, %v1664
    %v1821 = vpack.c.b16 %v1669, %v1665
    %v1822 = vpack.c.b16 %v1670, %v1666
    %v1823 = vpack.c.b16 %v1671, %v1667
    %v1824 = vpack.c.b16 %v1676, %v1672
    %v1825 = vpack.c.b16 %v1677, %v1673
    %v1826 = vpack.c.b16 %v1678, %v1674
    %v1827 = vpack.c.b16 %v1679, %v1675
    %v1828 = vpack.c.b16 %v1684, %v1680
    %v1829 = vpack.c.b16 %v1685, %v1681
    %v1830 = vpack.c.b16 %v1686, %v1682
    %v1831 = vpack.c.b16 %v1687, %v1683
    %v1832 = vpack.c.b16 %v1692, %v1688
    %v1833 = vpack.c.b16 %v1693, %v1689
    %v1834 = vpack.c.b16 %v1694, %v1690
    %v1835 = vpack.c.b16 %v1695, %v1691
    %v1836 = vpack.c.b16 %v1700, %v1696
    %v1837 = vpack.c.b16 %v1701, %v1697
    %v1838 = vpack.c.b16 %v1702, %v1698
    %v1839 = vpack.c.b16 %v1703, %v1699
    %v1840 = vpack.c.b16 %v1708, %v1704
    %v1841 = vpack.c.b16 %v1709, %v1705
    %v1842 = vpack.c.b16 %v1710, %v1706
    %v1843 = vpack.c.b16 %v1711, %v1707
    %v1844 = vpack.c.b16 %v1716, %v1712
    %v1845 = vpack.c.b16 %v1717, %v1713
    %v1846 = vpack.c.b16 %v1718, %v1714
    %v1847 = vpack.c.b16 %v1719, %v1715
    %1976 = vmatprep.subr.bf16.mxu0 %v1721
    %1977 = vmatpush1.bf16.msra.mxu0 %v1720
    %1978 = vmatprep.subr.bf16.mxu0 %v1725
    %1979 = vmatpush1.bf16.msra.mxu0 %v1724
    %1980 = vmatprep.subr.bf16.mxu0 %v1729
    %1981 = vmatpush1.bf16.msra.mxu0 %v1728
    %1982 = vmatprep.subr.bf16.mxu0 %v1733
    %1983 = vmatpush1.bf16.msra.mxu0 %v1732
    %1984 = vmatprep.subr.bf16.mxu0 %v1737
    %1985 = vmatpush1.bf16.msra.mxu0 %v1736
    %1986 = vmatprep.subr.bf16.mxu0 %v1741
    %1987 = vmatpush1.bf16.msra.mxu0 %v1740
    %1988 = vmatprep.subr.bf16.mxu0 %v1745
    %1989 = vmatpush1.bf16.msra.mxu0 %v1744
    %1990 = vmatprep.subr.bf16.mxu0 %v1749
    %1991 = vmatpush1.bf16.msra.mxu0 %v1748
    %1992 = vmatprep.subr.bf16.mxu0 %v1753
    %1993 = vmatpush1.bf16.msra.mxu0 %v1752
    %1994 = vmatprep.subr.bf16.mxu0 %v1757
    %1995 = vmatpush1.bf16.msra.mxu0 %v1756
    %1996 = vmatprep.subr.bf16.mxu0 %v1761
    %1997 = vmatpush1.bf16.msra.mxu0 %v1760
    %1998 = vmatprep.subr.bf16.mxu0 %v1765
    %1999 = vmatpush1.bf16.msra.mxu0 %v1764
    %2000 = vmatprep.subr.bf16.mxu0 %v1769
    %2001 = vmatpush1.bf16.msra.mxu0 %v1768
    %2002 = vmatprep.subr.bf16.mxu0 %v1773
    %2003 = vmatpush1.bf16.msra.mxu0 %v1772
    %2004 = vmatprep.subr.bf16.mxu0 %v1777
    %2005 = vmatpush1.bf16.msra.mxu0 %v1776
    %2006 = vmatprep.subr.bf16.mxu0 %v1781
    %2007 = vmatpush1.bf16.msra.mxu0 %v1780
    %2008 = vmatprep.mubr.bf16.mxu0 %v1183
    %2009 = vmatmul.mubr.bf16.gmra.mrb[0].mxu0 %v1182
    %v2010 = vpop.f32.mrb[0].mxu0
    %v2011 = vadd.f32 %v1319, %v2010
    %v2012 = vpop.f32.mrb[0].mxu0
    %v2013 = vadd.f32 %v1323, %v2012
    %v2014 = vpop.f32.mrb[0].mxu0
    %v2015 = vpop.f32.mrb[0].mxu0
    %2016 = vdwg.mxu0
    %2017 = vmatprep.subr.bf16.mxu0 %v1785
    %2018 = vmatpush1.bf16.msra.mxu0 %v1784
    %2019 = vmatprep.subr.bf16.mxu0 %v1789
    %2020 = vmatpush1.bf16.msra.mxu0 %v1788
    %2021 = vmatprep.subr.bf16.mxu0 %v1793
    %2022 = vmatpush1.bf16.msra.mxu0 %v1792
    %2023 = vmatprep.subr.bf16.mxu0 %v1797
    %2024 = vmatpush1.bf16.msra.mxu0 %v1796
    %2025 = vmatprep.subr.bf16.mxu0 %v1801
    %2026 = vmatpush1.bf16.msra.mxu0 %v1800
    %2027 = vmatprep.subr.bf16.mxu0 %v1805
    %2028 = vmatpush1.bf16.msra.mxu0 %v1804
    %2029 = vmatprep.subr.bf16.mxu0 %v1809
    %2030 = vmatpush1.bf16.msra.mxu0 %v1808
    %2031 = vmatprep.subr.bf16.mxu0 %v1813
    %2032 = vmatpush1.bf16.msra.mxu0 %v1812
    %2033 = vmatprep.subr.bf16.mxu0 %v1817
    %2034 = vmatpush1.bf16.msra.mxu0 %v1816
    %2035 = vmatprep.subr.bf16.mxu0 %v1821
    %2036 = vmatpush1.bf16.msra.mxu0 %v1820
    %2037 = vmatprep.subr.bf16.mxu0 %v1825
    %2038 = vmatpush1.bf16.msra.mxu0 %v1824
    %2039 = vmatprep.subr.bf16.mxu0 %v1829
    %2040 = vmatpush1.bf16.msra.mxu0 %v1828
    %2041 = vmatprep.subr.bf16.mxu0 %v1833
    %2042 = vmatpush1.bf16.msra.mxu0 %v1832
    %2043 = vmatprep.subr.bf16.mxu0 %v1837
    %2044 = vmatpush1.bf16.msra.mxu0 %v1836
    %2045 = vmatprep.subr.bf16.mxu0 %v1841
    %2046 = vmatpush1.bf16.msra.mxu0 %v1840
    %2047 = vmatprep.subr.bf16.mxu0 %v1845
    %2048 = vmatpush1.bf16.msra.mxu0 %v1844
    %2049 = vmatprep.mubr.bf16.mxu0 %v1185
    %2050 = vmatmul.mubr.bf16.gmra.mrb[0].mxu0 %v1184
    %v2051 = vpop.f32.mrb[0].mxu0
    %v2052 = vadd.f32 %v2011, %v2051
    %v2053 = vpop.f32.mrb[0].mxu0
    %v2054 = vadd.f32 %v2013, %v2053
    %v2055 = vpop.f32.mrb[0].mxu0
    %v2056 = vpop.f32.mrb[0].mxu0
    %2057 = vdwg.mxu0
    %2058 = vmatprep.subr.bf16.mxu0 %v1723
    %2059 = vmatpush1.bf16.msra.mxu0 %v1722
    %2060 = vmatprep.subr.bf16.mxu0 %v1727
    %2061 = vmatpush1.bf16.msra.mxu0 %v1726
    %2062 = vmatprep.subr.bf16.mxu0 %v1731
    %2063 = vmatpush1.bf16.msra.mxu0 %v1730
    %2064 = vmatprep.subr.bf16.mxu0 %v1735
    %2065 = vmatpush1.bf16.msra.mxu0 %v1734
    %2066 = vmatprep.subr.bf16.mxu0 %v1739
    %2067 = vmatpush1.bf16.msra.mxu0 %v1738
    %2068 = vmatprep.subr.bf16.mxu0 %v1743
    %2069 = vmatpush1.bf16.msra.mxu0 %v1742
    %2070 = vmatprep.subr.bf16.mxu0 %v1747
    %2071 = vmatpush1.bf16.msra.mxu0 %v1746
    %2072 = vmatprep.subr.bf16.mxu0 %v1751
    %2073 = vmatpush1.bf16.msra.mxu0 %v1750
    %2074 = vmatprep.subr.bf16.mxu0 %v1755
    %2075 = vmatpush1.bf16.msra.mxu0 %v1754
    %2076 = vmatprep.subr.bf16.mxu0 %v1759
    %2077 = vmatpush1.bf16.msra.mxu0 %v1758
    %2078 = vmatprep.subr.bf16.mxu0 %v1763
    %2079 = vmatpush1.bf16.msra.mxu0 %v1762
    %2080 = vmatprep.subr.bf16.mxu0 %v1767
    %2081 = vmatpush1.bf16.msra.mxu0 %v1766
    %2082 = vmatprep.subr.bf16.mxu0 %v1771
    %2083 = vmatpush1.bf16.msra.mxu0 %v1770
    %2084 = vmatprep.subr.bf16.mxu0 %v1775
    %2085 = vmatpush1.bf16.msra.mxu0 %v1774
    %2086 = vmatprep.subr.bf16.mxu0 %v1779
    %2087 = vmatpush1.bf16.msra.mxu0 %v1778
    %2088 = vmatprep.subr.bf16.mxu0 %v1783
    %2089 = vmatpush1.bf16.msra.mxu0 %v1782
    %2090 = vmatprep.mubr.bf16.mxu0 %v1183
    %2091 = vmatmul.mubr.bf16.gmra.mrb[0].mxu0 %v1182
    %v2092 = vpop.f32.mrb[0].mxu0
    %v2093 = vadd.f32 %v1327, %v2092
    %v2094 = vpop.f32.mrb[0].mxu0
    %v2095 = vadd.f32 %v1331, %v2094
    %v2096 = vpop.f32.mrb[0].mxu0
    %v2097 = vpop.f32.mrb[0].mxu0
    %2098 = vdwg.mxu0
    %2099 = vmatprep.subr.bf16.mxu0 %v1787
    %2100 = vmatpush1.bf16.msra.mxu0 %v1786
    %2101 = vmatprep.subr.bf16.mxu0 %v1791
    %2102 = vmatpush1.bf16.msra.mxu0 %v1790
    %2103 = vmatprep.subr.bf16.mxu0 %v1795
    %2104 = vmatpush1.bf16.msra.mxu0 %v1794
    %2105 = vmatprep.subr.bf16.mxu0 %v1799
    %2106 = vmatpush1.bf16.msra.mxu0 %v1798
    %2107 = vmatprep.subr.bf16.mxu0 %v1803
    %2108 = vmatpush1.bf16.msra.mxu0 %v1802
    %2109 = vmatprep.subr.bf16.mxu0 %v1807
    %2110 = vmatpush1.bf16.msra.mxu0 %v1806
    %2111 = vmatprep.subr.bf16.mxu0 %v1811
    %2112 = vmatpush1.bf16.msra.mxu0 %v1810
    %2113 = vmatprep.subr.bf16.mxu0 %v1815
    %2114 = vmatpush1.bf16.msra.mxu0 %v1814
    %2115 = vmatprep.subr.bf16.mxu0 %v1819
    %2116 = vmatpush1.bf16.msra.mxu0 %v1818
    %2117 = vmatprep.subr.bf16.mxu0 %v1823
    %2118 = vmatpush1.bf16.msra.mxu0 %v1822
    %2119 = vmatprep.subr.bf16.mxu0 %v1827
    %2120 = vmatpush1.bf16.msra.mxu0 %v1826
    %2121 = vmatprep.subr.bf16.mxu0 %v1831
    %2122 = vmatpush1.bf16.msra.mxu0 %v1830
    %2123 = vmatprep.subr.bf16.mxu0 %v1835
    %2124 = vmatpush1.bf16.msra.mxu0 %v1834
    %2125 = vmatprep.subr.bf16.mxu0 %v1839
    %2126 = vmatpush1.bf16.msra.mxu0 %v1838
    %2127 = vmatprep.subr.bf16.mxu0 %v1843
    %2128 = vmatpush1.bf16.msra.mxu0 %v1842
    %2129 = vmatprep.subr.bf16.mxu0 %v1847
    %2130 = vmatpush1.bf16.msra.mxu0 %v1846
    %2131 = vmatprep.mubr.bf16.mxu0 %v1185
    %2132 = vmatmul.mubr.bf16.gmra.mrb[0].mxu0 %v1184
    %v2133 = vpop.f32.mrb[0].mxu0
    %v2134 = vadd.f32 %v2093, %v2133
    %v2135 = vpop.f32.mrb[0].mxu0
    %v2136 = vadd.f32 %v2095, %v2135
    %v2137 = vpop.f32.mrb[0].mxu0
    %v2138 = vpop.f32.mrb[0].mxu0
    %2139 = vdwg.mxu0
    %vm2140 = vcmp.ge.f32.partialorder %v2052, 0.0
    %vm2141 = vcmp.ge.f32.partialorder %v2054, 0.0
    %vm2142 = vcmp.ge.f32.partialorder %v2134, 0.0
    %vm2143 = vcmp.ge.f32.partialorder %v2136, 0.0
    %v2144 = vstv %s1181
    %v2145 = vmul.f32 %v2144, %v2052
    %v2146 = vmul.f32 %v2144, %v2054
    %v2147 = vmul.f32 %v2144, %v2134
    %v2148 = vmul.f32 %v2144, %v2136
    %v2149 = vsel %vm2140, %v2052, %v2145
    %v2150 = vsel %vm2141, %v2054, %v2146
    %v2151 = vsel %vm2142, %v2134, %v2147
    %v2152 = vsel %vm2143, %v2136, %v2148
    %s2153 = sld [smem:[#allocation2 + $0x3]]
    %v2154 = vpack.c.bf16 %v2149, %v2149
    %v2155 = vpack.c.bf16 %v2150, %v2150
    %v2156 = vpack.c.bf16 %v2151, %v2151
    %v2157 = vpack.c.bf16 %v2152, %v2152
    %v2158 = vld [vmem:[%s8] sm:$0xff]
    %v2159 = vld [vmem:[%s8 + $0x8] sm:$0xff]
    %v2160 = vld [vmem:[%s8 + $0x10] sm:$0xff]
    %v2161 = vld [vmem:[%s8 + $0x18] sm:$0xff]
    %v2162 = vld [vmem:[%s8 + $0x20] sm:$0xff]
    %v2163 = vld [vmem:[%s8 + $0x28] sm:$0xff]
    %v2164 = vld [vmem:[%s8 + $0x30] sm:$0xff]
    %v2165 = vld [vmem:[%s8 + $0x38] sm:$0xff]
    %v2166 = vld [vmem:[%s8 + $0x40] sm:$0xff]
    %v2167 = vld [vmem:[%s8 + $0x48] sm:$0xff]
    %v2168 = vld [vmem:[%s8 + $0x50] sm:$0xff]
    %v2169 = vld [vmem:[%s8 + $0x58] sm:$0xff]
    %v2170 = vld [vmem:[%s8 + $0x60] sm:$0xff]
    %v2171 = vld [vmem:[%s8 + $0x68] sm:$0xff]
    %v2172 = vld [vmem:[%s8 + $0x70] sm:$0xff]
    %v2173 = vld [vmem:[%s8 + $0x78] sm:$0xff]
    %v2174 = vld [vmem:[%s8 + $0x80] sm:$0xff]
    %v2175 = vld [vmem:[%s8 + $0x88] sm:$0xff]
    %v2176 = vld [vmem:[%s8 + $0x90] sm:$0xff]
    %v2177 = vld [vmem:[%s8 + $0x98] sm:$0xff]
    %v2178 = vld [vmem:[%s8 + $0xa0] sm:$0xff]
    %v2179 = vld [vmem:[%s8 + $0xa8] sm:$0xff]
    %v2180 = vld [vmem:[%s8 + $0xb0] sm:$0xff]
    %v2181 = vld [vmem:[%s8 + $0xb8] sm:$0xff]
    %v2182 = vld [vmem:[%s8 + $0xc0] sm:$0xff]
    %v2183 = vld [vmem:[%s8 + $0xc8] sm:$0xff]
    %v2184 = vld [vmem:[%s8 + $0xd0] sm:$0xff]
    %v2185 = vld [vmem:[%s8 + $0xd8] sm:$0xff]
    %v2186 = vld [vmem:[%s8 + $0xe0] sm:$0xff]
    %v2187 = vld [vmem:[%s8 + $0xe8] sm:$0xff]
    %v2188 = vld [vmem:[%s8 + $0xf0] sm:$0xff]
    %v2189 = vld [vmem:[%s8 + $0xf8] sm:$0xff]
    %v2190 = vld [vmem:[%s8 + $0x100] sm:$0xff]
    %v2191 = vld [vmem:[%s8 + $0x108] sm:$0xff]
    %v2192 = vld [vmem:[%s8 + $0x110] sm:$0xff]
    %v2193 = vld [vmem:[%s8 + $0x118] sm:$0xff]
    %v2194 = vld [vmem:[%s8 + $0x120] sm:$0xff]
    %v2195 = vld [vmem:[%s8 + $0x128] sm:$0xff]
    %v2196 = vld [vmem:[%s8 + $0x130] sm:$0xff]
    %v2197 = vld [vmem:[%s8 + $0x138] sm:$0xff]
    %v2198 = vld [vmem:[%s8 + $0x140] sm:$0xff]
    %v2199 = vld [vmem:[%s8 + $0x148] sm:$0xff]
    %v2200 = vld [vmem:[%s8 + $0x150] sm:$0xff]
    %v2201 = vld [vmem:[%s8 + $0x158] sm:$0xff]
    %v2202 = vld [vmem:[%s8 + $0x160] sm:$0xff]
    %v2203 = vld [vmem:[%s8 + $0x168] sm:$0xff]
    %v2204 = vld [vmem:[%s8 + $0x170] sm:$0xff]
    %v2205 = vld [vmem:[%s8 + $0x178] sm:$0xff]
    %v2206 = vld [vmem:[%s8 + $0x180] sm:$0xff]
    %v2207 = vld [vmem:[%s8 + $0x188] sm:$0xff]
    %v2208 = vld [vmem:[%s8 + $0x190] sm:$0xff]
    %v2209 = vld [vmem:[%s8 + $0x198] sm:$0xff]
    %v2210 = vld [vmem:[%s8 + $0x1a0] sm:$0xff]
    %v2211 = vld [vmem:[%s8 + $0x1a8] sm:$0xff]
    %v2212 = vld [vmem:[%s8 + $0x1b0] sm:$0xff]
    %v2213 = vld [vmem:[%s8 + $0x1b8] sm:$0xff]
    %v2214 = vld [vmem:[%s8 + $0x1c0] sm:$0xff]
    %v2215 = vld [vmem:[%s8 + $0x1c8] sm:$0xff]
    %v2216 = vld [vmem:[%s8 + $0x1d0] sm:$0xff]
    %v2217 = vld [vmem:[%s8 + $0x1d8] sm:$0xff]
    %v2218 = vld [vmem:[%s8 + $0x1e0] sm:$0xff]
    %v2219 = vld [vmem:[%s8 + $0x1e8] sm:$0xff]
    %v2220 = vld [vmem:[%s8 + $0x1f0] sm:$0xff]
    %v2221 = vld [vmem:[%s8 + $0x1f8] sm:$0xff]
    %v2222 = vld [vmem:[%s8 + $0x200] sm:$0xff]
    %v2223 = vld [vmem:[%s8 + $0x208] sm:$0xff]
    %v2224 = vld [vmem:[%s8 + $0x210] sm:$0xff]
    %v2225 = vld [vmem:[%s8 + $0x218] sm:$0xff]
    %v2226 = vld [vmem:[%s8 + $0x220] sm:$0xff]
    %v2227 = vld [vmem:[%s8 + $0x228] sm:$0xff]
    %v2228 = vld [vmem:[%s8 + $0x230] sm:$0xff]
    %v2229 = vld [vmem:[%s8 + $0x238] sm:$0xff]
    %v2230 = vld [vmem:[%s8 + $0x240] sm:$0xff]
    %v2231 = vld [vmem:[%s8 + $0x248] sm:$0xff]
    %v2232 = vld [vmem:[%s8 + $0x250] sm:$0xff]
    %v2233 = vld [vmem:[%s8 + $0x258] sm:$0xff]
    %v2234 = vld [vmem:[%s8 + $0x260] sm:$0xff]
    %v2235 = vld [vmem:[%s8 + $0x268] sm:$0xff]
    %v2236 = vld [vmem:[%s8 + $0x270] sm:$0xff]
    %v2237 = vld [vmem:[%s8 + $0x278] sm:$0xff]
    %v2238 = vld [vmem:[%s8 + $0x280] sm:$0xff]
    %v2239 = vld [vmem:[%s8 + $0x288] sm:$0xff]
    %v2240 = vld [vmem:[%s8 + $0x290] sm:$0xff]
    %v2241 = vld [vmem:[%s8 + $0x298] sm:$0xff]
    %v2242 = vld [vmem:[%s8 + $0x2a0] sm:$0xff]
    %v2243 = vld [vmem:[%s8 + $0x2a8] sm:$0xff]
    %v2244 = vld [vmem:[%s8 + $0x2b0] sm:$0xff]
    %v2245 = vld [vmem:[%s8 + $0x2b8] sm:$0xff]
    %v2246 = vld [vmem:[%s8 + $0x2c0] sm:$0xff]
    %v2247 = vld [vmem:[%s8 + $0x2c8] sm:$0xff]
    %v2248 = vld [vmem:[%s8 + $0x2d0] sm:$0xff]
    %v2249 = vld [vmem:[%s8 + $0x2d8] sm:$0xff]
    %v2250 = vld [vmem:[%s8 + $0x2e0] sm:$0xff]
    %v2251 = vld [vmem:[%s8 + $0x2e8] sm:$0xff]
    %v2252 = vld [vmem:[%s8 + $0x2f0] sm:$0xff]
    %v2253 = vld [vmem:[%s8 + $0x2f8] sm:$0xff]
    %v2254 = vld [vmem:[%s8 + $0x300] sm:$0xff]
    %v2255 = vld [vmem:[%s8 + $0x308] sm:$0xff]
    %v2256 = vld [vmem:[%s8 + $0x310] sm:$0xff]
    %v2257 = vld [vmem:[%s8 + $0x318] sm:$0xff]
    %v2258 = vld [vmem:[%s8 + $0x320] sm:$0xff]
    %v2259 = vld [vmem:[%s8 + $0x328] sm:$0xff]
    %v2260 = vld [vmem:[%s8 + $0x330] sm:$0xff]
    %v2261 = vld [vmem:[%s8 + $0x338] sm:$0xff]
    %v2262 = vld [vmem:[%s8 + $0x340] sm:$0xff]
    %v2263 = vld [vmem:[%s8 + $0x348] sm:$0xff]
    %v2264 = vld [vmem:[%s8 + $0x350] sm:$0xff]
    %v2265 = vld [vmem:[%s8 + $0x358] sm:$0xff]
    %v2266 = vld [vmem:[%s8 + $0x360] sm:$0xff]
    %v2267 = vld [vmem:[%s8 + $0x368] sm:$0xff]
    %v2268 = vld [vmem:[%s8 + $0x370] sm:$0xff]
    %v2269 = vld [vmem:[%s8 + $0x378] sm:$0xff]
    %v2270 = vld [vmem:[%s8 + $0x380] sm:$0xff]
    %v2271 = vld [vmem:[%s8 + $0x388] sm:$0xff]
    %v2272 = vld [vmem:[%s8 + $0x390] sm:$0xff]
    %v2273 = vld [vmem:[%s8 + $0x398] sm:$0xff]
    %v2274 = vld [vmem:[%s8 + $0x3a0] sm:$0xff]
    %v2275 = vld [vmem:[%s8 + $0x3a8] sm:$0xff]
    %v2276 = vld [vmem:[%s8 + $0x3b0] sm:$0xff]
    %v2277 = vld [vmem:[%s8 + $0x3b8] sm:$0xff]
    %v2278 = vld [vmem:[%s8 + $0x3c0] sm:$0xff]
    %v2279 = vld [vmem:[%s8 + $0x3c8] sm:$0xff]
    %v2280 = vld [vmem:[%s8 + $0x3d0] sm:$0xff]
    %v2281 = vld [vmem:[%s8 + $0x3d8] sm:$0xff]
    %v2282 = vld [vmem:[%s8 + $0x3e0] sm:$0xff]
    %v2283 = vld [vmem:[%s8 + $0x3e8] sm:$0xff]
    %v2284 = vld [vmem:[%s8 + $0x3f0] sm:$0xff]
    %v2285 = vld [vmem:[%s8 + $0x3f8] sm:$0xff]
    %v2286 = vld [vmem:[%s9] sm:$0xf]
    %v2288 = vlaneseq
    %v2289 = vshrl.u32 %v2288, 7
    %v2290 = vsub.s32 0, %v2289
    %v2291 = vrot.slane %v2286, %v2290
    %v2292 = vlaneseq
    %v2293 = vshrl.u32 %v2292, 7
    %v2294 = vsub.s32 1, %v2293
    %v2295 = vrot.slane %v2286, %v2294
    %v2296 = vlaneseq
    %v2297 = vshrl.u32 %v2296, 7
    %v2298 = vsub.s32 2, %v2297
    %v2299 = vrot.slane %v2286, %v2298
    %v2300 = vlaneseq
    %v2301 = vshrl.u32 %v2300, 7
    %v2302 = vsub.s32 3, %v2301
    %v2303 = vrot.slane %v2286, %v2302
    %v2436 = vunpack.c.l.b16 %v2158
    %v2437 = vunpack.c.h.b16 %v2158
    %v2438 = vunpack.c.l.b16 %v2159
    %v2439 = vunpack.c.h.b16 %v2159
    %v2440 = vunpack.c.l.b16 %v2160
    %v2441 = vunpack.c.h.b16 %v2160
    %v2442 = vunpack.c.l.b16 %v2161
    %v2443 = vunpack.c.h.b16 %v2161
    %v2444 = vunpack.c.l.b16 %v2162
    %v2445 = vunpack.c.h.b16 %v2162
    %v2446 = vunpack.c.l.b16 %v2163
    %v2447 = vunpack.c.h.b16 %v2163
    %v2448 = vunpack.c.l.b16 %v2164
    %v2449 = vunpack.c.h.b16 %v2164
    %v2450 = vunpack.c.l.b16 %v2165
    %v2451 = vunpack.c.h.b16 %v2165
    %v2452 = vunpack.c.l.b16 %v2166
    %v2453 = vunpack.c.h.b16 %v2166
    %v2454 = vunpack.c.l.b16 %v2167
    %v2455 = vunpack.c.h.b16 %v2167
    %v2456 = vunpack.c.l.b16 %v2168
    %v2457 = vunpack.c.h.b16 %v2168
    %v2458 = vunpack.c.l.b16 %v2169
    %v2459 = vunpack.c.h.b16 %v2169
    %v2460 = vunpack.c.l.b16 %v2170
    %v2461 = vunpack.c.h.b16 %v2170
    %v2462 = vunpack.c.l.b16 %v2171
    %v2463 = vunpack.c.h.b16 %v2171
    %v2464 = vunpack.c.l.b16 %v2172
    %v2465 = vunpack.c.h.b16 %v2172
    %v2466 = vunpack.c.l.b16 %v2173
    %v2467 = vunpack.c.h.b16 %v2173
    %v2468 = vunpack.c.l.b16 %v2174
    %v2469 = vunpack.c.h.b16 %v2174
    %v2470 = vunpack.c.l.b16 %v2175
    %v2471 = vunpack.c.h.b16 %v2175
    %v2472 = vunpack.c.l.b16 %v2176
    %v2473 = vunpack.c.h.b16 %v2176
    %v2474 = vunpack.c.l.b16 %v2177
    %v2475 = vunpack.c.h.b16 %v2177
    %v2476 = vunpack.c.l.b16 %v2178
    %v2477 = vunpack.c.h.b16 %v2178
    %v2478 = vunpack.c.l.b16 %v2179
    %v2479 = vunpack.c.h.b16 %v2179
    %v2480 = vunpack.c.l.b16 %v2180
    %v2481 = vunpack.c.h.b16 %v2180
    %v2482 = vunpack.c.l.b16 %v2181
    %v2483 = vunpack.c.h.b16 %v2181
    %v2484 = vunpack.c.l.b16 %v2182
    %v2485 = vunpack.c.h.b16 %v2182
    %v2486 = vunpack.c.l.b16 %v2183
    %v2487 = vunpack.c.h.b16 %v2183
    %v2488 = vunpack.c.l.b16 %v2184
    %v2489 = vunpack.c.h.b16 %v2184
    %v2490 = vunpack.c.l.b16 %v2185
    %v2491 = vunpack.c.h.b16 %v2185
    %v2492 = vunpack.c.l.b16 %v2186
    %v2493 = vunpack.c.h.b16 %v2186
    %v2494 = vunpack.c.l.b16 %v2187
    %v2495 = vunpack.c.h.b16 %v2187
    %v2496 = vunpack.c.l.b16 %v2188
    %v2497 = vunpack.c.h.b16 %v2188
    %v2498 = vunpack.c.l.b16 %v2189
    %v2499 = vunpack.c.h.b16 %v2189
    %v2500 = vunpack.c.l.b16 %v2190
    %v2501 = vunpack.c.h.b16 %v2190
    %v2502 = vunpack.c.l.b16 %v2191
    %v2503 = vunpack.c.h.b16 %v2191
    %v2504 = vunpack.c.l.b16 %v2192
    %v2505 = vunpack.c.h.b16 %v2192
    %v2506 = vunpack.c.l.b16 %v2193
    %v2507 = vunpack.c.h.b16 %v2193
    %v2508 = vunpack.c.l.b16 %v2194
    %v2509 = vunpack.c.h.b16 %v2194
    %v2510 = vunpack.c.l.b16 %v2195
    %v2511 = vunpack.c.h.b16 %v2195
    %v2512 = vunpack.c.l.b16 %v2196
    %v2513 = vunpack.c.h.b16 %v2196
    %v2514 = vunpack.c.l.b16 %v2197
    %v2515 = vunpack.c.h.b16 %v2197
    %v2516 = vunpack.c.l.b16 %v2198
    %v2517 = vunpack.c.h.b16 %v2198
    %v2518 = vunpack.c.l.b16 %v2199
    %v2519 = vunpack.c.h.b16 %v2199
    %v2520 = vunpack.c.l.b16 %v2200
    %v2521 = vunpack.c.h.b16 %v2200
    %v2522 = vunpack.c.l.b16 %v2201
    %v2523 = vunpack.c.h.b16 %v2201
    %v2524 = vunpack.c.l.b16 %v2202
    %v2525 = vunpack.c.h.b16 %v2202
    %v2526 = vunpack.c.l.b16 %v2203
    %v2527 = vunpack.c.h.b16 %v2203
    %v2528 = vunpack.c.l.b16 %v2204
    %v2529 = vunpack.c.h.b16 %v2204
    %v2530 = vunpack.c.l.b16 %v2205
    %v2531 = vunpack.c.h.b16 %v2205
    %v2532 = vunpack.c.l.b16 %v2206
    %v2533 = vunpack.c.h.b16 %v2206
    %v2534 = vunpack.c.l.b16 %v2207
    %v2535 = vunpack.c.h.b16 %v2207
    %v2536 = vunpack.c.l.b16 %v2208
    %v2537 = vunpack.c.h.b16 %v2208
    %v2538 = vunpack.c.l.b16 %v2209
    %v2539 = vunpack.c.h.b16 %v2209
    %v2540 = vunpack.c.l.b16 %v2210
    %v2541 = vunpack.c.h.b16 %v2210
    %v2542 = vunpack.c.l.b16 %v2211
    %v2543 = vunpack.c.h.b16 %v2211
    %v2544 = vunpack.c.l.b16 %v2212
    %v2545 = vunpack.c.h.b16 %v2212
    %v2546 = vunpack.c.l.b16 %v2213
    %v2547 = vunpack.c.h.b16 %v2213
    %v2548 = vunpack.c.l.b16 %v2214
    %v2549 = vunpack.c.h.b16 %v2214
    %v2550 = vunpack.c.l.b16 %v2215
    %v2551 = vunpack.c.h.b16 %v2215
    %v2552 = vunpack.c.l.b16 %v2216
    %v2553 = vunpack.c.h.b16 %v2216
    %v2554 = vunpack.c.l.b16 %v2217
    %v2555 = vunpack.c.h.b16 %v2217
    %v2556 = vunpack.c.l.b16 %v2218
    %v2557 = vunpack.c.h.b16 %v2218
    %v2558 = vunpack.c.l.b16 %v2219
    %v2559 = vunpack.c.h.b16 %v2219
    %v2560 = vunpack.c.l.b16 %v2220
    %v2561 = vunpack.c.h.b16 %v2220
    %v2562 = vunpack.c.l.b16 %v2221
    %v2563 = vunpack.c.h.b16 %v2221
    %v2564 = vunpack.c.l.b16 %v2222
    %v2565 = vunpack.c.h.b16 %v2222
    %v2566 = vunpack.c.l.b16 %v2223
    %v2567 = vunpack.c.h.b16 %v2223
    %v2568 = vunpack.c.l.b16 %v2224
    %v2569 = vunpack.c.h.b16 %v2224
    %v2570 = vunpack.c.l.b16 %v2225
    %v2571 = vunpack.c.h.b16 %v2225
    %v2572 = vunpack.c.l.b16 %v2226
    %v2573 = vunpack.c.h.b16 %v2226
    %v2574 = vunpack.c.l.b16 %v2227
    %v2575 = vunpack.c.h.b16 %v2227
    %v2576 = vunpack.c.l.b16 %v2228
    %v2577 = vunpack.c.h.b16 %v2228
    %v2578 = vunpack.c.l.b16 %v2229
    %v2579 = vunpack.c.h.b16 %v2229
    %v2580 = vunpack.c.l.b16 %v2230
    %v2581 = vunpack.c.h.b16 %v2230
    %v2582 = vunpack.c.l.b16 %v2231
    %v2583 = vunpack.c.h.b16 %v2231
    %v2584 = vunpack.c.l.b16 %v2232
    %v2585 = vunpack.c.h.b16 %v2232
    %v2586 = vunpack.c.l.b16 %v2233
    %v2587 = vunpack.c.h.b16 %v2233
    %v2588 = vunpack.c.l.b16 %v2234
    %v2589 = vunpack.c.h.b16 %v2234
    %v2590 = vunpack.c.l.b16 %v2235
    %v2591 = vunpack.c.h.b16 %v2235
    %v2592 = vunpack.c.l.b16 %v2236
    %v2593 = vunpack.c.h.b16 %v2236
    %v2594 = vunpack.c.l.b16 %v2237
    %v2595 = vunpack.c.h.b16 %v2237
    %v2596 = vunpack.c.l.b16 %v2238
    %v2597 = vunpack.c.h.b16 %v2238
    %v2598 = vunpack.c.l.b16 %v2239
    %v2599 = vunpack.c.h.b16 %v2239
    %v2600 = vunpack.c.l.b16 %v2240
    %v2601 = vunpack.c.h.b16 %v2240
    %v2602 = vunpack.c.l.b16 %v2241
    %v2603 = vunpack.c.h.b16 %v2241
    %v2604 = vunpack.c.l.b16 %v2242
    %v2605 = vunpack.c.h.b16 %v2242
    %v2606 = vunpack.c.l.b16 %v2243
    %v2607 = vunpack.c.h.b16 %v2243
    %v2608 = vunpack.c.l.b16 %v2244
    %v2609 = vunpack.c.h.b16 %v2244
    %v2610 = vunpack.c.l.b16 %v2245
    %v2611 = vunpack.c.h.b16 %v2245
    %v2612 = vunpack.c.l.b16 %v2246
    %v2613 = vunpack.c.h.b16 %v2246
    %v2614 = vunpack.c.l.b16 %v2247
    %v2615 = vunpack.c.h.b16 %v2247
    %v2616 = vunpack.c.l.b16 %v2248
    %v2617 = vunpack.c.h.b16 %v2248
    %v2618 = vunpack.c.l.b16 %v2249
    %v2619 = vunpack.c.h.b16 %v2249
    %v2620 = vunpack.c.l.b16 %v2250
    %v2621 = vunpack.c.h.b16 %v2250
    %v2622 = vunpack.c.l.b16 %v2251
    %v2623 = vunpack.c.h.b16 %v2251
    %v2624 = vunpack.c.l.b16 %v2252
    %v2625 = vunpack.c.h.b16 %v2252
    %v2626 = vunpack.c.l.b16 %v2253
    %v2627 = vunpack.c.h.b16 %v2253
    %v2628 = vunpack.c.l.b16 %v2254
    %v2629 = vunpack.c.h.b16 %v2254
    %v2630 = vunpack.c.l.b16 %v2255
    %v2631 = vunpack.c.h.b16 %v2255
    %v2632 = vunpack.c.l.b16 %v2256
    %v2633 = vunpack.c.h.b16 %v2256
    %v2634 = vunpack.c.l.b16 %v2257
    %v2635 = vunpack.c.h.b16 %v2257
    %v2636 = vunpack.c.l.b16 %v2258
    %v2637 = vunpack.c.h.b16 %v2258
    %v2638 = vunpack.c.l.b16 %v2259
    %v2639 = vunpack.c.h.b16 %v2259
    %v2640 = vunpack.c.l.b16 %v2260
    %v2641 = vunpack.c.h.b16 %v2260
    %v2642 = vunpack.c.l.b16 %v2261
    %v2643 = vunpack.c.h.b16 %v2261
    %v2644 = vunpack.c.l.b16 %v2262
    %v2645 = vunpack.c.h.b16 %v2262
    %v2646 = vunpack.c.l.b16 %v2263
    %v2647 = vunpack.c.h.b16 %v2263
    %v2648 = vunpack.c.l.b16 %v2264
    %v2649 = vunpack.c.h.b16 %v2264
    %v2650 = vunpack.c.l.b16 %v2265
    %v2651 = vunpack.c.h.b16 %v2265
    %v2652 = vunpack.c.l.b16 %v2266
    %v2653 = vunpack.c.h.b16 %v2266
    %v2654 = vunpack.c.l.b16 %v2267
    %v2655 = vunpack.c.h.b16 %v2267
    %v2656 = vunpack.c.l.b16 %v2268
    %v2657 = vunpack.c.h.b16 %v2268
    %v2658 = vunpack.c.l.b16 %v2269
    %v2659 = vunpack.c.h.b16 %v2269
    %v2660 = vunpack.c.l.b16 %v2270
    %v2661 = vunpack.c.h.b16 %v2270
    %v2662 = vunpack.c.l.b16 %v2271
    %v2663 = vunpack.c.h.b16 %v2271
    %v2664 = vunpack.c.l.b16 %v2272
    %v2665 = vunpack.c.h.b16 %v2272
    %v2666 = vunpack.c.l.b16 %v2273
    %v2667 = vunpack.c.h.b16 %v2273
    %v2668 = vunpack.c.l.b16 %v2274
    %v2669 = vunpack.c.h.b16 %v2274
    %v2670 = vunpack.c.l.b16 %v2275
    %v2671 = vunpack.c.h.b16 %v2275
    %v2672 = vunpack.c.l.b16 %v2276
    %v2673 = vunpack.c.h.b16 %v2276
    %v2674 = vunpack.c.l.b16 %v2277
    %v2675 = vunpack.c.h.b16 %v2277
    %v2676 = vunpack.c.l.b16 %v2278
    %v2677 = vunpack.c.h.b16 %v2278
    %v2678 = vunpack.c.l.b16 %v2279
    %v2679 = vunpack.c.h.b16 %v2279
    %v2680 = vunpack.c.l.b16 %v2280
    %v2681 = vunpack.c.h.b16 %v2280
    %v2682 = vunpack.c.l.b16 %v2281
    %v2683 = vunpack.c.h.b16 %v2281
    %v2684 = vunpack.c.l.b16 %v2282
    %v2685 = vunpack.c.h.b16 %v2282
    %v2686 = vunpack.c.l.b16 %v2283
    %v2687 = vunpack.c.h.b16 %v2283
    %v2688 = vunpack.c.l.b16 %v2284
    %v2689 = vunpack.c.h.b16 %v2284
    %v2690 = vunpack.c.l.b16 %v2285
    %v2691 = vunpack.c.h.b16 %v2285
    %v2692 = vpack.c.b16 %v2440, %v2436
    %v2693 = vpack.c.b16 %v2441, %v2437
    %v2694 = vpack.c.b16 %v2442, %v2438
    %v2695 = vpack.c.b16 %v2443, %v2439
    %v2696 = vpack.c.b16 %v2448, %v2444
    %v2697 = vpack.c.b16 %v2449, %v2445
    %v2698 = vpack.c.b16 %v2450, %v2446
    %v2699 = vpack.c.b16 %v2451, %v2447
    %v2700 = vpack.c.b16 %v2456, %v2452
    %v2701 = vpack.c.b16 %v2457, %v2453
    %v2702 = vpack.c.b16 %v2458, %v2454
    %v2703 = vpack.c.b16 %v2459, %v2455
    %v2704 = vpack.c.b16 %v2464, %v2460
    %v2705 = vpack.c.b16 %v2465, %v2461
    %v2706 = vpack.c.b16 %v2466, %v2462
    %v2707 = vpack.c.b16 %v2467, %v2463
    %v2708 = vpack.c.b16 %v2472, %v2468
    %v2709 = vpack.c.b16 %v2473, %v2469
    %v2710 = vpack.c.b16 %v2474, %v2470
    %v2711 = vpack.c.b16 %v2475, %v2471
    %v2712 = vpack.c.b16 %v2480, %v2476
    %v2713 = vpack.c.b16 %v2481, %v2477
    %v2714 = vpack.c.b16 %v2482, %v2478
    %v2715 = vpack.c.b16 %v2483, %v2479
    %v2716 = vpack.c.b16 %v2488, %v2484
    %v2717 = vpack.c.b16 %v2489, %v2485
    %v2718 = vpack.c.b16 %v2490, %v2486
    %v2719 = vpack.c.b16 %v2491, %v2487
    %v2720 = vpack.c.b16 %v2496, %v2492
    %v2721 = vpack.c.b16 %v2497, %v2493
    %v2722 = vpack.c.b16 %v2498, %v2494
    %v2723 = vpack.c.b16 %v2499, %v2495
    %v2724 = vpack.c.b16 %v2504, %v2500
    %v2725 = vpack.c.b16 %v2505, %v2501
    %v2726 = vpack.c.b16 %v2506, %v2502
    %v2727 = vpack.c.b16 %v2507, %v2503
    %v2728 = vpack.c.b16 %v2512, %v2508
    %v2729 = vpack.c.b16 %v2513, %v2509
    %v2730 = vpack.c.b16 %v2514, %v2510
    %v2731 = vpack.c.b16 %v2515, %v2511
    %v2732 = vpack.c.b16 %v2520, %v2516
    %v2733 = vpack.c.b16 %v2521, %v2517
    %v2734 = vpack.c.b16 %v2522, %v2518
    %v2735 = vpack.c.b16 %v2523, %v2519
    %v2736 = vpack.c.b16 %v2528, %v2524
    %v2737 = vpack.c.b16 %v2529, %v2525
    %v2738 = vpack.c.b16 %v2530, %v2526
    %v2739 = vpack.c.b16 %v2531, %v2527
    %v2740 = vpack.c.b16 %v2536, %v2532
    %v2741 = vpack.c.b16 %v2537, %v2533
    %v2742 = vpack.c.b16 %v2538, %v2534
    %v2743 = vpack.c.b16 %v2539, %v2535
    %v2744 = vpack.c.b16 %v2544, %v2540
    %v2745 = vpack.c.b16 %v2545, %v2541
    %v2746 = vpack.c.b16 %v2546, %v2542
    %v2747 = vpack.c.b16 %v2547, %v2543
    %v2748 = vpack.c.b16 %v2552, %v2548
    %v2749 = vpack.c.b16 %v2553, %v2549
    %v2750 = vpack.c.b16 %v2554, %v2550
    %v2751 = vpack.c.b16 %v2555, %v2551
    %v2752 = vpack.c.b16 %v2560, %v2556
    %v2753 = vpack.c.b16 %v2561, %v2557
    %v2754 = vpack.c.b16 %v2562, %v2558
    %v2755 = vpack.c.b16 %v2563, %v2559
    %v2756 = vpack.c.b16 %v2568, %v2564
    %v2757 = vpack.c.b16 %v2569, %v2565
    %v2758 = vpack.c.b16 %v2570, %v2566
    %v2759 = vpack.c.b16 %v2571, %v2567
    %v2760 = vpack.c.b16 %v2576, %v2572
    %v2761 = vpack.c.b16 %v2577, %v2573
    %v2762 = vpack.c.b16 %v2578, %v2574
    %v2763 = vpack.c.b16 %v2579, %v2575
    %v2764 = vpack.c.b16 %v2584, %v2580
    %v2765 = vpack.c.b16 %v2585, %v2581
    %v2766 = vpack.c.b16 %v2586, %v2582
    %v2767 = vpack.c.b16 %v2587, %v2583
    %v2768 = vpack.c.b16 %v2592, %v2588
    %v2769 = vpack.c.b16 %v2593, %v2589
    %v2770 = vpack.c.b16 %v2594, %v2590
    %v2771 = vpack.c.b16 %v2595, %v2591
    %v2772 = vpack.c.b16 %v2600, %v2596
    %v2773 = vpack.c.b16 %v2601, %v2597
    %v2774 = vpack.c.b16 %v2602, %v2598
    %v2775 = vpack.c.b16 %v2603, %v2599
    %v2776 = vpack.c.b16 %v2608, %v2604
    %v2777 = vpack.c.b16 %v2609, %v2605
    %v2778 = vpack.c.b16 %v2610, %v2606
    %v2779 = vpack.c.b16 %v2611, %v2607
    %v2780 = vpack.c.b16 %v2616, %v2612
    %v2781 = vpack.c.b16 %v2617, %v2613
    %v2782 = vpack.c.b16 %v2618, %v2614
    %v2783 = vpack.c.b16 %v2619, %v2615
    %v2784 = vpack.c.b16 %v2624, %v2620
    %v2785 = vpack.c.b16 %v2625, %v2621
    %v2786 = vpack.c.b16 %v2626, %v2622
    %v2787 = vpack.c.b16 %v2627, %v2623
    %v2788 = vpack.c.b16 %v2632, %v2628
    %v2789 = vpack.c.b16 %v2633, %v2629
    %v2790 = vpack.c.b16 %v2634, %v2630
    %v2791 = vpack.c.b16 %v2635, %v2631
    %v2792 = vpack.c.b16 %v2640, %v2636
    %v2793 = vpack.c.b16 %v2641, %v2637
    %v2794 = vpack.c.b16 %v2642, %v2638
    %v2795 = vpack.c.b16 %v2643, %v2639
    %v2796 = vpack.c.b16 %v2648, %v2644
    %v2797 = vpack.c.b16 %v2649, %v2645
    %v2798 = vpack.c.b16 %v2650, %v2646
    %v2799 = vpack.c.b16 %v2651, %v2647
    %v2800 = vpack.c.b16 %v2656, %v2652
    %v2801 = vpack.c.b16 %v2657, %v2653
    %v2802 = vpack.c.b16 %v2658, %v2654
    %v2803 = vpack.c.b16 %v2659, %v2655
    %v2804 = vpack.c.b16 %v2664, %v2660
    %v2805 = vpack.c.b16 %v2665, %v2661
    %v2806 = vpack.c.b16 %v2666, %v2662
    %v2807 = vpack.c.b16 %v2667, %v2663
    %v2808 = vpack.c.b16 %v2672, %v2668
    %v2809 = vpack.c.b16 %v2673, %v2669
    %v2810 = vpack.c.b16 %v2674, %v2670
    %v2811 = vpack.c.b16 %v2675, %v2671
    %v2812 = vpack.c.b16 %v2680, %v2676
    %v2813 = vpack.c.b16 %v2681, %v2677
    %v2814 = vpack.c.b16 %v2682, %v2678
    %v2815 = vpack.c.b16 %v2683, %v2679
    %v2816 = vpack.c.b16 %v2688, %v2684
    %v2817 = vpack.c.b16 %v2689, %v2685
    %v2818 = vpack.c.b16 %v2690, %v2686
    %v2819 = vpack.c.b16 %v2691, %v2687
    %2948 = vmatprep.subr.bf16.mxu0 %v2693
    %2949 = vmatpush1.bf16.msra.mxu0 %v2692
    %2950 = vmatprep.subr.bf16.mxu0 %v2697
    %2951 = vmatpush1.bf16.msra.mxu0 %v2696
    %2952 = vmatprep.subr.bf16.mxu0 %v2701
    %2953 = vmatpush1.bf16.msra.mxu0 %v2700
    %2954 = vmatprep.subr.bf16.mxu0 %v2705
    %2955 = vmatpush1.bf16.msra.mxu0 %v2704
    %2956 = vmatprep.subr.bf16.mxu0 %v2709
    %2957 = vmatpush1.bf16.msra.mxu0 %v2708
    %2958 = vmatprep.subr.bf16.mxu0 %v2713
    %2959 = vmatpush1.bf16.msra.mxu0 %v2712
    %2960 = vmatprep.subr.bf16.mxu0 %v2717
    %2961 = vmatpush1.bf16.msra.mxu0 %v2716
    %2962 = vmatprep.subr.bf16.mxu0 %v2721
    %2963 = vmatpush1.bf16.msra.mxu0 %v2720
    %2964 = vmatprep.subr.bf16.mxu0 %v2725
    %2965 = vmatpush1.bf16.msra.mxu0 %v2724
    %2966 = vmatprep.subr.bf16.mxu0 %v2729
    %2967 = vmatpush1.bf16.msra.mxu0 %v2728
    %2968 = vmatprep.subr.bf16.mxu0 %v2733
    %2969 = vmatpush1.bf16.msra.mxu0 %v2732
    %2970 = vmatprep.subr.bf16.mxu0 %v2737
    %2971 = vmatpush1.bf16.msra.mxu0 %v2736
    %2972 = vmatprep.subr.bf16.mxu0 %v2741
    %2973 = vmatpush1.bf16.msra.mxu0 %v2740
    %2974 = vmatprep.subr.bf16.mxu0 %v2745
    %2975 = vmatpush1.bf16.msra.mxu0 %v2744
    %2976 = vmatprep.subr.bf16.mxu0 %v2749
    %2977 = vmatpush1.bf16.msra.mxu0 %v2748
    %2978 = vmatprep.subr.bf16.mxu0 %v2753
    %2979 = vmatpush1.bf16.msra.mxu0 %v2752
    %2980 = vmatprep.mubr.bf16.mxu0 %v2155
    %2981 = vmatmul.mubr.bf16.gmra.mrb[0].mxu0 %v2154
    %v2982 = vpop.f32.mrb[0].mxu0
    %v2983 = vadd.f32 %v2291, %v2982
    %v2984 = vpop.f32.mrb[0].mxu0
    %v2985 = vadd.f32 %v2295, %v2984
    %v2986 = vpop.f32.mrb[0].mxu0
    %v2987 = vpop.f32.mrb[0].mxu0
    %2988 = vdwg.mxu0
    %2989 = vmatprep.subr.bf16.mxu0 %v2757
    %2990 = vmatpush1.bf16.msra.mxu0 %v2756
    %2991 = vmatprep.subr.bf16.mxu0 %v2761
    %2992 = vmatpush1.bf16.msra.mxu0 %v2760
    %2993 = vmatprep.subr.bf16.mxu0 %v2765
    %2994 = vmatpush1.bf16.msra.mxu0 %v2764
    %2995 = vmatprep.subr.bf16.mxu0 %v2769
    %2996 = vmatpush1.bf16.msra.mxu0 %v2768
    %2997 = vmatprep.subr.bf16.mxu0 %v2773
    %2998 = vmatpush1.bf16.msra.mxu0 %v2772
    %2999 = vmatprep.subr.bf16.mxu0 %v2777
    %3000 = vmatpush1.bf16.msra.mxu0 %v2776
    %3001 = vmatprep.subr.bf16.mxu0 %v2781
    %3002 = vmatpush1.bf16.msra.mxu0 %v2780
    %3003 = vmatprep.subr.bf16.mxu0 %v2785
    %3004 = vmatpush1.bf16.msra.mxu0 %v2784
    %3005 = vmatprep.subr.bf16.mxu0 %v2789
    %3006 = vmatpush1.bf16.msra.mxu0 %v2788
    %3007 = vmatprep.subr.bf16.mxu0 %v2793
    %3008 = vmatpush1.bf16.msra.mxu0 %v2792
    %3009 = vmatprep.subr.bf16.mxu0 %v2797
    %3010 = vmatpush1.bf16.msra.mxu0 %v2796
    %3011 = vmatprep.subr.bf16.mxu0 %v2801
    %3012 = vmatpush1.bf16.msra.mxu0 %v2800
    %3013 = vmatprep.subr.bf16.mxu0 %v2805
    %3014 = vmatpush1.bf16.msra.mxu0 %v2804
    %3015 = vmatprep.subr.bf16.mxu0 %v2809
    %3016 = vmatpush1.bf16.msra.mxu0 %v2808
    %3017 = vmatprep.subr.bf16.mxu0 %v2813
    %3018 = vmatpush1.bf16.msra.mxu0 %v2812
    %3019 = vmatprep.subr.bf16.mxu0 %v2817
    %3020 = vmatpush1.bf16.msra.mxu0 %v2816
    %3021 = vmatprep.mubr.bf16.mxu0 %v2157
    %3022 = vmatmul.mubr.bf16.gmra.mrb[0].mxu0 %v2156
    %v3023 = vpop.f32.mrb[0].mxu0
    %v3024 = vadd.f32 %v2983, %v3023
    %v3025 = vpop.f32.mrb[0].mxu0
    %v3026 = vadd.f32 %v2985, %v3025
    %v3027 = vpop.f32.mrb[0].mxu0
    %v3028 = vpop.f32.mrb[0].mxu0
    %3029 = vdwg.mxu0
    %3030 = vmatprep.subr.bf16.mxu0 %v2695
    %3031 = vmatpush1.bf16.msra.mxu0 %v2694
    %3032 = vmatprep.subr.bf16.mxu0 %v2699
    %3033 = vmatpush1.bf16.msra.mxu0 %v2698
    %3034 = vmatprep.subr.bf16.mxu0 %v2703
    %3035 = vmatpush1.bf16.msra.mxu0 %v2702
    %3036 = vmatprep.subr.bf16.mxu0 %v2707
    %3037 = vmatpush1.bf16.msra.mxu0 %v2706
    %3038 = vmatprep.subr.bf16.mxu0 %v2711
    %3039 = vmatpush1.bf16.msra.mxu0 %v2710
    %3040 = vmatprep.subr.bf16.mxu0 %v2715
    %3041 = vmatpush1.bf16.msra.mxu0 %v2714
    %3042 = vmatprep.subr.bf16.mxu0 %v2719
    %3043 = vmatpush1.bf16.msra.mxu0 %v2718
    %3044 = vmatprep.subr.bf16.mxu0 %v2723
    %3045 = vmatpush1.bf16.msra.mxu0 %v2722
    %3046 = vmatprep.subr.bf16.mxu0 %v2727
    %3047 = vmatpush1.bf16.msra.mxu0 %v2726
    %3048 = vmatprep.subr.bf16.mxu0 %v2731
    %3049 = vmatpush1.bf16.msra.mxu0 %v2730
    %3050 = vmatprep.subr.bf16.mxu0 %v2735
    %3051 = vmatpush1.bf16.msra.mxu0 %v2734
    %3052 = vmatprep.subr.bf16.mxu0 %v2739
    %3053 = vmatpush1.bf16.msra.mxu0 %v2738
    %3054 = vmatprep.subr.bf16.mxu0 %v2743
    %3055 = vmatpush1.bf16.msra.mxu0 %v2742
    %3056 = vmatprep.subr.bf16.mxu0 %v2747
    %3057 = vmatpush1.bf16.msra.mxu0 %v2746
    %3058 = vmatprep.subr.bf16.mxu0 %v2751
    %3059 = vmatpush1.bf16.msra.mxu0 %v2750
    %3060 = vmatprep.subr.bf16.mxu0 %v2755
    %3061 = vmatpush1.bf16.msra.mxu0 %v2754
    %3062 = vmatprep.mubr.bf16.mxu0 %v2155
    %3063 = vmatmul.mubr.bf16.gmra.mrb[0].mxu0 %v2154
    %v3064 = vpop.f32.mrb[0].mxu0
    %v3065 = vadd.f32 %v2299, %v3064
    %v3066 = vpop.f32.mrb[0].mxu0
    %v3067 = vadd.f32 %v2303, %v3066
    %v3068 = vpop.f32.mrb[0].mxu0
    %v3069 = vpop.f32.mrb[0].mxu0
    %3070 = vdwg.mxu0
    %3071 = vmatprep.subr.bf16.mxu0 %v2759
    %3072 = vmatpush1.bf16.msra.mxu0 %v2758
    %3073 = vmatprep.subr.bf16.mxu0 %v2763
    %3074 = vmatpush1.bf16.msra.mxu0 %v2762
    %3075 = vmatprep.subr.bf16.mxu0 %v2767
    %3076 = vmatpush1.bf16.msra.mxu0 %v2766
    %3077 = vmatprep.subr.bf16.mxu0 %v2771
    %3078 = vmatpush1.bf16.msra.mxu0 %v2770
    %3079 = vmatprep.subr.bf16.mxu0 %v2775
    %3080 = vmatpush1.bf16.msra.mxu0 %v2774
    %3081 = vmatprep.subr.bf16.mxu0 %v2779
    %3082 = vmatpush1.bf16.msra.mxu0 %v2778
    %3083 = vmatprep.subr.bf16.mxu0 %v2783
    %3084 = vmatpush1.bf16.msra.mxu0 %v2782
    %3085 = vmatprep.subr.bf16.mxu0 %v2787
    %3086 = vmatpush1.bf16.msra.mxu0 %v2786
    %3087 = vmatprep.subr.bf16.mxu0 %v2791
    %3088 = vmatpush1.bf16.msra.mxu0 %v2790
    %3089 = vmatprep.subr.bf16.mxu0 %v2795
    %3090 = vmatpush1.bf16.msra.mxu0 %v2794
    %3091 = vmatprep.subr.bf16.mxu0 %v2799
    %3092 = vmatpush1.bf16.msra.mxu0 %v2798
    %3093 = vmatprep.subr.bf16.mxu0 %v2803
    %3094 = vmatpush1.bf16.msra.mxu0 %v2802
    %3095 = vmatprep.subr.bf16.mxu0 %v2807
    %3096 = vmatpush1.bf16.msra.mxu0 %v2806
    %3097 = vmatprep.subr.bf16.mxu0 %v2811
    %3098 = vmatpush1.bf16.msra.mxu0 %v2810
    %3099 = vmatprep.subr.bf16.mxu0 %v2815
    %3100 = vmatpush1.bf16.msra.mxu0 %v2814
    %3101 = vmatprep.subr.bf16.mxu0 %v2819
    %3102 = vmatpush1.bf16.msra.mxu0 %v2818
    %3103 = vmatprep.mubr.bf16.mxu0 %v2157
    %3104 = vmatmul.mubr.bf16.gmra.mrb[0].mxu0 %v2156
    %v3105 = vpop.f32.mrb[0].mxu0
    %v3106 = vadd.f32 %v3065, %v3105
    %v3107 = vpop.f32.mrb[0].mxu0
    %v3108 = vadd.f32 %v3067, %v3107
    %v3109 = vpop.f32.mrb[0].mxu0
    %v3110 = vpop.f32.mrb[0].mxu0
    %3111 = vdwg.mxu0
    %vm3112 = vcmp.ge.f32.partialorder %v3024, 0.0
    %vm3113 = vcmp.ge.f32.partialorder %v3026, 0.0
    %vm3114 = vcmp.ge.f32.partialorder %v3106, 0.0
    %vm3115 = vcmp.ge.f32.partialorder %v3108, 0.0
    %v3116 = vstv %s2153
    %v3117 = vmul.f32 %v3116, %v3024
    %v3118 = vmul.f32 %v3116, %v3026
    %v3119 = vmul.f32 %v3116, %v3106
    %v3120 = vmul.f32 %v3116, %v3108
    %v3121 = vsel %vm3112, %v3024, %v3117
    %v3122 = vsel %vm3113, %v3026, %v3118
    %v3123 = vsel %vm3114, %v3106, %v3119
    %v3124 = vsel %vm3115, %v3108, %v3120
    %s3125 = sld [smem:[#allocation2 + $0x4]]
    %v3126 = vpack.c.bf16 %v3121, %v3121
    %v3127 = vpack.c.bf16 %v3122, %v3122
    %v3128 = vpack.c.bf16 %v3123, %v3123
    %v3129 = vpack.c.bf16 %v3124, %v3124
    %v3130 = vld [vmem:[%s10] sm:$0xff]
    %v3131 = vld [vmem:[%s10 + $0x8] sm:$0xff]
    %v3132 = vld [vmem:[%s10 + $0x10] sm:$0xff]
    %v3133 = vld [vmem:[%s10 + $0x18] sm:$0xff]
    %v3134 = vld [vmem:[%s10 + $0x20] sm:$0xff]
    %v3135 = vld [vmem:[%s10 + $0x28] sm:$0xff]
    %v3136 = vld [vmem:[%s10 + $0x30] sm:$0xff]
    %v3137 = vld [vmem:[%s10 + $0x38] sm:$0xff]
    %v3138 = vld [vmem:[%s10 + $0x40] sm:$0xff]
    %v3139 = vld [vmem:[%s10 + $0x48] sm:$0xff]
    %v3140 = vld [vmem:[%s10 + $0x50] sm:$0xff]
    %v3141 = vld [vmem:[%s10 + $0x58] sm:$0xff]
    %v3142 = vld [vmem:[%s10 + $0x60] sm:$0xff]
    %v3143 = vld [vmem:[%s10 + $0x68] sm:$0xff]
    %v3144 = vld [vmem:[%s10 + $0x70] sm:$0xff]
    %v3145 = vld [vmem:[%s10 + $0x78] sm:$0xff]
    %v3146 = vld [vmem:[%s10 + $0x80] sm:$0xff]
    %v3147 = vld [vmem:[%s10 + $0x88] sm:$0xff]
    %v3148 = vld [vmem:[%s10 + $0x90] sm:$0xff]
    %v3149 = vld [vmem:[%s10 + $0x98] sm:$0xff]
    %v3150 = vld [vmem:[%s10 + $0xa0] sm:$0xff]
    %v3151 = vld [vmem:[%s10 + $0xa8] sm:$0xff]
    %v3152 = vld [vmem:[%s10 + $0xb0] sm:$0xff]
    %v3153 = vld [vmem:[%s10 + $0xb8] sm:$0xff]
    %v3154 = vld [vmem:[%s10 + $0xc0] sm:$0xff]
    %v3155 = vld [vmem:[%s10 + $0xc8] sm:$0xff]
    %v3156 = vld [vmem:[%s10 + $0xd0] sm:$0xff]
    %v3157 = vld [vmem:[%s10 + $0xd8] sm:$0xff]
    %v3158 = vld [vmem:[%s10 + $0xe0] sm:$0xff]
    %v3159 = vld [vmem:[%s10 + $0xe8] sm:$0xff]
    %v3160 = vld [vmem:[%s10 + $0xf0] sm:$0xff]
    %v3161 = vld [vmem:[%s10 + $0xf8] sm:$0xff]
    %v3162 = vld [vmem:[%s10 + $0x100] sm:$0xff]
    %v3163 = vld [vmem:[%s10 + $0x108] sm:$0xff]
    %v3164 = vld [vmem:[%s10 + $0x110] sm:$0xff]
    %v3165 = vld [vmem:[%s10 + $0x118] sm:$0xff]
    %v3166 = vld [vmem:[%s10 + $0x120] sm:$0xff]
    %v3167 = vld [vmem:[%s10 + $0x128] sm:$0xff]
    %v3168 = vld [vmem:[%s10 + $0x130] sm:$0xff]
    %v3169 = vld [vmem:[%s10 + $0x138] sm:$0xff]
    %v3170 = vld [vmem:[%s10 + $0x140] sm:$0xff]
    %v3171 = vld [vmem:[%s10 + $0x148] sm:$0xff]
    %v3172 = vld [vmem:[%s10 + $0x150] sm:$0xff]
    %v3173 = vld [vmem:[%s10 + $0x158] sm:$0xff]
    %v3174 = vld [vmem:[%s10 + $0x160] sm:$0xff]
    %v3175 = vld [vmem:[%s10 + $0x168] sm:$0xff]
    %v3176 = vld [vmem:[%s10 + $0x170] sm:$0xff]
    %v3177 = vld [vmem:[%s10 + $0x178] sm:$0xff]
    %v3178 = vld [vmem:[%s10 + $0x180] sm:$0xff]
    %v3179 = vld [vmem:[%s10 + $0x188] sm:$0xff]
    %v3180 = vld [vmem:[%s10 + $0x190] sm:$0xff]
    %v3181 = vld [vmem:[%s10 + $0x198] sm:$0xff]
    %v3182 = vld [vmem:[%s10 + $0x1a0] sm:$0xff]
    %v3183 = vld [vmem:[%s10 + $0x1a8] sm:$0xff]
    %v3184 = vld [vmem:[%s10 + $0x1b0] sm:$0xff]
    %v3185 = vld [vmem:[%s10 + $0x1b8] sm:$0xff]
    %v3186 = vld [vmem:[%s10 + $0x1c0] sm:$0xff]
    %v3187 = vld [vmem:[%s10 + $0x1c8] sm:$0xff]
    %v3188 = vld [vmem:[%s10 + $0x1d0] sm:$0xff]
    %v3189 = vld [vmem:[%s10 + $0x1d8] sm:$0xff]
    %v3190 = vld [vmem:[%s10 + $0x1e0] sm:$0xff]
    %v3191 = vld [vmem:[%s10 + $0x1e8] sm:$0xff]
    %v3192 = vld [vmem:[%s10 + $0x1f0] sm:$0xff]
    %v3193 = vld [vmem:[%s10 + $0x1f8] sm:$0xff]
    %v3194 = vld [vmem:[%s10 + $0x200] sm:$0xff]
    %v3195 = vld [vmem:[%s10 + $0x208] sm:$0xff]
    %v3196 = vld [vmem:[%s10 + $0x210] sm:$0xff]
    %v3197 = vld [vmem:[%s10 + $0x218] sm:$0xff]
    %v3198 = vld [vmem:[%s10 + $0x220] sm:$0xff]
    %v3199 = vld [vmem:[%s10 + $0x228] sm:$0xff]
    %v3200 = vld [vmem:[%s10 + $0x230] sm:$0xff]
    %v3201 = vld [vmem:[%s10 + $0x238] sm:$0xff]
    %v3202 = vld [vmem:[%s10 + $0x240] sm:$0xff]
    %v3203 = vld [vmem:[%s10 + $0x248] sm:$0xff]
    %v3204 = vld [vmem:[%s10 + $0x250] sm:$0xff]
    %v3205 = vld [vmem:[%s10 + $0x258] sm:$0xff]
    %v3206 = vld [vmem:[%s10 + $0x260] sm:$0xff]
    %v3207 = vld [vmem:[%s10 + $0x268] sm:$0xff]
    %v3208 = vld [vmem:[%s10 + $0x270] sm:$0xff]
    %v3209 = vld [vmem:[%s10 + $0x278] sm:$0xff]
    %v3210 = vld [vmem:[%s10 + $0x280] sm:$0xff]
    %v3211 = vld [vmem:[%s10 + $0x288] sm:$0xff]
    %v3212 = vld [vmem:[%s10 + $0x290] sm:$0xff]
    %v3213 = vld [vmem:[%s10 + $0x298] sm:$0xff]
    %v3214 = vld [vmem:[%s10 + $0x2a0] sm:$0xff]
    %v3215 = vld [vmem:[%s10 + $0x2a8] sm:$0xff]
    %v3216 = vld [vmem:[%s10 + $0x2b0] sm:$0xff]
    %v3217 = vld [vmem:[%s10 + $0x2b8] sm:$0xff]
    %v3218 = vld [vmem:[%s10 + $0x2c0] sm:$0xff]
    %v3219 = vld [vmem:[%s10 + $0x2c8] sm:$0xff]
    %v3220 = vld [vmem:[%s10 + $0x2d0] sm:$0xff]
    %v3221 = vld [vmem:[%s10 + $0x2d8] sm:$0xff]
    %v3222 = vld [vmem:[%s10 + $0x2e0] sm:$0xff]
    %v3223 = vld [vmem:[%s10 + $0x2e8] sm:$0xff]
    %v3224 = vld [vmem:[%s10 + $0x2f0] sm:$0xff]
    %v3225 = vld [vmem:[%s10 + $0x2f8] sm:$0xff]
    %v3226 = vld [vmem:[%s10 + $0x300] sm:$0xff]
    %v3227 = vld [vmem:[%s10 + $0x308] sm:$0xff]
    %v3228 = vld [vmem:[%s10 + $0x310] sm:$0xff]
    %v3229 = vld [vmem:[%s10 + $0x318] sm:$0xff]
    %v3230 = vld [vmem:[%s10 + $0x320] sm:$0xff]
    %v3231 = vld [vmem:[%s10 + $0x328] sm:$0xff]
    %v3232 = vld [vmem:[%s10 + $0x330] sm:$0xff]
    %v3233 = vld [vmem:[%s10 + $0x338] sm:$0xff]
    %v3234 = vld [vmem:[%s10 + $0x340] sm:$0xff]
    %v3235 = vld [vmem:[%s10 + $0x348] sm:$0xff]
    %v3236 = vld [vmem:[%s10 + $0x350] sm:$0xff]
    %v3237 = vld [vmem:[%s10 + $0x358] sm:$0xff]
    %v3238 = vld [vmem:[%s10 + $0x360] sm:$0xff]
    %v3239 = vld [vmem:[%s10 + $0x368] sm:$0xff]
    %v3240 = vld [vmem:[%s10 + $0x370] sm:$0xff]
    %v3241 = vld [vmem:[%s10 + $0x378] sm:$0xff]
    %v3242 = vld [vmem:[%s10 + $0x380] sm:$0xff]
    %v3243 = vld [vmem:[%s10 + $0x388] sm:$0xff]
    %v3244 = vld [vmem:[%s10 + $0x390] sm:$0xff]
    %v3245 = vld [vmem:[%s10 + $0x398] sm:$0xff]
    %v3246 = vld [vmem:[%s10 + $0x3a0] sm:$0xff]
    %v3247 = vld [vmem:[%s10 + $0x3a8] sm:$0xff]
    %v3248 = vld [vmem:[%s10 + $0x3b0] sm:$0xff]
    %v3249 = vld [vmem:[%s10 + $0x3b8] sm:$0xff]
    %v3250 = vld [vmem:[%s10 + $0x3c0] sm:$0xff]
    %v3251 = vld [vmem:[%s10 + $0x3c8] sm:$0xff]
    %v3252 = vld [vmem:[%s10 + $0x3d0] sm:$0xff]
    %v3253 = vld [vmem:[%s10 + $0x3d8] sm:$0xff]
    %v3254 = vld [vmem:[%s10 + $0x3e0] sm:$0xff]
    %v3255 = vld [vmem:[%s10 + $0x3e8] sm:$0xff]
    %v3256 = vld [vmem:[%s10 + $0x3f0] sm:$0xff]
    %v3257 = vld [vmem:[%s10 + $0x3f8] sm:$0xff]
    %v3258 = vld [vmem:[%s11] sm:$0xf]
    %v3260 = vlaneseq
    %v3261 = vshrl.u32 %v3260, 7
    %v3262 = vsub.s32 0, %v3261
    %v3263 = vrot.slane %v3258, %v3262
    %v3264 = vlaneseq
    %v3265 = vshrl.u32 %v3264, 7
    %v3266 = vsub.s32 1, %v3265
    %v3267 = vrot.slane %v3258, %v3266
    %v3268 = vlaneseq
    %v3269 = vshrl.u32 %v3268, 7
    %v3270 = vsub.s32 2, %v3269
    %v3271 = vrot.slane %v3258, %v3270
    %v3272 = vlaneseq
    %v3273 = vshrl.u32 %v3272, 7
    %v3274 = vsub.s32 3, %v3273
    %v3275 = vrot.slane %v3258, %v3274
    %v3408 = vunpack.c.l.b16 %v3130
    %v3409 = vunpack.c.h.b16 %v3130
    %v3410 = vunpack.c.l.b16 %v3131
    %v3411 = vunpack.c.h.b16 %v3131
    %v3412 = vunpack.c.l.b16 %v3132
    %v3413 = vunpack.c.h.b16 %v3132
    %v3414 = vunpack.c.l.b16 %v3133
    %v3415 = vunpack.c.h.b16 %v3133
    %v3416 = vunpack.c.l.b16 %v3134
    %v3417 = vunpack.c.h.b16 %v3134
    %v3418 = vunpack.c.l.b16 %v3135
    %v3419 = vunpack.c.h.b16 %v3135
    %v3420 = vunpack.c.l.b16 %v3136
    %v3421 = vunpack.c.h.b16 %v3136
    %v3422 = vunpack.c.l.b16 %v3137
    %v3423 = vunpack.c.h.b16 %v3137
    %v3424 = vunpack.c.l.b16 %v3138
    %v3425 = vunpack.c.h.b16 %v3138
    %v3426 = vunpack.c.l.b16 %v3139
    %v3427 = vunpack.c.h.b16 %v3139
    %v3428 = vunpack.c.l.b16 %v3140
    %v3429 = vunpack.c.h.b16 %v3140
    %v3430 = vunpack.c.l.b16 %v3141
    %v3431 = vunpack.c.h.b16 %v3141
    %v3432 = vunpack.c.l.b16 %v3142
    %v3433 = vunpack.c.h.b16 %v3142
    %v3434 = vunpack.c.l.b16 %v3143
    %v3435 = vunpack.c.h.b16 %v3143
    %v3436 = vunpack.c.l.b16 %v3144
    %v3437 = vunpack.c.h.b16 %v3144
    %v3438 = vunpack.c.l.b16 %v3145
    %v3439 = vunpack.c.h.b16 %v3145
    %v3440 = vunpack.c.l.b16 %v3146
    %v3441 = vunpack.c.h.b16 %v3146
    %v3442 = vunpack.c.l.b16 %v3147
    %v3443 = vunpack.c.h.b16 %v3147
    %v3444 = vunpack.c.l.b16 %v3148
    %v3445 = vunpack.c.h.b16 %v3148
    %v3446 = vunpack.c.l.b16 %v3149
    %v3447 = vunpack.c.h.b16 %v3149
    %v3448 = vunpack.c.l.b16 %v3150
    %v3449 = vunpack.c.h.b16 %v3150
    %v3450 = vunpack.c.l.b16 %v3151
    %v3451 = vunpack.c.h.b16 %v3151
    %v3452 = vunpack.c.l.b16 %v3152
    %v3453 = vunpack.c.h.b16 %v3152
    %v3454 = vunpack.c.l.b16 %v3153
    %v3455 = vunpack.c.h.b16 %v3153
    %v3456 = vunpack.c.l.b16 %v3154
    %v3457 = vunpack.c.h.b16 %v3154
    %v3458 = vunpack.c.l.b16 %v3155
    %v3459 = vunpack.c.h.b16 %v3155
    %v3460 = vunpack.c.l.b16 %v3156
    %v3461 = vunpack.c.h.b16 %v3156
    %v3462 = vunpack.c.l.b16 %v3157
    %v3463 = vunpack.c.h.b16 %v3157
    %v3464 = vunpack.c.l.b16 %v3158
    %v3465 = vunpack.c.h.b16 %v3158
    %v3466 = vunpack.c.l.b16 %v3159
    %v3467 = vunpack.c.h.b16 %v3159
    %v3468 = vunpack.c.l.b16 %v3160
    %v3469 = vunpack.c.h.b16 %v3160
    %v3470 = vunpack.c.l.b16 %v3161
    %v3471 = vunpack.c.h.b16 %v3161
    %v3472 = vunpack.c.l.b16 %v3162
    %v3473 = vunpack.c.h.b16 %v3162
    %v3474 = vunpack.c.l.b16 %v3163
    %v3475 = vunpack.c.h.b16 %v3163
    %v3476 = vunpack.c.l.b16 %v3164
    %v3477 = vunpack.c.h.b16 %v3164
    %v3478 = vunpack.c.l.b16 %v3165
    %v3479 = vunpack.c.h.b16 %v3165
    %v3480 = vunpack.c.l.b16 %v3166
    %v3481 = vunpack.c.h.b16 %v3166
    %v3482 = vunpack.c.l.b16 %v3167
    %v3483 = vunpack.c.h.b16 %v3167
    %v3484 = vunpack.c.l.b16 %v3168
    %v3485 = vunpack.c.h.b16 %v3168
    %v3486 = vunpack.c.l.b16 %v3169
    %v3487 = vunpack.c.h.b16 %v3169
    %v3488 = vunpack.c.l.b16 %v3170
    %v3489 = vunpack.c.h.b16 %v3170
    %v3490 = vunpack.c.l.b16 %v3171
    %v3491 = vunpack.c.h.b16 %v3171
    %v3492 = vunpack.c.l.b16 %v3172
    %v3493 = vunpack.c.h.b16 %v3172
    %v3494 = vunpack.c.l.b16 %v3173
    %v3495 = vunpack.c.h.b16 %v3173
    %v3496 = vunpack.c.l.b16 %v3174
    %v3497 = vunpack.c.h.b16 %v3174
    %v3498 = vunpack.c.l.b16 %v3175
    %v3499 = vunpack.c.h.b16 %v3175
    %v3500 = vunpack.c.l.b16 %v3176
    %v3501 = vunpack.c.h.b16 %v3176
    %v3502 = vunpack.c.l.b16 %v3177
    %v3503 = vunpack.c.h.b16 %v3177
    %v3504 = vunpack.c.l.b16 %v3178
    %v3505 = vunpack.c.h.b16 %v3178
    %v3506 = vunpack.c.l.b16 %v3179
    %v3507 = vunpack.c.h.b16 %v3179
    %v3508 = vunpack.c.l.b16 %v3180
    %v3509 = vunpack.c.h.b16 %v3180
    %v3510 = vunpack.c.l.b16 %v3181
    %v3511 = vunpack.c.h.b16 %v3181
    %v3512 = vunpack.c.l.b16 %v3182
    %v3513 = vunpack.c.h.b16 %v3182
    %v3514 = vunpack.c.l.b16 %v3183
    %v3515 = vunpack.c.h.b16 %v3183
    %v3516 = vunpack.c.l.b16 %v3184
    %v3517 = vunpack.c.h.b16 %v3184
    %v3518 = vunpack.c.l.b16 %v3185
    %v3519 = vunpack.c.h.b16 %v3185
    %v3520 = vunpack.c.l.b16 %v3186
    %v3521 = vunpack.c.h.b16 %v3186
    %v3522 = vunpack.c.l.b16 %v3187
    %v3523 = vunpack.c.h.b16 %v3187
    %v3524 = vunpack.c.l.b16 %v3188
    %v3525 = vunpack.c.h.b16 %v3188
    %v3526 = vunpack.c.l.b16 %v3189
    %v3527 = vunpack.c.h.b16 %v3189
    %v3528 = vunpack.c.l.b16 %v3190
    %v3529 = vunpack.c.h.b16 %v3190
    %v3530 = vunpack.c.l.b16 %v3191
    %v3531 = vunpack.c.h.b16 %v3191
    %v3532 = vunpack.c.l.b16 %v3192
    %v3533 = vunpack.c.h.b16 %v3192
    %v3534 = vunpack.c.l.b16 %v3193
    %v3535 = vunpack.c.h.b16 %v3193
    %v3536 = vunpack.c.l.b16 %v3194
    %v3537 = vunpack.c.h.b16 %v3194
    %v3538 = vunpack.c.l.b16 %v3195
    %v3539 = vunpack.c.h.b16 %v3195
    %v3540 = vunpack.c.l.b16 %v3196
    %v3541 = vunpack.c.h.b16 %v3196
    %v3542 = vunpack.c.l.b16 %v3197
    %v3543 = vunpack.c.h.b16 %v3197
    %v3544 = vunpack.c.l.b16 %v3198
    %v3545 = vunpack.c.h.b16 %v3198
    %v3546 = vunpack.c.l.b16 %v3199
    %v3547 = vunpack.c.h.b16 %v3199
    %v3548 = vunpack.c.l.b16 %v3200
    %v3549 = vunpack.c.h.b16 %v3200
    %v3550 = vunpack.c.l.b16 %v3201
    %v3551 = vunpack.c.h.b16 %v3201
    %v3552 = vunpack.c.l.b16 %v3202
    %v3553 = vunpack.c.h.b16 %v3202
    %v3554 = vunpack.c.l.b16 %v3203
    %v3555 = vunpack.c.h.b16 %v3203
    %v3556 = vunpack.c.l.b16 %v3204
    %v3557 = vunpack.c.h.b16 %v3204
    %v3558 = vunpack.c.l.b16 %v3205
    %v3559 = vunpack.c.h.b16 %v3205
    %v3560 = vunpack.c.l.b16 %v3206
    %v3561 = vunpack.c.h.b16 %v3206
    %v3562 = vunpack.c.l.b16 %v3207
    %v3563 = vunpack.c.h.b16 %v3207
    %v3564 = vunpack.c.l.b16 %v3208
    %v3565 = vunpack.c.h.b16 %v3208
    %v3566 = vunpack.c.l.b16 %v3209
    %v3567 = vunpack.c.h.b16 %v3209
    %v3568 = vunpack.c.l.b16 %v3210
    %v3569 = vunpack.c.h.b16 %v3210
    %v3570 = vunpack.c.l.b16 %v3211
    %v3571 = vunpack.c.h.b16 %v3211
    %v3572 = vunpack.c.l.b16 %v3212
    %v3573 = vunpack.c.h.b16 %v3212
    %v3574 = vunpack.c.l.b16 %v3213
    %v3575 = vunpack.c.h.b16 %v3213
    %v3576 = vunpack.c.l.b16 %v3214
    %v3577 = vunpack.c.h.b16 %v3214
    %v3578 = vunpack.c.l.b16 %v3215
    %v3579 = vunpack.c.h.b16 %v3215
    %v3580 = vunpack.c.l.b16 %v3216
    %v3581 = vunpack.c.h.b16 %v3216
    %v3582 = vunpack.c.l.b16 %v3217
    %v3583 = vunpack.c.h.b16 %v3217
    %v3584 = vunpack.c.l.b16 %v3218
    %v3585 = vunpack.c.h.b16 %v3218
    %v3586 = vunpack.c.l.b16 %v3219
    %v3587 = vunpack.c.h.b16 %v3219
    %v3588 = vunpack.c.l.b16 %v3220
    %v3589 = vunpack.c.h.b16 %v3220
    %v3590 = vunpack.c.l.b16 %v3221
    %v3591 = vunpack.c.h.b16 %v3221
    %v3592 = vunpack.c.l.b16 %v3222
    %v3593 = vunpack.c.h.b16 %v3222
    %v3594 = vunpack.c.l.b16 %v3223
    %v3595 = vunpack.c.h.b16 %v3223
    %v3596 = vunpack.c.l.b16 %v3224
    %v3597 = vunpack.c.h.b16 %v3224
    %v3598 = vunpack.c.l.b16 %v3225
    %v3599 = vunpack.c.h.b16 %v3225
    %v3600 = vunpack.c.l.b16 %v3226
    %v3601 = vunpack.c.h.b16 %v3226
    %v3602 = vunpack.c.l.b16 %v3227
    %v3603 = vunpack.c.h.b16 %v3227
    %v3604 = vunpack.c.l.b16 %v3228
    %v3605 = vunpack.c.h.b16 %v3228
    %v3606 = vunpack.c.l.b16 %v3229
    %v3607 = vunpack.c.h.b16 %v3229
    %v3608 = vunpack.c.l.b16 %v3230
    %v3609 = vunpack.c.h.b16 %v3230
    %v3610 = vunpack.c.l.b16 %v3231
    %v3611 = vunpack.c.h.b16 %v3231
    %v3612 = vunpack.c.l.b16 %v3232
    %v3613 = vunpack.c.h.b16 %v3232
    %v3614 = vunpack.c.l.b16 %v3233
    %v3615 = vunpack.c.h.b16 %v3233
    %v3616 = vunpack.c.l.b16 %v3234
    %v3617 = vunpack.c.h.b16 %v3234
    %v3618 = vunpack.c.l.b16 %v3235
    %v3619 = vunpack.c.h.b16 %v3235
    %v3620 = vunpack.c.l.b16 %v3236
    %v3621 = vunpack.c.h.b16 %v3236
    %v3622 = vunpack.c.l.b16 %v3237
    %v3623 = vunpack.c.h.b16 %v3237
    %v3624 = vunpack.c.l.b16 %v3238
    %v3625 = vunpack.c.h.b16 %v3238
    %v3626 = vunpack.c.l.b16 %v3239
    %v3627 = vunpack.c.h.b16 %v3239
    %v3628 = vunpack.c.l.b16 %v3240
    %v3629 = vunpack.c.h.b16 %v3240
    %v3630 = vunpack.c.l.b16 %v3241
    %v3631 = vunpack.c.h.b16 %v3241
    %v3632 = vunpack.c.l.b16 %v3242
    %v3633 = vunpack.c.h.b16 %v3242
    %v3634 = vunpack.c.l.b16 %v3243
    %v3635 = vunpack.c.h.b16 %v3243
    %v3636 = vunpack.c.l.b16 %v3244
    %v3637 = vunpack.c.h.b16 %v3244
    %v3638 = vunpack.c.l.b16 %v3245
    %v3639 = vunpack.c.h.b16 %v3245
    %v3640 = vunpack.c.l.b16 %v3246
    %v3641 = vunpack.c.h.b16 %v3246
    %v3642 = vunpack.c.l.b16 %v3247
    %v3643 = vunpack.c.h.b16 %v3247
    %v3644 = vunpack.c.l.b16 %v3248
    %v3645 = vunpack.c.h.b16 %v3248
    %v3646 = vunpack.c.l.b16 %v3249
    %v3647 = vunpack.c.h.b16 %v3249
    %v3648 = vunpack.c.l.b16 %v3250
    %v3649 = vunpack.c.h.b16 %v3250
    %v3650 = vunpack.c.l.b16 %v3251
    %v3651 = vunpack.c.h.b16 %v3251
    %v3652 = vunpack.c.l.b16 %v3252
    %v3653 = vunpack.c.h.b16 %v3252
    %v3654 = vunpack.c.l.b16 %v3253
    %v3655 = vunpack.c.h.b16 %v3253
    %v3656 = vunpack.c.l.b16 %v3254
    %v3657 = vunpack.c.h.b16 %v3254
    %v3658 = vunpack.c.l.b16 %v3255
    %v3659 = vunpack.c.h.b16 %v3255
    %v3660 = vunpack.c.l.b16 %v3256
    %v3661 = vunpack.c.h.b16 %v3256
    %v3662 = vunpack.c.l.b16 %v3257
    %v3663 = vunpack.c.h.b16 %v3257
    %v3664 = vpack.c.b16 %v3412, %v3408
    %v3665 = vpack.c.b16 %v3413, %v3409
    %v3666 = vpack.c.b16 %v3414, %v3410
    %v3667 = vpack.c.b16 %v3415, %v3411
    %v3668 = vpack.c.b16 %v3420, %v3416
    %v3669 = vpack.c.b16 %v3421, %v3417
    %v3670 = vpack.c.b16 %v3422, %v3418
    %v3671 = vpack.c.b16 %v3423, %v3419
    %v3672 = vpack.c.b16 %v3428, %v3424
    %v3673 = vpack.c.b16 %v3429, %v3425
    %v3674 = vpack.c.b16 %v3430, %v3426
    %v3675 = vpack.c.b16 %v3431, %v3427
    %v3676 = vpack.c.b16 %v3436, %v3432
    %v3677 = vpack.c.b16 %v3437, %v3433
    %v3678 = vpack.c.b16 %v3438, %v3434
    %v3679 = vpack.c.b16 %v3439, %v3435
    %v3680 = vpack.c.b16 %v3444, %v3440
    %v3681 = vpack.c.b16 %v3445, %v3441
    %v3682 = vpack.c.b16 %v3446, %v3442
    %v3683 = vpack.c.b16 %v3447, %v3443
    %v3684 = vpack.c.b16 %v3452, %v3448
    %v3685 = vpack.c.b16 %v3453, %v3449
    %v3686 = vpack.c.b16 %v3454, %v3450
    %v3687 = vpack.c.b16 %v3455, %v3451
    %v3688 = vpack.c.b16 %v3460, %v3456
    %v3689 = vpack.c.b16 %v3461, %v3457
    %v3690 = vpack.c.b16 %v3462, %v3458
    %v3691 = vpack.c.b16 %v3463, %v3459
    %v3692 = vpack.c.b16 %v3468, %v3464
    %v3693 = vpack.c.b16 %v3469, %v3465
    %v3694 = vpack.c.b16 %v3470, %v3466
    %v3695 = vpack.c.b16 %v3471, %v3467
    %v3696 = vpack.c.b16 %v3476, %v3472
    %v3697 = vpack.c.b16 %v3477, %v3473
    %v3698 = vpack.c.b16 %v3478, %v3474
    %v3699 = vpack.c.b16 %v3479, %v3475
    %v3700 = vpack.c.b16 %v3484, %v3480
    %v3701 = vpack.c.b16 %v3485, %v3481
    %v3702 = vpack.c.b16 %v3486, %v3482
    %v3703 = vpack.c.b16 %v3487, %v3483
    %v3704 = vpack.c.b16 %v3492, %v3488
    %v3705 = vpack.c.b16 %v3493, %v3489
    %v3706 = vpack.c.b16 %v3494, %v3490
    %v3707 = vpack.c.b16 %v3495, %v3491
    %v3708 = vpack.c.b16 %v3500, %v3496
    %v3709 = vpack.c.b16 %v3501, %v3497
    %v3710 = vpack.c.b16 %v3502, %v3498
    %v3711 = vpack.c.b16 %v3503, %v3499
    %v3712 = vpack.c.b16 %v3508, %v3504
    %v3713 = vpack.c.b16 %v3509, %v3505
    %v3714 = vpack.c.b16 %v3510, %v3506
    %v3715 = vpack.c.b16 %v3511, %v3507
    %v3716 = vpack.c.b16 %v3516, %v3512
    %v3717 = vpack.c.b16 %v3517, %v3513
    %v3718 = vpack.c.b16 %v3518, %v3514
    %v3719 = vpack.c.b16 %v3519, %v3515
    %v3720 = vpack.c.b16 %v3524, %v3520
    %v3721 = vpack.c.b16 %v3525, %v3521
    %v3722 = vpack.c.b16 %v3526, %v3522
    %v3723 = vpack.c.b16 %v3527, %v3523
    %v3724 = vpack.c.b16 %v3532, %v3528
    %v3725 = vpack.c.b16 %v3533, %v3529
    %v3726 = vpack.c.b16 %v3534, %v3530
    %v3727 = vpack.c.b16 %v3535, %v3531
    %v3728 = vpack.c.b16 %v3540, %v3536
    %v3729 = vpack.c.b16 %v3541, %v3537
    %v3730 = vpack.c.b16 %v3542, %v3538
    %v3731 = vpack.c.b16 %v3543, %v3539
    %v3732 = vpack.c.b16 %v3548, %v3544
    %v3733 = vpack.c.b16 %v3549, %v3545
    %v3734 = vpack.c.b16 %v3550, %v3546
    %v3735 = vpack.c.b16 %v3551, %v3547
    %v3736 = vpack.c.b16 %v3556, %v3552
    %v3737 = vpack.c.b16 %v3557, %v3553
    %v3738 = vpack.c.b16 %v3558, %v3554
    %v3739 = vpack.c.b16 %v3559, %v3555
    %v3740 = vpack.c.b16 %v3564, %v3560
    %v3741 = vpack.c.b16 %v3565, %v3561
    %v3742 = vpack.c.b16 %v3566, %v3562
    %v3743 = vpack.c.b16 %v3567, %v3563
    %v3744 = vpack.c.b16 %v3572, %v3568
    %v3745 = vpack.c.b16 %v3573, %v3569
    %v3746 = vpack.c.b16 %v3574, %v3570
    %v3747 = vpack.c.b16 %v3575, %v3571
    %v3748 = vpack.c.b16 %v3580, %v3576
    %v3749 = vpack.c.b16 %v3581, %v3577
    %v3750 = vpack.c.b16 %v3582, %v3578
    %v3751 = vpack.c.b16 %v3583, %v3579
    %v3752 = vpack.c.b16 %v3588, %v3584
    %v3753 = vpack.c.b16 %v3589, %v3585
    %v3754 = vpack.c.b16 %v3590, %v3586
    %v3755 = vpack.c.b16 %v3591, %v3587
    %v3756 = vpack.c.b16 %v3596, %v3592
    %v3757 = vpack.c.b16 %v3597, %v3593
    %v3758 = vpack.c.b16 %v3598, %v3594
    %v3759 = vpack.c.b16 %v3599, %v3595
    %v3760 = vpack.c.b16 %v3604, %v3600
    %v3761 = vpack.c.b16 %v3605, %v3601
    %v3762 = vpack.c.b16 %v3606, %v3602
    %v3763 = vpack.c.b16 %v3607, %v3603
    %v3764 = vpack.c.b16 %v3612, %v3608
    %v3765 = vpack.c.b16 %v3613, %v3609
    %v3766 = vpack.c.b16 %v3614, %v3610
    %v3767 = vpack.c.b16 %v3615, %v3611
    %v3768 = vpack.c.b16 %v3620, %v3616
    %v3769 = vpack.c.b16 %v3621, %v3617
    %v3770 = vpack.c.b16 %v3622, %v3618
    %v3771 = vpack.c.b16 %v3623, %v3619
    %v3772 = vpack.c.b16 %v3628, %v3624
    %v3773 = vpack.c.b16 %v3629, %v3625
    %v3774 = vpack.c.b16 %v3630, %v3626
    %v3775 = vpack.c.b16 %v3631, %v3627
    %v3776 = vpack.c.b16 %v3636, %v3632
    %v3777 = vpack.c.b16 %v3637, %v3633
    %v3778 = vpack.c.b16 %v3638, %v3634
    %v3779 = vpack.c.b16 %v3639, %v3635
    %v3780 = vpack.c.b16 %v3644, %v3640
    %v3781 = vpack.c.b16 %v3645, %v3641
    %v3782 = vpack.c.b16 %v3646, %v3642
    %v3783 = vpack.c.b16 %v3647, %v3643
    %v3784 = vpack.c.b16 %v3652, %v3648
    %v3785 = vpack.c.b16 %v3653, %v3649
    %v3786 = vpack.c.b16 %v3654, %v3650
    %v3787 = vpack.c.b16 %v3655, %v3651
    %v3788 = vpack.c.b16 %v3660, %v3656
    %v3789 = vpack.c.b16 %v3661, %v3657
    %v3790 = vpack.c.b16 %v3662, %v3658
    %v3791 = vpack.c.b16 %v3663, %v3659
    %3920 = vmatprep.subr.bf16.mxu0 %v3665
    %3921 = vmatpush1.bf16.msra.mxu0 %v3664
    %3922 = vmatprep.subr.bf16.mxu0 %v3669
    %3923 = vmatpush1.bf16.msra.mxu0 %v3668
    %3924 = vmatprep.subr.bf16.mxu0 %v3673
    %3925 = vmatpush1.bf16.msra.mxu0 %v3672
    %3926 = vmatprep.subr.bf16.mxu0 %v3677
    %3927 = vmatpush1.bf16.msra.mxu0 %v3676
    %3928 = vmatprep.subr.bf16.mxu0 %v3681
    %3929 = vmatpush1.bf16.msra.mxu0 %v3680
    %3930 = vmatprep.subr.bf16.mxu0 %v3685
    %3931 = vmatpush1.bf16.msra.mxu0 %v3684
    %3932 = vmatprep.subr.bf16.mxu0 %v3689
    %3933 = vmatpush1.bf16.msra.mxu0 %v3688
    %3934 = vmatprep.subr.bf16.mxu0 %v3693
    %3935 = vmatpush1.bf16.msra.mxu0 %v3692
    %3936 = vmatprep.subr.bf16.mxu0 %v3697
    %3937 = vmatpush1.bf16.msra.mxu0 %v3696
    %3938 = vmatprep.subr.bf16.mxu0 %v3701
    %3939 = vmatpush1.bf16.msra.mxu0 %v3700
    %3940 = vmatprep.subr.bf16.mxu0 %v3705
    %3941 = vmatpush1.bf16.msra.mxu0 %v3704
    %3942 = vmatprep.subr.bf16.mxu0 %v3709
    %3943 = vmatpush1.bf16.msra.mxu0 %v3708
    %3944 = vmatprep.subr.bf16.mxu0 %v3713
    %3945 = vmatpush1.bf16.msra.mxu0 %v3712
    %3946 = vmatprep.subr.bf16.mxu0 %v3717
    %3947 = vmatpush1.bf16.msra.mxu0 %v3716
    %3948 = vmatprep.subr.bf16.mxu0 %v3721
    %3949 = vmatpush1.bf16.msra.mxu0 %v3720
    %3950 = vmatprep.subr.bf16.mxu0 %v3725
    %3951 = vmatpush1.bf16.msra.mxu0 %v3724
    %3952 = vmatprep.mubr.bf16.mxu0 %v3127
    %3953 = vmatmul.mubr.bf16.gmra.mrb[0].mxu0 %v3126
    %v3954 = vpop.f32.mrb[0].mxu0
    %v3955 = vadd.f32 %v3263, %v3954
    %v3956 = vpop.f32.mrb[0].mxu0
    %v3957 = vadd.f32 %v3267, %v3956
    %v3958 = vpop.f32.mrb[0].mxu0
    %v3959 = vpop.f32.mrb[0].mxu0
    %3960 = vdwg.mxu0
    %3961 = vmatprep.subr.bf16.mxu0 %v3729
    %3962 = vmatpush1.bf16.msra.mxu0 %v3728
    %3963 = vmatprep.subr.bf16.mxu0 %v3733
    %3964 = vmatpush1.bf16.msra.mxu0 %v3732
    %3965 = vmatprep.subr.bf16.mxu0 %v3737
    %3966 = vmatpush1.bf16.msra.mxu0 %v3736
    %3967 = vmatprep.subr.bf16.mxu0 %v3741
    %3968 = vmatpush1.bf16.msra.mxu0 %v3740
    %3969 = vmatprep.subr.bf16.mxu0 %v3745
    %3970 = vmatpush1.bf16.msra.mxu0 %v3744
    %3971 = vmatprep.subr.bf16.mxu0 %v3749
    %3972 = vmatpush1.bf16.msra.mxu0 %v3748
    %3973 = vmatprep.subr.bf16.mxu0 %v3753
    %3974 = vmatpush1.bf16.msra.mxu0 %v3752
    %3975 = vmatprep.subr.bf16.mxu0 %v3757
    %3976 = vmatpush1.bf16.msra.mxu0 %v3756
    %3977 = vmatprep.subr.bf16.mxu0 %v3761
    %3978 = vmatpush1.bf16.msra.mxu0 %v3760
    %3979 = vmatprep.subr.bf16.mxu0 %v3765
    %3980 = vmatpush1.bf16.msra.mxu0 %v3764
    %3981 = vmatprep.subr.bf16.mxu0 %v3769
    %3982 = vmatpush1.bf16.msra.mxu0 %v3768
    %3983 = vmatprep.subr.bf16.mxu0 %v3773
    %3984 = vmatpush1.bf16.msra.mxu0 %v3772
    %3985 = vmatprep.subr.bf16.mxu0 %v3777
    %3986 = vmatpush1.bf16.msra.mxu0 %v3776
    %3987 = vmatprep.subr.bf16.mxu0 %v3781
    %3988 = vmatpush1.bf16.msra.mxu0 %v3780
    %3989 = vmatprep.subr.bf16.mxu0 %v3785
    %3990 = vmatpush1.bf16.msra.mxu0 %v3784
    %3991 = vmatprep.subr.bf16.mxu0 %v3789
    %3992 = vmatpush1.bf16.msra.mxu0 %v3788
    %3993 = vmatprep.mubr.bf16.mxu0 %v3129
    %3994 = vmatmul.mubr.bf16.gmra.mrb[0].mxu0 %v3128
    %v3995 = vpop.f32.mrb[0].mxu0
    %v3996 = vadd.f32 %v3955, %v3995
    %v3997 = vpop.f32.mrb[0].mxu0
    %v3998 = vadd.f32 %v3957, %v3997
    %v3999 = vpop.f32.mrb[0].mxu0
    %v4000 = vpop.f32.mrb[0].mxu0
    %4001 = vdwg.mxu0
    %4002 = vmatprep.subr.bf16.mxu0 %v3667
    %4003 = vmatpush1.bf16.msra.mxu0 %v3666
    %4004 = vmatprep.subr.bf16.mxu0 %v3671
    %4005 = vmatpush1.bf16.msra.mxu0 %v3670
    %4006 = vmatprep.subr.bf16.mxu0 %v3675
    %4007 = vmatpush1.bf16.msra.mxu0 %v3674
    %4008 = vmatprep.subr.bf16.mxu0 %v3679
    %4009 = vmatpush1.bf16.msra.mxu0 %v3678
    %4010 = vmatprep.subr.bf16.mxu0 %v3683
    %4011 = vmatpush1.bf16.msra.mxu0 %v3682
    %4012 = vmatprep.subr.bf16.mxu0 %v3687
    %4013 = vmatpush1.bf16.msra.mxu0 %v3686
    %4014 = vmatprep.subr.bf16.mxu0 %v3691
    %4015 = vmatpush1.bf16.msra.mxu0 %v3690
    %4016 = vmatprep.subr.bf16.mxu0 %v3695
    %4017 = vmatpush1.bf16.msra.mxu0 %v3694
    %4018 = vmatprep.subr.bf16.mxu0 %v3699
    %4019 = vmatpush1.bf16.msra.mxu0 %v3698
    %4020 = vmatprep.subr.bf16.mxu0 %v3703
    %4021 = vmatpush1.bf16.msra.mxu0 %v3702
    %4022 = vmatprep.subr.bf16.mxu0 %v3707
    %4023 = vmatpush1.bf16.msra.mxu0 %v3706
    %4024 = vmatprep.subr.bf16.mxu0 %v3711
    %4025 = vmatpush1.bf16.msra.mxu0 %v3710
    %4026 = vmatprep.subr.bf16.mxu0 %v3715
    %4027 = vmatpush1.bf16.msra.mxu0 %v3714
    %4028 = vmatprep.subr.bf16.mxu0 %v3719
    %4029 = vmatpush1.bf16.msra.mxu0 %v3718
    %4030 = vmatprep.subr.bf16.mxu0 %v3723
    %4031 = vmatpush1.bf16.msra.mxu0 %v3722
    %4032 = vmatprep.subr.bf16.mxu0 %v3727
    %4033 = vmatpush1.bf16.msra.mxu0 %v3726
    %4034 = vmatprep.mubr.bf16.mxu0 %v3127
    %4035 = vmatmul.mubr.bf16.gmra.mrb[0].mxu0 %v3126
    %v4036 = vpop.f32.mrb[0].mxu0
    %v4037 = vadd.f32 %v3271, %v4036
    %v4038 = vpop.f32.mrb[0].mxu0
    %v4039 = vadd.f32 %v3275, %v4038
    %v4040 = vpop.f32.mrb[0].mxu0
    %v4041 = vpop.f32.mrb[0].mxu0
    %4042 = vdwg.mxu0
    %4043 = vmatprep.subr.bf16.mxu0 %v3731
    %4044 = vmatpush1.bf16.msra.mxu0 %v3730
    %4045 = vmatprep.subr.bf16.mxu0 %v3735
    %4046 = vmatpush1.bf16.msra.mxu0 %v3734
    %4047 = vmatprep.subr.bf16.mxu0 %v3739
    %4048 = vmatpush1.bf16.msra.mxu0 %v3738
    %4049 = vmatprep.subr.bf16.mxu0 %v3743
    %4050 = vmatpush1.bf16.msra.mxu0 %v3742
    %4051 = vmatprep.subr.bf16.mxu0 %v3747
    %4052 = vmatpush1.bf16.msra.mxu0 %v3746
    %4053 = vmatprep.subr.bf16.mxu0 %v3751
    %4054 = vmatpush1.bf16.msra.mxu0 %v3750
    %4055 = vmatprep.subr.bf16.mxu0 %v3755
    %4056 = vmatpush1.bf16.msra.mxu0 %v3754
    %4057 = vmatprep.subr.bf16.mxu0 %v3759
    %4058 = vmatpush1.bf16.msra.mxu0 %v3758
    %4059 = vmatprep.subr.bf16.mxu0 %v3763
    %4060 = vmatpush1.bf16.msra.mxu0 %v3762
    %4061 = vmatprep.subr.bf16.mxu0 %v3767
    %4062 = vmatpush1.bf16.msra.mxu0 %v3766
    %4063 = vmatprep.subr.bf16.mxu0 %v3771
    %4064 = vmatpush1.bf16.msra.mxu0 %v3770
    %4065 = vmatprep.subr.bf16.mxu0 %v3775
    %4066 = vmatpush1.bf16.msra.mxu0 %v3774
    %4067 = vmatprep.subr.bf16.mxu0 %v3779
    %4068 = vmatpush1.bf16.msra.mxu0 %v3778
    %4069 = vmatprep.subr.bf16.mxu0 %v3783
    %4070 = vmatpush1.bf16.msra.mxu0 %v3782
    %4071 = vmatprep.subr.bf16.mxu0 %v3787
    %4072 = vmatpush1.bf16.msra.mxu0 %v3786
    %4073 = vmatprep.subr.bf16.mxu0 %v3791
    %4074 = vmatpush1.bf16.msra.mxu0 %v3790
    %4075 = vmatprep.mubr.bf16.mxu0 %v3129
    %4076 = vmatmul.mubr.bf16.gmra.mrb[0].mxu0 %v3128
    %v4077 = vpop.f32.mrb[0].mxu0
    %v4078 = vadd.f32 %v4037, %v4077
    %v4079 = vpop.f32.mrb[0].mxu0
    %v4080 = vadd.f32 %v4039, %v4079
    %v4081 = vpop.f32.mrb[0].mxu0
    %v4082 = vpop.f32.mrb[0].mxu0
    %4083 = vdwg.mxu0
    %vm4084 = vcmp.ge.f32.partialorder %v3996, 0.0
    %vm4085 = vcmp.ge.f32.partialorder %v3998, 0.0
    %vm4086 = vcmp.ge.f32.partialorder %v4078, 0.0
    %vm4087 = vcmp.ge.f32.partialorder %v4080, 0.0
    %v4088 = vstv %s3125
    %v4089 = vmul.f32 %v4088, %v3996
    %v4090 = vmul.f32 %v4088, %v3998
    %v4091 = vmul.f32 %v4088, %v4078
    %v4092 = vmul.f32 %v4088, %v4080
    %v4093 = vsel %vm4084, %v3996, %v4089
    %v4094 = vsel %vm4085, %v3998, %v4090
    %v4095 = vsel %vm4086, %v4078, %v4091
    %v4096 = vsel %vm4087, %v4080, %v4092
    %v4097 = vpack.c.bf16 %v4093, %v4093
    %v4098 = vpack.c.bf16 %v4094, %v4094
    %v4099 = vpack.c.bf16 %v4095, %v4095
    %v4100 = vpack.c.bf16 %v4096, %v4096
    %v4101 = vld [vmem:[%s12] sm:$0xf]
    %v4102 = vld [vmem:[%s12 + $0x4] sm:$0xf]
    %v4103 = vld [vmem:[%s12 + $0x8] sm:$0xf]
    %v4104 = vld [vmem:[%s12 + $0xc] sm:$0xf]
    %v4105 = vld [vmem:[%s12 + $0x10] sm:$0xf]
    %v4106 = vld [vmem:[%s12 + $0x14] sm:$0xf]
    %v4107 = vld [vmem:[%s12 + $0x18] sm:$0xf]
    %v4108 = vld [vmem:[%s12 + $0x1c] sm:$0xf]
    %v4109 = vld [vmem:[%s12 + $0x20] sm:$0xf]
    %v4110 = vld [vmem:[%s12 + $0x24] sm:$0xf]
    %v4111 = vld [vmem:[%s12 + $0x28] sm:$0xf]
    %v4112 = vld [vmem:[%s12 + $0x2c] sm:$0xf]
    %v4113 = vld [vmem:[%s12 + $0x30] sm:$0xf]
    %v4114 = vld [vmem:[%s12 + $0x34] sm:$0xf]
    %v4115 = vld [vmem:[%s12 + $0x38] sm:$0xf]
    %v4116 = vld [vmem:[%s12 + $0x3c] sm:$0xf]
    %v4117 = vld [vmem:[%s12 + $0x40] sm:$0xf]
    %v4118 = vld [vmem:[%s12 + $0x44] sm:$0xf]
    %v4119 = vld [vmem:[%s12 + $0x48] sm:$0xf]
    %v4120 = vld [vmem:[%s12 + $0x4c] sm:$0xf]
    %v4121 = vld [vmem:[%s12 + $0x50] sm:$0xf]
    %v4122 = vld [vmem:[%s12 + $0x54] sm:$0xf]
    %v4123 = vld [vmem:[%s12 + $0x58] sm:$0xf]
    %v4124 = vld [vmem:[%s12 + $0x5c] sm:$0xf]
    %v4125 = vld [vmem:[%s12 + $0x60] sm:$0xf]
    %v4126 = vld [vmem:[%s12 + $0x64] sm:$0xf]
    %v4127 = vld [vmem:[%s12 + $0x68] sm:$0xf]
    %v4128 = vld [vmem:[%s12 + $0x6c] sm:$0xf]
    %v4129 = vld [vmem:[%s12 + $0x70] sm:$0xf]
    %v4130 = vld [vmem:[%s12 + $0x74] sm:$0xf]
    %v4131 = vld [vmem:[%s12 + $0x78] sm:$0xf]
    %v4132 = vld [vmem:[%s12 + $0x7c] sm:$0xf]
    %v4133 = vld [vmem:[%s12 + $0x80] sm:$0xf]
    %v4134 = vld [vmem:[%s12 + $0x84] sm:$0xf]
    %v4135 = vld [vmem:[%s12 + $0x88] sm:$0xf]
    %v4136 = vld [vmem:[%s12 + $0x8c] sm:$0xf]
    %v4137 = vld [vmem:[%s12 + $0x90] sm:$0xf]
    %v4138 = vld [vmem:[%s12 + $0x94] sm:$0xf]
    %v4139 = vld [vmem:[%s12 + $0x98] sm:$0xf]
    %v4140 = vld [vmem:[%s12 + $0x9c] sm:$0xf]
    %v4141 = vld [vmem:[%s12 + $0xa0] sm:$0xf]
    %v4142 = vld [vmem:[%s12 + $0xa4] sm:$0xf]
    %v4143 = vld [vmem:[%s12 + $0xa8] sm:$0xf]
    %v4144 = vld [vmem:[%s12 + $0xac] sm:$0xf]
    %v4145 = vld [vmem:[%s12 + $0xb0] sm:$0xf]
    %v4146 = vld [vmem:[%s12 + $0xb4] sm:$0xf]
    %v4147 = vld [vmem:[%s12 + $0xb8] sm:$0xf]
    %v4148 = vld [vmem:[%s12 + $0xbc] sm:$0xf]
    %v4149 = vld [vmem:[%s12 + $0xc0] sm:$0xf]
    %v4150 = vld [vmem:[%s12 + $0xc4] sm:$0xf]
    %v4151 = vld [vmem:[%s12 + $0xc8] sm:$0xf]
    %v4152 = vld [vmem:[%s12 + $0xcc] sm:$0xf]
    %v4153 = vld [vmem:[%s12 + $0xd0] sm:$0xf]
    %v4154 = vld [vmem:[%s12 + $0xd4] sm:$0xf]
    %v4155 = vld [vmem:[%s12 + $0xd8] sm:$0xf]
    %v4156 = vld [vmem:[%s12 + $0xdc] sm:$0xf]
    %v4157 = vld [vmem:[%s12 + $0xe0] sm:$0xf]
    %v4158 = vld [vmem:[%s12 + $0xe4] sm:$0xf]
    %v4159 = vld [vmem:[%s12 + $0xe8] sm:$0xf]
    %v4160 = vld [vmem:[%s12 + $0xec] sm:$0xf]
    %v4161 = vld [vmem:[%s12 + $0xf0] sm:$0xf]
    %v4162 = vld [vmem:[%s12 + $0xf4] sm:$0xf]
    %v4163 = vld [vmem:[%s12 + $0xf8] sm:$0xf]
    %v4164 = vld [vmem:[%s12 + $0xfc] sm:$0xf]
    %v4165 = vld [vmem:[%s13] sm:$0x1]
    %v4167 = vlaneseq
    %v4168 = vshrl.u32 %v4167, 7
    %v4169 = vsub.s32 0, %v4168
    %v4170 = vrot.slane %v4165, %v4169
    %v4236 = vunpack.c.l.b16 %v4101
    %v4237 = vunpack.c.l.b16 %v4102
    %v4238 = vunpack.c.l.b16 %v4103
    %v4239 = vunpack.c.l.b16 %v4104
    %v4240 = vunpack.c.l.b16 %v4105
    %v4241 = vunpack.c.l.b16 %v4106
    %v4242 = vunpack.c.l.b16 %v4107
    %v4243 = vunpack.c.l.b16 %v4108
    %v4244 = vunpack.c.l.b16 %v4109
    %v4245 = vunpack.c.l.b16 %v4110
    %v4246 = vunpack.c.l.b16 %v4111
    %v4247 = vunpack.c.l.b16 %v4112
    %v4248 = vunpack.c.l.b16 %v4113
    %v4249 = vunpack.c.l.b16 %v4114
    %v4250 = vunpack.c.l.b16 %v4115
    %v4251 = vunpack.c.l.b16 %v4116
    %v4252 = vunpack.c.l.b16 %v4117
    %v4253 = vunpack.c.l.b16 %v4118
    %v4254 = vunpack.c.l.b16 %v4119
    %v4255 = vunpack.c.l.b16 %v4120
    %v4256 = vunpack.c.l.b16 %v4121
    %v4257 = vunpack.c.l.b16 %v4122
    %v4258 = vunpack.c.l.b16 %v4123
    %v4259 = vunpack.c.l.b16 %v4124
    %v4260 = vunpack.c.l.b16 %v4125
    %v4261 = vunpack.c.l.b16 %v4126
    %v4262 = vunpack.c.l.b16 %v4127
    %v4263 = vunpack.c.l.b16 %v4128
    %v4264 = vunpack.c.l.b16 %v4129
    %v4265 = vunpack.c.l.b16 %v4130
    %v4266 = vunpack.c.l.b16 %v4131
    %v4267 = vunpack.c.l.b16 %v4132
    %v4268 = vunpack.c.l.b16 %v4133
    %v4269 = vunpack.c.l.b16 %v4134
    %v4270 = vunpack.c.l.b16 %v4135
    %v4271 = vunpack.c.l.b16 %v4136
    %v4272 = vunpack.c.l.b16 %v4137
    %v4273 = vunpack.c.l.b16 %v4138
    %v4274 = vunpack.c.l.b16 %v4139
    %v4275 = vunpack.c.l.b16 %v4140
    %v4276 = vunpack.c.l.b16 %v4141
    %v4277 = vunpack.c.l.b16 %v4142
    %v4278 = vunpack.c.l.b16 %v4143
    %v4279 = vunpack.c.l.b16 %v4144
    %v4280 = vunpack.c.l.b16 %v4145
    %v4281 = vunpack.c.l.b16 %v4146
    %v4282 = vunpack.c.l.b16 %v4147
    %v4283 = vunpack.c.l.b16 %v4148
    %v4284 = vunpack.c.l.b16 %v4149
    %v4285 = vunpack.c.l.b16 %v4150
    %v4286 = vunpack.c.l.b16 %v4151
    %v4287 = vunpack.c.l.b16 %v4152
    %v4288 = vunpack.c.l.b16 %v4153
    %v4289 = vunpack.c.l.b16 %v4154
    %v4290 = vunpack.c.l.b16 %v4155
    %v4291 = vunpack.c.l.b16 %v4156
    %v4292 = vunpack.c.l.b16 %v4157
    %v4293 = vunpack.c.l.b16 %v4158
    %v4294 = vunpack.c.l.b16 %v4159
    %v4295 = vunpack.c.l.b16 %v4160
    %v4296 = vunpack.c.l.b16 %v4161
    %v4297 = vunpack.c.l.b16 %v4162
    %v4298 = vunpack.c.l.b16 %v4163
    %v4299 = vunpack.c.l.b16 %v4164
    %v4300 = vpack.c.b16 %v4237, %v4236
    %v4301 = vpack.c.b16 %v4239, %v4238
    %v4302 = vpack.c.b16 %v4241, %v4240
    %v4303 = vpack.c.b16 %v4243, %v4242
    %v4304 = vpack.c.b16 %v4245, %v4244
    %v4305 = vpack.c.b16 %v4247, %v4246
    %v4306 = vpack.c.b16 %v4249, %v4248
    %v4307 = vpack.c.b16 %v4251, %v4250
    %v4308 = vpack.c.b16 %v4253, %v4252
    %v4309 = vpack.c.b16 %v4255, %v4254
    %v4310 = vpack.c.b16 %v4257, %v4256
    %v4311 = vpack.c.b16 %v4259, %v4258
    %v4312 = vpack.c.b16 %v4261, %v4260
    %v4313 = vpack.c.b16 %v4263, %v4262
    %v4314 = vpack.c.b16 %v4265, %v4264
    %v4315 = vpack.c.b16 %v4267, %v4266
    %v4316 = vpack.c.b16 %v4269, %v4268
    %v4317 = vpack.c.b16 %v4271, %v4270
    %v4318 = vpack.c.b16 %v4273, %v4272
    %v4319 = vpack.c.b16 %v4275, %v4274
    %v4320 = vpack.c.b16 %v4277, %v4276
    %v4321 = vpack.c.b16 %v4279, %v4278
    %v4322 = vpack.c.b16 %v4281, %v4280
    %v4323 = vpack.c.b16 %v4283, %v4282
    %v4324 = vpack.c.b16 %v4285, %v4284
    %v4325 = vpack.c.b16 %v4287, %v4286
    %v4326 = vpack.c.b16 %v4289, %v4288
    %v4327 = vpack.c.b16 %v4291, %v4290
    %v4328 = vpack.c.b16 %v4293, %v4292
    %v4329 = vpack.c.b16 %v4295, %v4294
    %v4330 = vpack.c.b16 %v4297, %v4296
    %v4331 = vpack.c.b16 %v4299, %v4298
    %4364 = vmatprep.subr.bf16.mxu0 0
    %4365 = vmatpush1.bf16.msra.mxu0 %v4300
    %4366 = vmatprep.subr.bf16.mxu0 0
    %4367 = vmatpush1.bf16.msra.mxu0 %v4301
    %4368 = vmatprep.subr.bf16.mxu0 0
    %4369 = vmatpush1.bf16.msra.mxu0 %v4302
    %4370 = vmatprep.subr.bf16.mxu0 0
    %4371 = vmatpush1.bf16.msra.mxu0 %v4303
    %4372 = vmatprep.subr.bf16.mxu0 0
    %4373 = vmatpush1.bf16.msra.mxu0 %v4304
    %4374 = vmatprep.subr.bf16.mxu0 0
    %4375 = vmatpush1.bf16.msra.mxu0 %v4305
    %4376 = vmatprep.subr.bf16.mxu0 0
    %4377 = vmatpush1.bf16.msra.mxu0 %v4306
    %4378 = vmatprep.subr.bf16.mxu0 0
    %4379 = vmatpush1.bf16.msra.mxu0 %v4307
    %4380 = vmatprep.subr.bf16.mxu0 0
    %4381 = vmatpush1.bf16.msra.mxu0 %v4308
    %4382 = vmatprep.subr.bf16.mxu0 0
    %4383 = vmatpush1.bf16.msra.mxu0 %v4309
    %4384 = vmatprep.subr.bf16.mxu0 0
    %4385 = vmatpush1.bf16.msra.mxu0 %v4310
    %4386 = vmatprep.subr.bf16.mxu0 0
    %4387 = vmatpush1.bf16.msra.mxu0 %v4311
    %4388 = vmatprep.subr.bf16.mxu0 0
    %4389 = vmatpush1.bf16.msra.mxu0 %v4312
    %4390 = vmatprep.subr.bf16.mxu0 0
    %4391 = vmatpush1.bf16.msra.mxu0 %v4313
    %4392 = vmatprep.subr.bf16.mxu0 0
    %4393 = vmatpush1.bf16.msra.mxu0 %v4314
    %4394 = vmatprep.subr.bf16.mxu0 0
    %4395 = vmatpush1.bf16.msra.mxu0 %v4315
    %4396 = vmatprep.mubr.bf16.mxu0 %v4098
    %4397 = vmatmul.mubr.bf16.gmra.mrb[0].mxu0 %v4097
    %v4398 = vpop.f32.mrb[0].mxu0
    %v4399 = vadd.f32 %v4170, %v4398
    %v4400 = vpop.f32.mrb[0].mxu0
    %v4401 = vpop.f32.mrb[0].mxu0
    %v4402 = vpop.f32.mrb[0].mxu0
    %4403 = vdwg.mxu0
    %4404 = vmatprep.subr.bf16.mxu0 0
    %4405 = vmatpush1.bf16.msra.mxu0 %v4316
    %4406 = vmatprep.subr.bf16.mxu0 0
    %4407 = vmatpush1.bf16.msra.mxu0 %v4317
    %4408 = vmatprep.subr.bf16.mxu0 0
    %4409 = vmatpush1.bf16.msra.mxu0 %v4318
    %4410 = vmatprep.subr.bf16.mxu0 0
    %4411 = vmatpush1.bf16.msra.mxu0 %v4319
    %4412 = vmatprep.subr.bf16.mxu0 0
    %4413 = vmatpush1.bf16.msra.mxu0 %v4320
    %4414 = vmatprep.subr.bf16.mxu0 0
    %4415 = vmatpush1.bf16.msra.mxu0 %v4321
    %4416 = vmatprep.subr.bf16.mxu0 0
    %4417 = vmatpush1.bf16.msra.mxu0 %v4322
    %4418 = vmatprep.subr.bf16.mxu0 0
    %4419 = vmatpush1.bf16.msra.mxu0 %v4323
    %4420 = vmatprep.subr.bf16.mxu0 0
    %4421 = vmatpush1.bf16.msra.mxu0 %v4324
    %4422 = vmatprep.subr.bf16.mxu0 0
    %4423 = vmatpush1.bf16.msra.mxu0 %v4325
    %4424 = vmatprep.subr.bf16.mxu0 0
    %4425 = vmatpush1.bf16.msra.mxu0 %v4326
    %4426 = vmatprep.subr.bf16.mxu0 0
    %4427 = vmatpush1.bf16.msra.mxu0 %v4327
    %4428 = vmatprep.subr.bf16.mxu0 0
    %4429 = vmatpush1.bf16.msra.mxu0 %v4328
    %4430 = vmatprep.subr.bf16.mxu0 0
    %4431 = vmatpush1.bf16.msra.mxu0 %v4329
    %4432 = vmatprep.subr.bf16.mxu0 0
    %4433 = vmatpush1.bf16.msra.mxu0 %v4330
    %4434 = vmatprep.subr.bf16.mxu0 0
    %4435 = vmatpush1.bf16.msra.mxu0 %v4331
    %4436 = vmatprep.mubr.bf16.mxu0 %v4100
    %4437 = vmatmul.mubr.bf16.gmra.mrb[0].mxu0 %v4099
    %v4438 = vpop.f32.mrb[0].mxu0
    %v4439 = vadd.f32 %v4399, %v4438
    %v4440 = vpop.f32.mrb[0].mxu0
    %v4441 = vpop.f32.mrb[0].mxu0
    %v4442 = vpop.f32.mrb[0].mxu0
    %4443 = vdwg.mxu0
    %v4444 = vxor.u32 %v4439, 2147483648
    %v4445 = vmul.f32 %v4444, 1.442695
    %v4446 = vpow.pop %v4445
    %v4447 = vadd.f32 %v4446, 1.0
    %v4448 = vrcp.pop %v4447
    %v4449 = vmul.f32 1.0, %v4448
    %4450 = vst [vmem:[%s14] sm:$0x3] %v4449
    // Predicated region
    $region62: #{mapping_forward.2} parent=1 // pred_check
      _
    $region63: #{mapping_forward.2} parent=1 // pred_check_branch
      %4452 = sbr.rel (0) target = $region65
    $region64: #{mapping_forward.2} parent=1 // pred_region
      _
    $region65: #{mapping_forward.2} parent=1 // pred_fallthru
      _
    // Predicated region
    $region66: #{mapping_forward.2} parent=1 // pred_check
      _
    $region67: #{mapping_forward.2} parent=1 // pred_check_branch
      %4454 = sbr.rel (0) target = $region69
    $region68: #{mapping_forward.2} parent=1 // pred_region
      _
    $region69: #{mapping_forward.2} parent=1 // pred_fallthru
      _
    %4455 = vsyncpa [#allocation3], 1

</llo_original>
